<compile_context>
chip_gen: v7x
topology: tpu7x:2x2x1
jax: 0.10.0
libtpu: 0.0.40
codegen_flags: <defaults>
</compile_context>

<pallas_src>
import functools

import jax
import jax.numpy as jnp
from jax.experimental import pallas as pl
from jax.experimental.pallas import tpu as pltpu


def _layernorm(x, gamma, beta, eps=1e-5):
    mu = jnp.mean(x, axis=-1, keepdims=True)
    var = jnp.mean((x - mu) ** 2, axis=-1, keepdims=True)
    return (x - mu) * jax.lax.rsqrt(var + eps) * gamma + beta


# ---------------------------------------------------------------------------
# Fused Pallas kernel: one grid step = one encoder layer (all batch elements).
# ---------------------------------------------------------------------------
def fused_encoder_kernel(src_ref, pos_ref, wq_ref, wk_ref, wv_ref, wo_ref,
                         w1_ref, w2_ref, vec_ref, b1_ref, fn_ref, out_ref,
                         *, nhead, apply_final_norm, mm_dtype):
    l = pl.program_id(0)
    n_layers = pl.num_programs(0)

    # Layer 0: load the source activation into the VMEM-resident output block,
    # which acts as the running-activation accumulator across layers.
    @pl.when(l == 0)
    def _():
        out_ref[...] = src_ref[...]

    B, S, D = out_ref.shape
    BS = B * S
    dh = D // nhead

    x3 = out_ref[...]                               # (B, S, D) f32 carry
    x = x3.reshape(BS, D)                           # batch folded into M
    xq = (x3 + pos_ref[...]).reshape(BS, D)         # pos added to q/k only

    def mm(a, b):                                   # MXU matmul, f32 accumulation
        return jnp.dot(a.astype(mm_dtype), b.astype(mm_dtype),
                       preferred_element_type=jnp.float32)

    # Packed per-layer vectors: [bq*scale, bk, bv, bo, g1, be1, b2, g2, be2]
    vec = vec_ref[0]                                # (9, D) f32
    bq_full, bk_full, bv_full = vec[0:1], vec[1:2], vec[2:3]
    bo, g1, be1 = vec[3:4], vec[4:5], vec[5:6]
    b2, g2, be2 = vec[6:7], vec[7:8], vec[8:9]
    b1 = b1_ref[0]                                  # (1, dff) f32

    wq = wq_ref[0]                                  # (H, D, dh)  (scale folded in)
    wk = wk_ref[0]                                  # (H, D, dh)
    wv = wv_ref[0]                                  # (H, D, dh)
    wo = wo_ref[0]                                  # (H, dh, D)

    # ---- multi-head self-attention (head-major weights, per-head loop) ----
    attn = None
    for h in range(nhead):
        lo, hi = h * dh, (h + 1) * dh
        qh = (mm(xq, wq[h]) + bq_full[:, lo:hi]).reshape(B, S, dh)
        kh = (mm(xq, wk[h]) + bk_full[:, lo:hi]).reshape(B, S, dh)
        vh = (mm(x,  wv[h]) + bv_full[:, lo:hi]).reshape(B, S, dh)

        s = jnp.einsum("bqd,bkd->bqk", qh.astype(mm_dtype), kh.astype(mm_dtype),
                       preferred_element_type=jnp.float32)       # (B, S, S)
        s = s - jnp.max(s, axis=-1, keepdims=True)
        e = jnp.exp(s)
        a = e * pl.reciprocal(jnp.sum(e, axis=-1, keepdims=True), approx=True)
        ctx = jnp.einsum("bqk,bkd->bqd", a.astype(mm_dtype), vh.astype(mm_dtype),
                         preferred_element_type=jnp.float32)     # (B, S, dh)

        o_h = mm(ctx.reshape(BS, dh), wo[h])                     # (BS, D)
        attn = o_h if attn is None else attn + o_h
    attn = attn + bo

    # residual + LayerNorm 1
    x = _layernorm(x + attn, g1, be1)

    # ---- FFN -----------------------------------------------------------
    h1 = jnp.maximum(mm(x, w1_ref[0]) + b1, 0.0)
    y = mm(h1, w2_ref[0]) + b2

    # residual + LayerNorm 2
    x = _layernorm(x + y, g2, be2)

    out_ref[...] = x.reshape(B, S, D)

    # Optional final LayerNorm folded into the last layer step.
    if apply_final_norm:
        @pl.when(l == n_layers - 1)
        def _():
            fn = fn_ref[...]                        # (2, D): [gamma; beta]
            z = out_ref[...].reshape(BS, D)
            out_ref[...] = _layernorm(z, fn[0:1], fn[1:2]).reshape(B, S, D)


# ---------------------------------------------------------------------------
# Wrapper: stacks per-layer weights (head-major, mm_dtype) and launches ONE
# pallas_call with grid = (num_layers,).
# ---------------------------------------------------------------------------
def transformer_encoder(src, pos, layer_params, norm_params=None, *,
                        nhead, mm_dtype=jnp.bfloat16):
    """Mirrors TransformerEncoder.forward (layer loop + optional final norm)."""
    B, S, D = src.shape
    L = len(layer_params)
    dff = layer_params[0]["w1"].shape[1]
    dh = D // nhead
    scale = 1.0 / (dh ** 0.5)

    def head_major_in(w):    # (D, D) -> (H, D, dh): column blocks per head
        return jnp.transpose(w.reshape(D, nhead, dh), (1, 0, 2))

    def head_major_out(w):   # (D, D) -> (H, dh, D): row blocks per head
        return w.reshape(nhead, dh, D)

    # Stack per-layer weights into [L, ...] arrays (bf16 by default), indexed by
    # the layer grid axis so layer l+1 weights prefetch while layer l computes.
    w_q = jnp.stack([head_major_in(p["wq"] * scale) for p in layer_params]).astype(mm_dtype)
    w_k = jnp.stack([head_major_in(p["wk"]) for p in layer_params]).astype(mm_dtype)
    w_v = jnp.stack([head_major_in(p["wv"]) for p in layer_params]).astype(mm_dtype)
    w_o = jnp.stack([head_major_out(p["wo"]) for p in layer_params]).astype(mm_dtype)
    w_1 = jnp.stack([p["w1"] for p in layer_params]).astype(mm_dtype)   # (L, D, dff)
    w_2 = jnp.stack([p["w2"] for p in layer_params]).astype(mm_dtype)   # (L, dff, D)

    # Packed per-layer D-sized vectors (f32): one DMA per layer instead of nine.
    vecD = jnp.stack([jnp.concatenate(
        [p["bq"] * scale, p["bk"], p["bv"], p["bo"],
         p["g1"], p["be1"], p["b2"], p["g2"], p["be2"]], axis=0)
        for p in layer_params])                                          # (L, 9, D)
    b_1 = jnp.stack([p["b1"] for p in layer_params])                     # (L, 1, dff)

    apply_final_norm = norm_params is not None
    if apply_final_norm:
        fn = jnp.concatenate([norm_params["g"], norm_params["b"]], axis=0)
    else:
        fn = jnp.zeros((2, D), jnp.float32)

    kernel = functools.partial(fused_encoder_kernel, nhead=nhead,
                               apply_final_norm=apply_final_norm,
                               mm_dtype=mm_dtype)

    act_spec = pl.BlockSpec((B, S, D), lambda l: (0, 0, 0))   # VMEM-resident

    return pl.pallas_call(
        kernel,
        out_shape=jax.ShapeDtypeStruct((B, S, D), jnp.float32),
        grid=(L,),                                            # layer axis, sequential
        in_specs=[
            act_spec,                                                   # src
            act_spec,                                                   # pos
            pl.BlockSpec((1, nhead, D, dh), lambda l: (l, 0, 0, 0)),    # wq (scaled)
            pl.BlockSpec((1, nhead, D, dh), lambda l: (l, 0, 0, 0)),    # wk
            pl.BlockSpec((1, nhead, D, dh), lambda l: (l, 0, 0, 0)),    # wv
            pl.BlockSpec((1, nhead, dh, D), lambda l: (l, 0, 0, 0)),    # wo
            pl.BlockSpec((1, D, dff), lambda l: (l, 0, 0)),             # w1
            pl.BlockSpec((1, dff, D), lambda l: (l, 0, 0)),             # w2
            pl.BlockSpec((1, 9, D), lambda l: (l, 0, 0)),               # packed vecs
            pl.BlockSpec((1, 1, dff), lambda l: (l, 0, 0)),             # b1
            pl.BlockSpec((2, D), lambda l: (0, 0)),                     # final-norm g/b
        ],
        out_specs=pl.BlockSpec((B, S, D), lambda l: (0, 0, 0)),   # layer-resident carry
        compiler_params=pltpu.CompilerParams(
            dimension_semantics=("arbitrary",),
            vmem_limit_bytes=48 * 1024 * 1024),
    )(src, pos, w_q, w_k, w_v, w_o, w_1, w_2, vecD, b_1, fn)


# ---------------------------------------------------------------------------
# Deterministic parameter init + pure-JAX reference
# ---------------------------------------------------------------------------
def init_layer_params(key, d_model, dff):
    ks = jax.random.split(key, 16)
    s = 0.02
    n = jax.random.normal
    return {
        "wq": s * n(ks[0], (d_model, d_model), jnp.float32),
        "bq": 0.1 * n(ks[1], (1, d_model), jnp.float32),
        "wk": s * n(ks[2], (d_model, d_model), jnp.float32),
        "bk": 0.1 * n(ks[3], (1, d_model), jnp.float32),
        "wv": s * n(ks[4], (d_model, d_model), jnp.float32),
        "bv": 0.1 * n(ks[5], (1, d_model), jnp.float32),
        "wo": s * n(ks[6], (d_model, d_model), jnp.float32),
        "bo": 0.1 * n(ks[7], (1, d_model), jnp.float32),
        "g1": 1.0 + 0.1 * n(ks[8], (1, d_model), jnp.float32),
        "be1": 0.1 * n(ks[9], (1, d_model), jnp.float32),
        "w1": s * n(ks[10], (d_model, dff), jnp.float32),
        "b1": 0.1 * n(ks[11], (1, dff), jnp.float32),
        "w2": s * n(ks[12], (dff, d_model), jnp.float32),
        "b2": 0.1 * n(ks[13], (1, d_model), jnp.float32),
        "g2": 1.0 + 0.1 * n(ks[14], (1, d_model), jnp.float32),
        "be2": 0.1 * n(ks[15], (1, d_model), jnp.float32),
    }


def ref_layer(x, pos, p, nhead):
    B, S, D = x.shape
    dh = D // nhead
    qk = x + pos
    q = qk @ p["wq"] + p["bq"]
    k = qk @ p["wk"] + p["bk"]
    v = x @ p["wv"] + p["bv"]
    qh = q.reshape(B, S, nhead, dh).transpose(0, 2, 1, 3) / (dh ** 0.5)
    kh = k.reshape(B, S, nhead, dh).transpose(0, 2, 1, 3)
    vh = v.reshape(B, S, nhead, dh).transpose(0, 2, 1, 3)
    s = jnp.einsum("bhqd,bhkd->bhqk", qh, kh)
    a = jax.nn.softmax(s, axis=-1)
    ctx = jnp.einsum("bhqk,bhkd->bhqd", a, vh)
    ctx = ctx.transpose(0, 2, 1, 3).reshape(B, S, D)
    attn = ctx @ p["wo"] + p["bo"]
    x = _layernorm(x + attn, p["g1"], p["be1"])
    f = jnp.maximum(x @ p["w1"] + p["b1"], 0.0) @ p["w2"] + p["b2"]
    return _layernorm(x + f, p["g2"], p["be2"])


def ref_encoder(src, pos, layer_params, norm_params, nhead):
    out = src
    for p in layer_params:
        out = ref_layer(out, pos, p, nhead)
    if norm_params is not None:
        out = _layernorm(out, norm_params["g"], norm_params["b"])
    return out


# ---------------------------------------------------------------------------
if __name__ == "__main__":
    # Lane-dense toy config (D = 128 = one lane tile, dh = 32 per head).
    B, S, D = 2, 16, 128
    NHEAD, DFF, NUM_LAYERS = 4, 256, 2

    key = jax.random.PRNGKey(0)
    k_src, k_pos, k_par, k_norm = jax.random.split(key, 4)
    src = jax.random.normal(k_src, (B, S, D), jnp.float32)
    pos = jax.random.normal(k_pos, (B, S, D), jnp.float32)

    layer_keys = jax.random.split(k_par, NUM_LAYERS)
    layer_params = [init_layer_params(k, D, DFF) for k in layer_keys]
    kn1, kn2 = jax.random.split(k_norm)
    norm_params = {"g": 1.0 + 0.1 * jax.random.normal(kn1, (1, D), jnp.float32),
                   "b": 0.1 * jax.random.normal(kn2, (1, D), jnp.float32)}

    out = transformer_encoder(src, pos, layer_params, norm_params, nhead=NHEAD)
    out = jax.block_until_ready(out)

    ref = ref_encoder(src, pos, layer_params, norm_params, NHEAD)
    assert out.shape == (B, S, D)
    # bf16 matmul operands + EUP approximate reciprocal in the softmax; f32
    # accumulation / softmax / LayerNorm keep errors well inside 2e-2.
    max_err = float(jnp.max(jnp.abs(out - ref)))
    assert jnp.allclose(out, ref, atol=2e-2, rtol=2e-2), \
        f"mismatch vs JAX reference (max abs err {max_err})"

    print("KERNEL_OK")
</pallas_src>

<mosaic_0001>
module attributes {stable_mosaic.version = 11 : i64} {
  func.func @fused_encoder_kernel(%arg0: i32, %arg1: memref<2x16x128xf32, #tpu.memory_space<vmem>>, %arg2: memref<2x16x128xf32, #tpu.memory_space<vmem>>, %arg3: memref<1x4x128x32xbf16, #tpu.memory_space<vmem>>, %arg4: memref<1x4x128x32xbf16, #tpu.memory_space<vmem>>, %arg5: memref<1x4x128x32xbf16, #tpu.memory_space<vmem>>, %arg6: memref<1x4x32x128xbf16, #tpu.memory_space<vmem>>, %arg7: memref<1x128x256xbf16, #tpu.memory_space<vmem>>, %arg8: memref<1x256x128xbf16, #tpu.memory_space<vmem>>, %arg9: memref<1x9x128xf32, #tpu.memory_space<vmem>>, %arg10: memref<1x1x256xf32, #tpu.memory_space<vmem>>, %arg11: memref<2x128xf32, #tpu.memory_space<vmem>>, %arg12: memref<2x16x128xf32, #tpu.memory_space<vmem>>) attributes {dimension_semantics = [#tpu.dimension_semantics<arbitrary>], iteration_bounds = array<i64: 2>, scalar_prefetch = 0 : i64, scratch_operands = 0 : i64, tpu.core_type = #tpu.core_type<tc>, window_params = [{pipeline_mode = #tpu.pipeline_mode<synchronous>, transform_indices = @transform_0, window_bounds = array<i64: 2, 16, 128>}, {pipeline_mode = #tpu.pipeline_mode<synchronous>, transform_indices = @transform_1, window_bounds = array<i64: 2, 16, 128>}, {transform_indices = @transform_2, window_bounds = array<i64: 1, 4, 128, 32>}, {transform_indices = @transform_3, window_bounds = array<i64: 1, 4, 128, 32>}, {transform_indices = @transform_4, window_bounds = array<i64: 1, 4, 128, 32>}, {transform_indices = @transform_5, window_bounds = array<i64: 1, 4, 32, 128>}, {transform_indices = @transform_6, window_bounds = array<i64: 1, 128, 256>}, {transform_indices = @transform_7, window_bounds = array<i64: 1, 256, 128>}, {transform_indices = @transform_8, window_bounds = array<i64: 1, 9, 128>}, {transform_indices = @transform_9, window_bounds = array<i64: 1, 1, 256>}, {pipeline_mode = #tpu.pipeline_mode<synchronous>, transform_indices = @transform_10, window_bounds = array<i64: 2, 128>}, {pipeline_mode = #tpu.pipeline_mode<synchronous>, transform_indices = @transform_11, window_bounds = array<i64: 2, 16, 128>}]} {
    %c0_i32 = arith.constant 0 : i32
    %0 = arith.cmpi eq, %arg0, %c0_i32 : i32
    %1 = arith.extui %0 : i1 to i32
    %c0_i32_0 = arith.constant 0 : i32
    %2 = arith.cmpi ne, %1, %c0_i32_0 : i32
    scf.if %2 {
      %c0_82 = arith.constant 0 : index
      %c0_83 = arith.constant 0 : index
      %c0_84 = arith.constant 0 : index
      %279 = vector.load %arg1[%c0_82, %c0_83, %c0_84] : memref<2x16x128xf32, #tpu.memory_space<vmem>>, vector<2x16x128xf32>
      %c0_85 = arith.constant 0 : index
      %c0_86 = arith.constant 0 : index
      %c0_87 = arith.constant 0 : index
      %280 = vector.load %arg12[%c0_85, %c0_86, %c0_87] : memref<2x16x128xf32, #tpu.memory_space<vmem>>, vector<2x16x128xf32>
      tpu.vector_store %arg12[%c0_85, %c0_86, %c0_87], %279 {strides = array<i32>} : memref<2x16x128xf32, #tpu.memory_space<vmem>>, vector<2x16x128xf32>,
    } else {
    }
    %c0 = arith.constant 0 : index
    %c0_1 = arith.constant 0 : index
    %c0_2 = arith.constant 0 : index
    %3 = vector.load %arg12[%c0, %c0_1, %c0_2] : memref<2x16x128xf32, #tpu.memory_space<vmem>>, vector<2x16x128xf32>
    %4 = vector.shape_cast %3 : vector<2x16x128xf32> to vector<32x128xf32>
    %c0_3 = arith.constant 0 : index
    %c0_4 = arith.constant 0 : index
    %c0_5 = arith.constant 0 : index
    %5 = vector.load %arg2[%c0_3, %c0_4, %c0_5] : memref<2x16x128xf32, #tpu.memory_space<vmem>>, vector<2x16x128xf32>
    %6 = arith.addf %3, %5 : vector<2x16x128xf32>
    %7 = vector.shape_cast %6 : vector<2x16x128xf32> to vector<32x128xf32>
    %c0_6 = arith.constant 0 : index
    %c0_7 = arith.constant 0 : index
    %c0_8 = arith.constant 0 : index
    %8 = vector.load %arg9[%c0_6, %c0_7, %c0_8] : memref<1x9x128xf32, #tpu.memory_space<vmem>>, vector<1x9x128xf32>
    %9 = vector.shape_cast %8 : vector<1x9x128xf32> to vector<9x128xf32>
    %10 = vector.extract_strided_slice %9 {offsets = [0, 0], sizes = [1, 128], strides = [1, 1]} : vector<9x128xf32> to vector<1x128xf32>
    %11 = vector.extract_strided_slice %9 {offsets = [1, 0], sizes = [1, 128], strides = [1, 1]} : vector<9x128xf32> to vector<1x128xf32>
    %12 = vector.extract_strided_slice %9 {offsets = [2, 0], sizes = [1, 128], strides = [1, 1]} : vector<9x128xf32> to vector<1x128xf32>
    %13 = vector.extract_strided_slice %9 {offsets = [3, 0], sizes = [1, 128], strides = [1, 1]} : vector<9x128xf32> to vector<1x128xf32>
    %14 = vector.extract_strided_slice %9 {offsets = [4, 0], sizes = [1, 128], strides = [1, 1]} : vector<9x128xf32> to vector<1x128xf32>
    %15 = vector.extract_strided_slice %9 {offsets = [5, 0], sizes = [1, 128], strides = [1, 1]} : vector<9x128xf32> to vector<1x128xf32>
    %16 = vector.extract_strided_slice %9 {offsets = [6, 0], sizes = [1, 128], strides = [1, 1]} : vector<9x128xf32> to vector<1x128xf32>
    %17 = vector.extract_strided_slice %9 {offsets = [7, 0], sizes = [1, 128], strides = [1, 1]} : vector<9x128xf32> to vector<1x128xf32>
    %18 = vector.extract_strided_slice %9 {offsets = [8, 0], sizes = [1, 128], strides = [1, 1]} : vector<9x128xf32> to vector<1x128xf32>
    %c0_9 = arith.constant 0 : index
    %c0_10 = arith.constant 0 : index
    %c0_11 = arith.constant 0 : index
    %19 = vector.load %arg10[%c0_9, %c0_10, %c0_11] : memref<1x1x256xf32, #tpu.memory_space<vmem>>, vector<1x1x256xf32>
    %20 = vector.shape_cast %19 : vector<1x1x256xf32> to vector<1x256xf32>
    %c0_12 = arith.constant 0 : index
    %c0_13 = arith.constant 0 : index
    %c0_14 = arith.constant 0 : index
    %c0_15 = arith.constant 0 : index
    %21 = vector.load %arg3[%c0_12, %c0_13, %c0_14, %c0_15] : memref<1x4x128x32xbf16, #tpu.memory_space<vmem>>, vector<1x4x128x32xbf16>
    %22 = vector.shape_cast %21 : vector<1x4x128x32xbf16> to vector<4x128x32xbf16>
    %c0_16 = arith.constant 0 : index
    %c0_17 = arith.constant 0 : index
    %c0_18 = arith.constant 0 : index
    %c0_19 = arith.constant 0 : index
    %23 = vector.load %arg4[%c0_16, %c0_17, %c0_18, %c0_19] : memref<1x4x128x32xbf16, #tpu.memory_space<vmem>>, vector<1x4x128x32xbf16>
    %24 = vector.shape_cast %23 : vector<1x4x128x32xbf16> to vector<4x128x32xbf16>
    %c0_20 = arith.constant 0 : index
    %c0_21 = arith.constant 0 : index
    %c0_22 = arith.constant 0 : index
    %c0_23 = arith.constant 0 : index
    %25 = vector.load %arg5[%c0_20, %c0_21, %c0_22, %c0_23] : memref<1x4x128x32xbf16, #tpu.memory_space<vmem>>, vector<1x4x128x32xbf16>
    %26 = vector.shape_cast %25 : vector<1x4x128x32xbf16> to vector<4x128x32xbf16>
    %c0_24 = arith.constant 0 : index
    %c0_25 = arith.constant 0 : index
    %c0_26 = arith.constant 0 : index
    %c0_27 = arith.constant 0 : index
    %27 = vector.load %arg6[%c0_24, %c0_25, %c0_26, %c0_27] : memref<1x4x32x128xbf16, #tpu.memory_space<vmem>>, vector<1x4x32x128xbf16>
    %28 = vector.shape_cast %27 : vector<1x4x32x128xbf16> to vector<4x32x128xbf16>
    %29 = vector.extract_strided_slice %22 {offsets = [0, 0, 0], sizes = [1, 128, 32], strides = [1, 1, 1]} : vector<4x128x32xbf16> to vector<1x128x32xbf16>
    %30 = vector.shape_cast %29 : vector<1x128x32xbf16> to vector<128x32xbf16>
    %31 = arith.truncf %7 : vector<32x128xf32> to vector<32x128xbf16>
    %cst = arith.constant dense<0.000000e+00> : vector<32x32xf32>
    %32 = tpu.matmul %31, %30, %cst {dimension_numbers = #tpu.dot_dimension_numbers<[1], [0], [0], [1], [0, 0, 1, 1], [], []>} : vector<32x128xbf16>, vector<128x32xbf16>, vector<32x32xf32> -> vector<32x32xf32>
    %33 = vector.extract_strided_slice %10 {offsets = [0, 0], sizes = [1, 32], strides = [1, 1]} : vector<1x128xf32> to vector<1x32xf32>
    %34 = vector.broadcast %33 : vector<1x32xf32> to vector<32x32xf32>
    %35 = arith.addf %32, %34 : vector<32x32xf32>
    %36 = vector.shape_cast %35 : vector<32x32xf32> to vector<2x16x32xf32>
    %37 = vector.extract_strided_slice %24 {offsets = [0, 0, 0], sizes = [1, 128, 32], strides = [1, 1, 1]} : vector<4x128x32xbf16> to vector<1x128x32xbf16>
    %38 = vector.shape_cast %37 : vector<1x128x32xbf16> to vector<128x32xbf16>
    %39 = arith.truncf %7 : vector<32x128xf32> to vector<32x128xbf16>
    %cst_28 = arith.constant dense<0.000000e+00> : vector<32x32xf32>
    %40 = tpu.matmul %39, %38, %cst_28 {dimension_numbers = #tpu.dot_dimension_numbers<[1], [0], [0], [1], [0, 0, 1, 1], [], []>} : vector<32x128xbf16>, vector<128x32xbf16>, vector<32x32xf32> -> vector<32x32xf32>
    %41 = vector.extract_strided_slice %11 {offsets = [0, 0], sizes = [1, 32], strides = [1, 1]} : vector<1x128xf32> to vector<1x32xf32>
    %42 = vector.broadcast %41 : vector<1x32xf32> to vector<32x32xf32>
    %43 = arith.addf %40, %42 : vector<32x32xf32>
    %44 = vector.shape_cast %43 : vector<32x32xf32> to vector<2x16x32xf32>
    %45 = vector.extract_strided_slice %26 {offsets = [0, 0, 0], sizes = [1, 128, 32], strides = [1, 1, 1]} : vector<4x128x32xbf16> to vector<1x128x32xbf16>
    %46 = vector.shape_cast %45 : vector<1x128x32xbf16> to vector<128x32xbf16>
    %47 = arith.truncf %4 : vector<32x128xf32> to vector<32x128xbf16>
    %cst_29 = arith.constant dense<0.000000e+00> : vector<32x32xf32>
    %48 = tpu.matmul %47, %46, %cst_29 {dimension_numbers = #tpu.dot_dimension_numbers<[1], [0], [0], [1], [0, 0, 1, 1], [], []>} : vector<32x128xbf16>, vector<128x32xbf16>, vector<32x32xf32> -> vector<32x32xf32>
    %49 = vector.extract_strided_slice %12 {offsets = [0, 0], sizes = [1, 32], strides = [1, 1]} : vector<1x128xf32> to vector<1x32xf32>
    %50 = vector.broadcast %49 : vector<1x32xf32> to vector<32x32xf32>
    %51 = arith.addf %48, %50 : vector<32x32xf32>
    %52 = vector.shape_cast %51 : vector<32x32xf32> to vector<2x16x32xf32>
    %53 = arith.truncf %36 : vector<2x16x32xf32> to vector<2x16x32xbf16>
    %54 = arith.truncf %44 : vector<2x16x32xf32> to vector<2x16x32xbf16>
    "tpu.trace_start"() <{level = 10 : i32, message = "bqd,bkd->bqk"}> : () -> ()
    %cst_30 = arith.constant dense<0.000000e+00> : vector<2x16x16xf32>
    %55 = tpu.matmul %53, %54, %cst_30 {dimension_numbers = #tpu.dot_dimension_numbers<[2], [2], [1], [1], [0, 0, 0, 1, 1, 1], [0], [0]>} : vector<2x16x32xbf16>, vector<2x16x32xbf16>, vector<2x16x16xf32> -> vector<2x16x16xf32>
    "tpu.trace_stop"() : () -> ()
    %cst_31 = arith.constant dense<0xFF800000> : vector<2x16xf32>
    %56 = vector.multi_reduction <maximumf>, %55, %cst_31 [2] : vector<2x16x16xf32> to vector<2x16xf32>
    %57 = vector.shape_cast %56 : vector<2x16xf32> to vector<2x16x1xf32>
    %58 = vector.broadcast %57 : vector<2x16x1xf32> to vector<2x16x16xf32>
    %59 = arith.subf %55, %58 : vector<2x16x16xf32>
    %60 = math.exp %59 : vector<2x16x16xf32>
    %cst_32 = arith.constant dense<0.000000e+00> : vector<2x16xf32>
    %61 = vector.multi_reduction <add>, %60, %cst_32 [2] : vector<2x16x16xf32> to vector<2x16xf32>
    %62 = vector.shape_cast %61 : vector<2x16xf32> to vector<2x16x1xf32>
    %63 = tpu.reciprocal %62 {approx = true} : vector<2x16x1xf32> -> vector<2x16x1xf32>
    %64 = vector.broadcast %63 : vector<2x16x1xf32> to vector<2x16x16xf32>
    %65 = arith.mulf %60, %64 : vector<2x16x16xf32>
    %66 = arith.truncf %65 : vector<2x16x16xf32> to vector<2x16x16xbf16>
    %67 = arith.truncf %52 : vector<2x16x32xf32> to vector<2x16x32xbf16>
    "tpu.trace_start"() <{level = 10 : i32, message = "bqk,bkd->bqd"}> : () -> ()
    %cst_33 = arith.constant dense<0.000000e+00> : vector<2x16x32xf32>
    %68 = tpu.matmul %66, %67, %cst_33 {dimension_numbers = #tpu.dot_dimension_numbers<[2], [1], [1], [2], [0, 0, 0, 1, 1, 2], [0], [0]>} : vector<2x16x16xbf16>, vector<2x16x32xbf16>, vector<2x16x32xf32> -> vector<2x16x32xf32>
    "tpu.trace_stop"() : () -> ()
    %69 = vector.shape_cast %68 : vector<2x16x32xf32> to vector<32x32xf32>
    %70 = vector.extract_strided_slice %28 {offsets = [0, 0, 0], sizes = [1, 32, 128], strides = [1, 1, 1]} : vector<4x32x128xbf16> to vector<1x32x128xbf16>
    %71 = vector.shape_cast %70 : vector<1x32x128xbf16> to vector<32x128xbf16>
    %72 = arith.truncf %69 : vector<32x32xf32> to vector<32x32xbf16>
    %cst_34 = arith.constant dense<0.000000e+00> : vector<32x128xf32>
    %73 = tpu.matmul %72, %71, %cst_34 {dimension_numbers = #tpu.dot_dimension_numbers<[1], [0], [0], [1], [0, 0, 1, 1], [], []>} : vector<32x32xbf16>, vector<32x128xbf16>, vector<32x128xf32> -> vector<32x128xf32>
    %74 = vector.extract_strided_slice %22 {offsets = [1, 0, 0], sizes = [1, 128, 32], strides = [1, 1, 1]} : vector<4x128x32xbf16> to vector<1x128x32xbf16>
    %75 = vector.shape_cast %74 : vector<1x128x32xbf16> to vector<128x32xbf16>
    %76 = arith.truncf %7 : vector<32x128xf32> to vector<32x128xbf16>
    %cst_35 = arith.constant dense<0.000000e+00> : vector<32x32xf32>
    %77 = tpu.matmul %76, %75, %cst_35 {dimension_numbers = #tpu.dot_dimension_numbers<[1], [0], [0], [1], [0, 0, 1, 1], [], []>} : vector<32x128xbf16>, vector<128x32xbf16>, vector<32x32xf32> -> vector<32x32xf32>
    %78 = vector.extract_strided_slice %10 {offsets = [0, 32], sizes = [1, 32], strides = [1, 1]} : vector<1x128xf32> to vector<1x32xf32>
    %79 = vector.broadcast %78 : vector<1x32xf32> to vector<32x32xf32>
    %80 = arith.addf %77, %79 : vector<32x32xf32>
    %81 = vector.shape_cast %80 : vector<32x32xf32> to vector<2x16x32xf32>
    %82 = vector.extract_strided_slice %24 {offsets = [1, 0, 0], sizes = [1, 128, 32], strides = [1, 1, 1]} : vector<4x128x32xbf16> to vector<1x128x32xbf16>
    %83 = vector.shape_cast %82 : vector<1x128x32xbf16> to vector<128x32xbf16>
    %84 = arith.truncf %7 : vector<32x128xf32> to vector<32x128xbf16>
    %cst_36 = arith.constant dense<0.000000e+00> : vector<32x32xf32>
    %85 = tpu.matmul %84, %83, %cst_36 {dimension_numbers = #tpu.dot_dimension_numbers<[1], [0], [0], [1], [0, 0, 1, 1], [], []>} : vector<32x128xbf16>, vector<128x32xbf16>, vector<32x32xf32> -> vector<32x32xf32>
    %86 = vector.extract_strided_slice %11 {offsets = [0, 32], sizes = [1, 32], strides = [1, 1]} : vector<1x128xf32> to vector<1x32xf32>
    %87 = vector.broadcast %86 : vector<1x32xf32> to vector<32x32xf32>
    %88 = arith.addf %85, %87 : vector<32x32xf32>
    %89 = vector.shape_cast %88 : vector<32x32xf32> to vector<2x16x32xf32>
    %90 = vector.extract_strided_slice %26 {offsets = [1, 0, 0], sizes = [1, 128, 32], strides = [1, 1, 1]} : vector<4x128x32xbf16> to vector<1x128x32xbf16>
    %91 = vector.shape_cast %90 : vector<1x128x32xbf16> to vector<128x32xbf16>
    %92 = arith.truncf %4 : vector<32x128xf32> to vector<32x128xbf16>
    %cst_37 = arith.constant dense<0.000000e+00> : vector<32x32xf32>
    %93 = tpu.matmul %92, %91, %cst_37 {dimension_numbers = #tpu.dot_dimension_numbers<[1], [0], [0], [1], [0, 0, 1, 1], [], []>} : vector<32x128xbf16>, vector<128x32xbf16>, vector<32x32xf32> -> vector<32x32xf32>
    %94 = vector.extract_strided_slice %12 {offsets = [0, 32], sizes = [1, 32], strides = [1, 1]} : vector<1x128xf32> to vector<1x32xf32>
    %95 = vector.broadcast %94 : vector<1x32xf32> to vector<32x32xf32>
    %96 = arith.addf %93, %95 : vector<32x32xf32>
    %97 = vector.shape_cast %96 : vector<32x32xf32> to vector<2x16x32xf32>
    %98 = arith.truncf %81 : vector<2x16x32xf32> to vector<2x16x32xbf16>
    %99 = arith.truncf %89 : vector<2x16x32xf32> to vector<2x16x32xbf16>
    "tpu.trace_start"() <{level = 10 : i32, message = "bqd,bkd->bqk"}> : () -> ()
    %cst_38 = arith.constant dense<0.000000e+00> : vector<2x16x16xf32>
    %100 = tpu.matmul %98, %99, %cst_38 {dimension_numbers = #tpu.dot_dimension_numbers<[2], [2], [1], [1], [0, 0, 0, 1, 1, 1], [0], [0]>} : vector<2x16x32xbf16>, vector<2x16x32xbf16>, vector<2x16x16xf32> -> vector<2x16x16xf32>
    "tpu.trace_stop"() : () -> ()
    %cst_39 = arith.constant dense<0xFF800000> : vector<2x16xf32>
    %101 = vector.multi_reduction <maximumf>, %100, %cst_39 [2] : vector<2x16x16xf32> to vector<2x16xf32>
    %102 = vector.shape_cast %101 : vector<2x16xf32> to vector<2x16x1xf32>
    %103 = vector.broadcast %102 : vector<2x16x1xf32> to vector<2x16x16xf32>
    %104 = arith.subf %100, %103 : vector<2x16x16xf32>
    %105 = math.exp %104 : vector<2x16x16xf32>
    %cst_40 = arith.constant dense<0.000000e+00> : vector<2x16xf32>
    %106 = vector.multi_reduction <add>, %105, %cst_40 [2] : vector<2x16x16xf32> to vector<2x16xf32>
    %107 = vector.shape_cast %106 : vector<2x16xf32> to vector<2x16x1xf32>
    %108 = tpu.reciprocal %107 {approx = true} : vector<2x16x1xf32> -> vector<2x16x1xf32>
    %109 = vector.broadcast %108 : vector<2x16x1xf32> to vector<2x16x16xf32>
    %110 = arith.mulf %105, %109 : vector<2x16x16xf32>
    %111 = arith.truncf %110 : vector<2x16x16xf32> to vector<2x16x16xbf16>
    %112 = arith.truncf %97 : vector<2x16x32xf32> to vector<2x16x32xbf16>
    "tpu.trace_start"() <{level = 10 : i32, message = "bqk,bkd->bqd"}> : () -> ()
    %cst_41 = arith.constant dense<0.000000e+00> : vector<2x16x32xf32>
    %113 = tpu.matmul %111, %112, %cst_41 {dimension_numbers = #tpu.dot_dimension_numbers<[2], [1], [1], [2], [0, 0, 0, 1, 1, 2], [0], [0]>} : vector<2x16x16xbf16>, vector<2x16x32xbf16>, vector<2x16x32xf32> -> vector<2x16x32xf32>
    "tpu.trace_stop"() : () -> ()
    %114 = vector.shape_cast %113 : vector<2x16x32xf32> to vector<32x32xf32>
    %115 = vector.extract_strided_slice %28 {offsets = [1, 0, 0], sizes = [1, 32, 128], strides = [1, 1, 1]} : vector<4x32x128xbf16> to vector<1x32x128xbf16>
    %116 = vector.shape_cast %115 : vector<1x32x128xbf16> to vector<32x128xbf16>
    %117 = arith.truncf %114 : vector<32x32xf32> to vector<32x32xbf16>
    %cst_42 = arith.constant dense<0.000000e+00> : vector<32x128xf32>
    %118 = tpu.matmul %117, %116, %cst_42 {dimension_numbers = #tpu.dot_dimension_numbers<[1], [0], [0], [1], [0, 0, 1, 1], [], []>} : vector<32x32xbf16>, vector<32x128xbf16>, vector<32x128xf32> -> vector<32x128xf32>
    %119 = arith.addf %73, %118 : vector<32x128xf32>
    %120 = vector.extract_strided_slice %22 {offsets = [2, 0, 0], sizes = [1, 128, 32], strides = [1, 1, 1]} : vector<4x128x32xbf16> to vector<1x128x32xbf16>
    %121 = vector.shape_cast %120 : vector<1x128x32xbf16> to vector<128x32xbf16>
    %122 = arith.truncf %7 : vector<32x128xf32> to vector<32x128xbf16>
    %cst_43 = arith.constant dense<0.000000e+00> : vector<32x32xf32>
    %123 = tpu.matmul %122, %121, %cst_43 {dimension_numbers = #tpu.dot_dimension_numbers<[1], [0], [0], [1], [0, 0, 1, 1], [], []>} : vector<32x128xbf16>, vector<128x32xbf16>, vector<32x32xf32> -> vector<32x32xf32>
    %124 = vector.extract_strided_slice %10 {offsets = [0, 64], sizes = [1, 32], strides = [1, 1]} : vector<1x128xf32> to vector<1x32xf32>
    %125 = vector.broadcast %124 : vector<1x32xf32> to vector<32x32xf32>
    %126 = arith.addf %123, %125 : vector<32x32xf32>
    %127 = vector.shape_cast %126 : vector<32x32xf32> to vector<2x16x32xf32>
    %128 = vector.extract_strided_slice %24 {offsets = [2, 0, 0], sizes = [1, 128, 32], strides = [1, 1, 1]} : vector<4x128x32xbf16> to vector<1x128x32xbf16>
    %129 = vector.shape_cast %128 : vector<1x128x32xbf16> to vector<128x32xbf16>
    %130 = arith.truncf %7 : vector<32x128xf32> to vector<32x128xbf16>
    %cst_44 = arith.constant dense<0.000000e+00> : vector<32x32xf32>
    %131 = tpu.matmul %130, %129, %cst_44 {dimension_numbers = #tpu.dot_dimension_numbers<[1], [0], [0], [1], [0, 0, 1, 1], [], []>} : vector<32x128xbf16>, vector<128x32xbf16>, vector<32x32xf32> -> vector<32x32xf32>
    %132 = vector.extract_strided_slice %11 {offsets = [0, 64], sizes = [1, 32], strides = [1, 1]} : vector<1x128xf32> to vector<1x32xf32>
    %133 = vector.broadcast %132 : vector<1x32xf32> to vector<32x32xf32>
    %134 = arith.addf %131, %133 : vector<32x32xf32>
    %135 = vector.shape_cast %134 : vector<32x32xf32> to vector<2x16x32xf32>
    %136 = vector.extract_strided_slice %26 {offsets = [2, 0, 0], sizes = [1, 128, 32], strides = [1, 1, 1]} : vector<4x128x32xbf16> to vector<1x128x32xbf16>
    %137 = vector.shape_cast %136 : vector<1x128x32xbf16> to vector<128x32xbf16>
    %138 = arith.truncf %4 : vector<32x128xf32> to vector<32x128xbf16>
    %cst_45 = arith.constant dense<0.000000e+00> : vector<32x32xf32>
    %139 = tpu.matmul %138, %137, %cst_45 {dimension_numbers = #tpu.dot_dimension_numbers<[1], [0], [0], [1], [0, 0, 1, 1], [], []>} : vector<32x128xbf16>, vector<128x32xbf16>, vector<32x32xf32> -> vector<32x32xf32>
    %140 = vector.extract_strided_slice %12 {offsets = [0, 64], sizes = [1, 32], strides = [1, 1]} : vector<1x128xf32> to vector<1x32xf32>
    %141 = vector.broadcast %140 : vector<1x32xf32> to vector<32x32xf32>
    %142 = arith.addf %139, %141 : vector<32x32xf32>
    %143 = vector.shape_cast %142 : vector<32x32xf32> to vector<2x16x32xf32>
    %144 = arith.truncf %127 : vector<2x16x32xf32> to vector<2x16x32xbf16>
    %145 = arith.truncf %135 : vector<2x16x32xf32> to vector<2x16x32xbf16>
    "tpu.trace_start"() <{level = 10 : i32, message = "bqd,bkd->bqk"}> : () -> ()
    %cst_46 = arith.constant dense<0.000000e+00> : vector<2x16x16xf32>
    %146 = tpu.matmul %144, %145, %cst_46 {dimension_numbers = #tpu.dot_dimension_numbers<[2], [2], [1], [1], [0, 0, 0, 1, 1, 1], [0], [0]>} : vector<2x16x32xbf16>, vector<2x16x32xbf16>, vector<2x16x16xf32> -> vector<2x16x16xf32>
    "tpu.trace_stop"() : () -> ()
    %cst_47 = arith.constant dense<0xFF800000> : vector<2x16xf32>
    %147 = vector.multi_reduction <maximumf>, %146, %cst_47 [2] : vector<2x16x16xf32> to vector<2x16xf32>
    %148 = vector.shape_cast %147 : vector<2x16xf32> to vector<2x16x1xf32>
    %149 = vector.broadcast %148 : vector<2x16x1xf32> to vector<2x16x16xf32>
    %150 = arith.subf %146, %149 : vector<2x16x16xf32>
    %151 = math.exp %150 : vector<2x16x16xf32>
    %cst_48 = arith.constant dense<0.000000e+00> : vector<2x16xf32>
    %152 = vector.multi_reduction <add>, %151, %cst_48 [2] : vector<2x16x16xf32> to vector<2x16xf32>
    %153 = vector.shape_cast %152 : vector<2x16xf32> to vector<2x16x1xf32>
    %154 = tpu.reciprocal %153 {approx = true} : vector<2x16x1xf32> -> vector<2x16x1xf32>
    %155 = vector.broadcast %154 : vector<2x16x1xf32> to vector<2x16x16xf32>
    %156 = arith.mulf %151, %155 : vector<2x16x16xf32>
    %157 = arith.truncf %156 : vector<2x16x16xf32> to vector<2x16x16xbf16>
    %158 = arith.truncf %143 : vector<2x16x32xf32> to vector<2x16x32xbf16>
    "tpu.trace_start"() <{level = 10 : i32, message = "bqk,bkd->bqd"}> : () -> ()
    %cst_49 = arith.constant dense<0.000000e+00> : vector<2x16x32xf32>
    %159 = tpu.matmul %157, %158, %cst_49 {dimension_numbers = #tpu.dot_dimension_numbers<[2], [1], [1], [2], [0, 0, 0, 1, 1, 2], [0], [0]>} : vector<2x16x16xbf16>, vector<2x16x32xbf16>, vector<2x16x32xf32> -> vector<2x16x32xf32>
    "tpu.trace_stop"() : () -> ()
    %160 = vector.shape_cast %159 : vector<2x16x32xf32> to vector<32x32xf32>
    %161 = vector.extract_strided_slice %28 {offsets = [2, 0, 0], sizes = [1, 32, 128], strides = [1, 1, 1]} : vector<4x32x128xbf16> to vector<1x32x128xbf16>
    %162 = vector.shape_cast %161 : vector<1x32x128xbf16> to vector<32x128xbf16>
    %163 = arith.truncf %160 : vector<32x32xf32> to vector<32x32xbf16>
    %cst_50 = arith.constant dense<0.000000e+00> : vector<32x128xf32>
    %164 = tpu.matmul %163, %162, %cst_50 {dimension_numbers = #tpu.dot_dimension_numbers<[1], [0], [0], [1], [0, 0, 1, 1], [], []>} : vector<32x32xbf16>, vector<32x128xbf16>, vector<32x128xf32> -> vector<32x128xf32>
    %165 = arith.addf %119, %164 : vector<32x128xf32>
    %166 = vector.extract_strided_slice %22 {offsets = [3, 0, 0], sizes = [1, 128, 32], strides = [1, 1, 1]} : vector<4x128x32xbf16> to vector<1x128x32xbf16>
    %167 = vector.shape_cast %166 : vector<1x128x32xbf16> to vector<128x32xbf16>
    %168 = arith.truncf %7 : vector<32x128xf32> to vector<32x128xbf16>
    %cst_51 = arith.constant dense<0.000000e+00> : vector<32x32xf32>
    %169 = tpu.matmul %168, %167, %cst_51 {dimension_numbers = #tpu.dot_dimension_numbers<[1], [0], [0], [1], [0, 0, 1, 1], [], []>} : vector<32x128xbf16>, vector<128x32xbf16>, vector<32x32xf32> -> vector<32x32xf32>
    %170 = vector.extract_strided_slice %10 {offsets = [0, 96], sizes = [1, 32], strides = [1, 1]} : vector<1x128xf32> to vector<1x32xf32>
    %171 = vector.broadcast %170 : vector<1x32xf32> to vector<32x32xf32>
    %172 = arith.addf %169, %171 : vector<32x32xf32>
    %173 = vector.shape_cast %172 : vector<32x32xf32> to vector<2x16x32xf32>
    %174 = vector.extract_strided_slice %24 {offsets = [3, 0, 0], sizes = [1, 128, 32], strides = [1, 1, 1]} : vector<4x128x32xbf16> to vector<1x128x32xbf16>
    %175 = vector.shape_cast %174 : vector<1x128x32xbf16> to vector<128x32xbf16>
    %176 = arith.truncf %7 : vector<32x128xf32> to vector<32x128xbf16>
    %cst_52 = arith.constant dense<0.000000e+00> : vector<32x32xf32>
    %177 = tpu.matmul %176, %175, %cst_52 {dimension_numbers = #tpu.dot_dimension_numbers<[1], [0], [0], [1], [0, 0, 1, 1], [], []>} : vector<32x128xbf16>, vector<128x32xbf16>, vector<32x32xf32> -> vector<32x32xf32>
    %178 = vector.extract_strided_slice %11 {offsets = [0, 96], sizes = [1, 32], strides = [1, 1]} : vector<1x128xf32> to vector<1x32xf32>
    %179 = vector.broadcast %178 : vector<1x32xf32> to vector<32x32xf32>
    %180 = arith.addf %177, %179 : vector<32x32xf32>
    %181 = vector.shape_cast %180 : vector<32x32xf32> to vector<2x16x32xf32>
    %182 = vector.extract_strided_slice %26 {offsets = [3, 0, 0], sizes = [1, 128, 32], strides = [1, 1, 1]} : vector<4x128x32xbf16> to vector<1x128x32xbf16>
    %183 = vector.shape_cast %182 : vector<1x128x32xbf16> to vector<128x32xbf16>
    %184 = arith.truncf %4 : vector<32x128xf32> to vector<32x128xbf16>
    %cst_53 = arith.constant dense<0.000000e+00> : vector<32x32xf32>
    %185 = tpu.matmul %184, %183, %cst_53 {dimension_numbers = #tpu.dot_dimension_numbers<[1], [0], [0], [1], [0, 0, 1, 1], [], []>} : vector<32x128xbf16>, vector<128x32xbf16>, vector<32x32xf32> -> vector<32x32xf32>
    %186 = vector.extract_strided_slice %12 {offsets = [0, 96], sizes = [1, 32], strides = [1, 1]} : vector<1x128xf32> to vector<1x32xf32>
    %187 = vector.broadcast %186 : vector<1x32xf32> to vector<32x32xf32>
    %188 = arith.addf %185, %187 : vector<32x32xf32>
    %189 = vector.shape_cast %188 : vector<32x32xf32> to vector<2x16x32xf32>
    %190 = arith.truncf %173 : vector<2x16x32xf32> to vector<2x16x32xbf16>
    %191 = arith.truncf %181 : vector<2x16x32xf32> to vector<2x16x32xbf16>
    "tpu.trace_start"() <{level = 10 : i32, message = "bqd,bkd->bqk"}> : () -> ()
    %cst_54 = arith.constant dense<0.000000e+00> : vector<2x16x16xf32>
    %192 = tpu.matmul %190, %191, %cst_54 {dimension_numbers = #tpu.dot_dimension_numbers<[2], [2], [1], [1], [0, 0, 0, 1, 1, 1], [0], [0]>} : vector<2x16x32xbf16>, vector<2x16x32xbf16>, vector<2x16x16xf32> -> vector<2x16x16xf32>
    "tpu.trace_stop"() : () -> ()
    %cst_55 = arith.constant dense<0xFF800000> : vector<2x16xf32>
    %193 = vector.multi_reduction <maximumf>, %192, %cst_55 [2] : vector<2x16x16xf32> to vector<2x16xf32>
    %194 = vector.shape_cast %193 : vector<2x16xf32> to vector<2x16x1xf32>
    %195 = vector.broadcast %194 : vector<2x16x1xf32> to vector<2x16x16xf32>
    %196 = arith.subf %192, %195 : vector<2x16x16xf32>
    %197 = math.exp %196 : vector<2x16x16xf32>
    %cst_56 = arith.constant dense<0.000000e+00> : vector<2x16xf32>
    %198 = vector.multi_reduction <add>, %197, %cst_56 [2] : vector<2x16x16xf32> to vector<2x16xf32>
    %199 = vector.shape_cast %198 : vector<2x16xf32> to vector<2x16x1xf32>
    %200 = tpu.reciprocal %199 {approx = true} : vector<2x16x1xf32> -> vector<2x16x1xf32>
    %201 = vector.broadcast %200 : vector<2x16x1xf32> to vector<2x16x16xf32>
    %202 = arith.mulf %197, %201 : vector<2x16x16xf32>
    %203 = arith.truncf %202 : vector<2x16x16xf32> to vector<2x16x16xbf16>
    %204 = arith.truncf %189 : vector<2x16x32xf32> to vector<2x16x32xbf16>
    "tpu.trace_start"() <{level = 10 : i32, message = "bqk,bkd->bqd"}> : () -> ()
    %cst_57 = arith.constant dense<0.000000e+00> : vector<2x16x32xf32>
    %205 = tpu.matmul %203, %204, %cst_57 {dimension_numbers = #tpu.dot_dimension_numbers<[2], [1], [1], [2], [0, 0, 0, 1, 1, 2], [0], [0]>} : vector<2x16x16xbf16>, vector<2x16x32xbf16>, vector<2x16x32xf32> -> vector<2x16x32xf32>
    "tpu.trace_stop"() : () -> ()
    %206 = vector.shape_cast %205 : vector<2x16x32xf32> to vector<32x32xf32>
    %207 = vector.extract_strided_slice %28 {offsets = [3, 0, 0], sizes = [1, 32, 128], strides = [1, 1, 1]} : vector<4x32x128xbf16> to vector<1x32x128xbf16>
    %208 = vector.shape_cast %207 : vector<1x32x128xbf16> to vector<32x128xbf16>
    %209 = arith.truncf %206 : vector<32x32xf32> to vector<32x32xbf16>
    %cst_58 = arith.constant dense<0.000000e+00> : vector<32x128xf32>
    %210 = tpu.matmul %209, %208, %cst_58 {dimension_numbers = #tpu.dot_dimension_numbers<[1], [0], [0], [1], [0, 0, 1, 1], [], []>} : vector<32x32xbf16>, vector<32x128xbf16>, vector<32x128xf32> -> vector<32x128xf32>
    %211 = arith.addf %165, %210 : vector<32x128xf32>
    %212 = vector.broadcast %13 : vector<1x128xf32> to vector<32x128xf32>
    %213 = arith.addf %211, %212 : vector<32x128xf32>
    %214 = arith.addf %4, %213 : vector<32x128xf32>
    %cst_59 = arith.constant dense<0.000000e+00> : vector<32xf32>
    %215 = vector.multi_reduction <add>, %214, %cst_59 [1] : vector<32x128xf32> to vector<32xf32>
    %216 = vector.shape_cast %215 : vector<32xf32> to vector<32x1xf32>
    %cst_60 = arith.constant 1.280000e+02 : f32
    %217 = vector.broadcast %cst_60 : f32 to vector<32x1xf32>
    %218 = arith.divf %216, %217 : vector<32x1xf32>
    %219 = vector.broadcast %218 : vector<32x1xf32> to vector<32x128xf32>
    %220 = arith.subf %214, %219 : vector<32x128xf32>
    %221 = arith.mulf %220, %220 : vector<32x128xf32>
    %cst_61 = arith.constant dense<0.000000e+00> : vector<32xf32>
    %222 = vector.multi_reduction <add>, %221, %cst_61 [1] : vector<32x128xf32> to vector<32xf32>
    %223 = vector.shape_cast %222 : vector<32xf32> to vector<32x1xf32>
    %cst_62 = arith.constant 1.280000e+02 : f32
    %224 = vector.broadcast %cst_62 : f32 to vector<32x1xf32>
    %225 = arith.divf %223, %224 : vector<32x1xf32>
    %226 = vector.broadcast %218 : vector<32x1xf32> to vector<32x128xf32>
    %227 = arith.subf %214, %226 : vector<32x128xf32>
    %cst_63 = arith.constant 9.99999974E-6 : f32
    %228 = vector.broadcast %cst_63 : f32 to vector<32x1xf32>
    %229 = arith.addf %225, %228 : vector<32x1xf32>
    %230 = math.rsqrt %229 : vector<32x1xf32>
    %231 = vector.broadcast %230 : vector<32x1xf32> to vector<32x128xf32>
    %232 = arith.mulf %227, %231 : vector<32x128xf32>
    %233 = vector.broadcast %14 : vector<1x128xf32> to vector<32x128xf32>
    %234 = arith.mulf %232, %233 : vector<32x128xf32>
    %235 = vector.broadcast %15 : vector<1x128xf32> to vector<32x128xf32>
    %236 = arith.addf %234, %235 : vector<32x128xf32>
    %c0_64 = arith.constant 0 : index
    %c0_65 = arith.constant 0 : index
    %c0_66 = arith.constant 0 : index
    %237 = vector.load %arg7[%c0_64, %c0_65, %c0_66] : memref<1x128x256xbf16, #tpu.memory_space<vmem>>, vector<1x128x256xbf16>
    %238 = vector.shape_cast %237 : vector<1x128x256xbf16> to vector<128x256xbf16>
    %239 = arith.truncf %236 : vector<32x128xf32> to vector<32x128xbf16>
    %cst_67 = arith.constant dense<0.000000e+00> : vector<32x256xf32>
    %240 = tpu.matmul %239, %238, %cst_67 {dimension_numbers = #tpu.dot_dimension_numbers<[1], [0], [0], [1], [0, 0, 1, 1], [], []>} : vector<32x128xbf16>, vector<128x256xbf16>, vector<32x256xf32> -> vector<32x256xf32>
    %241 = vector.broadcast %20 : vector<1x256xf32> to vector<32x256xf32>
    %242 = arith.addf %240, %241 : vector<32x256xf32>
    %cst_68 = arith.constant 0.000000e+00 : f32
    %243 = vector.broadcast %cst_68 : f32 to vector<32x256xf32>
    %244 = arith.maximumf %242, %243 : vector<32x256xf32>
    %c0_69 = arith.constant 0 : index
    %c0_70 = arith.constant 0 : index
    %c0_71 = arith.constant 0 : index
    %245 = vector.load %arg8[%c0_69, %c0_70, %c0_71] : memref<1x256x128xbf16, #tpu.memory_space<vmem>>, vector<1x256x128xbf16>
    %246 = vector.shape_cast %245 : vector<1x256x128xbf16> to vector<256x128xbf16>
    %247 = arith.truncf %244 : vector<32x256xf32> to vector<32x256xbf16>
    %cst_72 = arith.constant dense<0.000000e+00> : vector<32x128xf32>
    %248 = tpu.matmul %247, %246, %cst_72 {dimension_numbers = #tpu.dot_dimension_numbers<[1], [0], [0], [1], [0, 0, 1, 1], [], []>} : vector<32x256xbf16>, vector<256x128xbf16>, vector<32x128xf32> -> vector<32x128xf32>
    %249 = vector.broadcast %16 : vector<1x128xf32> to vector<32x128xf32>
    %250 = arith.addf %248, %249 : vector<32x128xf32>
    %251 = arith.addf %236, %250 : vector<32x128xf32>
    %cst_73 = arith.constant dense<0.000000e+00> : vector<32xf32>
    %252 = vector.multi_reduction <add>, %251, %cst_73 [1] : vector<32x128xf32> to vector<32xf32>
    %253 = vector.shape_cast %252 : vector<32xf32> to vector<32x1xf32>
    %cst_74 = arith.constant 1.280000e+02 : f32
    %254 = vector.broadcast %cst_74 : f32 to vector<32x1xf32>
    %255 = arith.divf %253, %254 : vector<32x1xf32>
    %256 = vector.broadcast %255 : vector<32x1xf32> to vector<32x128xf32>
    %257 = arith.subf %251, %256 : vector<32x128xf32>
    %258 = arith.mulf %257, %257 : vector<32x128xf32>
    %cst_75 = arith.constant dense<0.000000e+00> : vector<32xf32>
    %259 = vector.multi_reduction <add>, %258, %cst_75 [1] : vector<32x128xf32> to vector<32xf32>
    %260 = vector.shape_cast %259 : vector<32xf32> to vector<32x1xf32>
    %cst_76 = arith.constant 1.280000e+02 : f32
    %261 = vector.broadcast %cst_76 : f32 to vector<32x1xf32>
    %262 = arith.divf %260, %261 : vector<32x1xf32>
    %263 = vector.broadcast %255 : vector<32x1xf32> to vector<32x128xf32>
    %264 = arith.subf %251, %263 : vector<32x128xf32>
    %cst_77 = arith.constant 9.99999974E-6 : f32
    %265 = vector.broadcast %cst_77 : f32 to vector<32x1xf32>
    %266 = arith.addf %262, %265 : vector<32x1xf32>
    %267 = math.rsqrt %266 : vector<32x1xf32>
    %268 = vector.broadcast %267 : vector<32x1xf32> to vector<32x128xf32>
    %269 = arith.mulf %264, %268 : vector<32x128xf32>
    %270 = vector.broadcast %17 : vector<1x128xf32> to vector<32x128xf32>
    %271 = arith.mulf %269, %270 : vector<32x128xf32>
    %272 = vector.broadcast %18 : vector<1x128xf32> to vector<32x128xf32>
    %273 = arith.addf %271, %272 : vector<32x128xf32>
    %274 = vector.shape_cast %273 : vector<32x128xf32> to vector<2x16x128xf32>
    %c0_78 = arith.constant 0 : index
    %c0_79 = arith.constant 0 : index
    %c0_80 = arith.constant 0 : index
    %275 = vector.load %arg12[%c0_78, %c0_79, %c0_80] : memref<2x16x128xf32, #tpu.memory_space<vmem>>, vector<2x16x128xf32>
    tpu.vector_store %arg12[%c0_78, %c0_79, %c0_80], %274 {strides = array<i32>} : memref<2x16x128xf32, #tpu.memory_space<vmem>>, vector<2x16x128xf32>,
    %c1_i32 = arith.constant 1 : i32
    %276 = arith.cmpi eq, %arg0, %c1_i32 : i32
    %277 = arith.extui %276 : i1 to i32
    %c0_i32_81 = arith.constant 0 : i32
    %278 = arith.cmpi ne, %277, %c0_i32_81 : i32
    scf.if %278 {
      %c0_82 = arith.constant 0 : index
      %c0_83 = arith.constant 0 : index
      %279 = vector.load %arg11[%c0_82, %c0_83] : memref<2x128xf32, #tpu.memory_space<vmem>>, vector<2x128xf32>
      %c0_84 = arith.constant 0 : index
      %c0_85 = arith.constant 0 : index
      %c0_86 = arith.constant 0 : index
      %280 = vector.load %arg12[%c0_84, %c0_85, %c0_86] : memref<2x16x128xf32, #tpu.memory_space<vmem>>, vector<2x16x128xf32>
      %281 = vector.shape_cast %280 : vector<2x16x128xf32> to vector<32x128xf32>
      %282 = vector.extract_strided_slice %279 {offsets = [0, 0], sizes = [1, 128], strides = [1, 1]} : vector<2x128xf32> to vector<1x128xf32>
      %283 = vector.extract_strided_slice %279 {offsets = [1, 0], sizes = [1, 128], strides = [1, 1]} : vector<2x128xf32> to vector<1x128xf32>
      %cst_87 = arith.constant dense<0.000000e+00> : vector<32xf32>
      %284 = vector.multi_reduction <add>, %281, %cst_87 [1] : vector<32x128xf32> to vector<32xf32>
      %285 = vector.shape_cast %284 : vector<32xf32> to vector<32x1xf32>
      %cst_88 = arith.constant 1.280000e+02 : f32
      %286 = vector.broadcast %cst_88 : f32 to vector<32x1xf32>
      %287 = arith.divf %285, %286 : vector<32x1xf32>
      %288 = vector.broadcast %287 : vector<32x1xf32> to vector<32x128xf32>
      %289 = arith.subf %281, %288 : vector<32x128xf32>
      %290 = arith.mulf %289, %289 : vector<32x128xf32>
      %cst_89 = arith.constant dense<0.000000e+00> : vector<32xf32>
      %291 = vector.multi_reduction <add>, %290, %cst_89 [1] : vector<32x128xf32> to vector<32xf32>
      %292 = vector.shape_cast %291 : vector<32xf32> to vector<32x1xf32>
      %cst_90 = arith.constant 1.280000e+02 : f32
      %293 = vector.broadcast %cst_90 : f32 to vector<32x1xf32>
      %294 = arith.divf %292, %293 : vector<32x1xf32>
      %295 = vector.broadcast %287 : vector<32x1xf32> to vector<32x128xf32>
      %296 = arith.subf %281, %295 : vector<32x128xf32>
      %cst_91 = arith.constant 9.99999974E-6 : f32
      %297 = vector.broadcast %cst_91 : f32 to vector<32x1xf32>
      %298 = arith.addf %294, %297 : vector<32x1xf32>
      %299 = math.rsqrt %298 : vector<32x1xf32>
      %300 = vector.broadcast %299 : vector<32x1xf32> to vector<32x128xf32>
      %301 = arith.mulf %296, %300 : vector<32x128xf32>
      %302 = vector.broadcast %282 : vector<1x128xf32> to vector<32x128xf32>
      %303 = arith.mulf %301, %302 : vector<32x128xf32>
      %304 = vector.broadcast %283 : vector<1x128xf32> to vector<32x128xf32>
      %305 = arith.addf %303, %304 : vector<32x128xf32>
      %306 = vector.shape_cast %305 : vector<32x128xf32> to vector<2x16x128xf32>
      %c0_92 = arith.constant 0 : index
      %c0_93 = arith.constant 0 : index
      %c0_94 = arith.constant 0 : index
      %307 = vector.load %arg12[%c0_92, %c0_93, %c0_94] : memref<2x16x128xf32, #tpu.memory_space<vmem>>, vector<2x16x128xf32>
      tpu.vector_store %arg12[%c0_92, %c0_93, %c0_94], %306 {strides = array<i32>} : memref<2x16x128xf32, #tpu.memory_space<vmem>>, vector<2x16x128xf32>,
    } else {
    }
    return
  }
  func.func @transform_0(%arg0: i32) -> (i32, i32, i32) {
    %c0_i32 = arith.constant 0 : i32
    %c0_i32_0 = arith.constant 0 : i32
    %c0_i32_1 = arith.constant 0 : i32
    %c0_i32_2 = arith.constant 0 : i32
    return %c0_i32, %c0_i32_0, %c0_i32_1 : i32, i32, i32
  }
  func.func @transform_1(%arg0: i32) -> (i32, i32, i32) {
    %c0_i32 = arith.constant 0 : i32
    %c0_i32_0 = arith.constant 0 : i32
    %c0_i32_1 = arith.constant 0 : i32
    %c0_i32_2 = arith.constant 0 : i32
    return %c0_i32, %c0_i32_0, %c0_i32_1 : i32, i32, i32
  }
  func.func @transform_2(%arg0: i32) -> (i32, i32, i32, i32) {
    %c0_i32 = arith.constant 0 : i32
    %c0_i32_0 = arith.constant 0 : i32
    %c0_i32_1 = arith.constant 0 : i32
    %c0_i32_2 = arith.constant 0 : i32
    return %arg0, %c0_i32, %c0_i32_0, %c0_i32_1 : i32, i32, i32, i32
  }
  func.func @transform_3(%arg0: i32) -> (i32, i32, i32, i32) {
    %c0_i32 = arith.constant 0 : i32
    %c0_i32_0 = arith.constant 0 : i32
    %c0_i32_1 = arith.constant 0 : i32
    %c0_i32_2 = arith.constant 0 : i32
    return %arg0, %c0_i32, %c0_i32_0, %c0_i32_1 : i32, i32, i32, i32
  }
  func.func @transform_4(%arg0: i32) -> (i32, i32, i32, i32) {
    %c0_i32 = arith.constant 0 : i32
    %c0_i32_0 = arith.constant 0 : i32
    %c0_i32_1 = arith.constant 0 : i32
    %c0_i32_2 = arith.constant 0 : i32
    return %arg0, %c0_i32, %c0_i32_0, %c0_i32_1 : i32, i32, i32, i32
  }
  func.func @transform_5(%arg0: i32) -> (i32, i32, i32, i32) {
    %c0_i32 = arith.constant 0 : i32
    %c0_i32_0 = arith.constant 0 : i32
    %c0_i32_1 = arith.constant 0 : i32
    %c0_i32_2 = arith.constant 0 : i32
    return %arg0, %c0_i32, %c0_i32_0, %c0_i32_1 : i32, i32, i32, i32
  }
  func.func @transform_6(%arg0: i32) -> (i32, i32, i32) {
    %c0_i32 = arith.constant 0 : i32
    %c0_i32_0 = arith.constant 0 : i32
    %c0_i32_1 = arith.constant 0 : i32
    return %arg0, %c0_i32, %c0_i32_0 : i32, i32, i32
  }
  func.func @transform_7(%arg0: i32) -> (i32, i32, i32) {
    %c0_i32 = arith.constant 0 : i32
    %c0_i32_0 = arith.constant 0 : i32
    %c0_i32_1 = arith.constant 0 : i32
    return %arg0, %c0_i32, %c0_i32_0 : i32, i32, i32
  }
  func.func @transform_8(%arg0: i32) -> (i32, i32, i32) {
    %c0_i32 = arith.constant 0 : i32
    %c0_i32_0 = arith.constant 0 : i32
    %c0_i32_1 = arith.constant 0 : i32
    return %arg0, %c0_i32, %c0_i32_0 : i32, i32, i32
  }
  func.func @transform_9(%arg0: i32) -> (i32, i32, i32) {
    %c0_i32 = arith.constant 0 : i32
    %c0_i32_0 = arith.constant 0 : i32
    %c0_i32_1 = arith.constant 0 : i32
    return %arg0, %c0_i32, %c0_i32_0 : i32, i32, i32
  }
  func.func @transform_10(%arg0: i32) -> (i32, i32) {
    %c0_i32 = arith.constant 0 : i32
    %c0_i32_0 = arith.constant 0 : i32
    %c0_i32_1 = arith.constant 0 : i32
    return %c0_i32, %c0_i32_0 : i32, i32
  }
  func.func @transform_11(%arg0: i32) -> (i32, i32, i32) {
    %c0_i32 = arith.constant 0 : i32
    %c0_i32_0 = arith.constant 0 : i32
    %c0_i32_1 = arith.constant 0 : i32
    %c0_i32_2 = arith.constant 0 : i32
    return %c0_i32, %c0_i32_0, %c0_i32_1 : i32, i32, i32
  }
}

</mosaic_0001>

<llo_original>
// kernel: tpu_custom_call.1
$region0: #{tpu_custom_call.1}
  #allocation0 [shape = 'u32[]', space=smem, size = 0x4, offset = 0x4, fixed_abs, tag = 'smem constant byte address 0x4 - core index']
  #allocation1 [shape = 'u32[144,128]{1,0:T(1,128)}', space=vmem, size = 0x12000, scoped, tag = 'internal scratch']
  %s0 = inlined_call_operand.vmem [shape: f32[2,16,128], index: 0, kind: input, shape index: {}]
  %s1 = inlined_call_operand.vmem [shape: f32[2,16,128], index: 1, kind: input, shape index: {}]
  %s2 = inlined_call_operand.vmem [shape: bf16[2,4,128,32], index: 2, kind: input, shape index: {}]
  %s3 = inlined_call_operand.vmem [shape: bf16[2,4,128,32], index: 3, kind: input, shape index: {}]
  %s4 = inlined_call_operand.vmem [shape: bf16[2,4,128,32], index: 4, kind: input, shape index: {}]
  %s5 = inlined_call_operand.vmem [shape: bf16[2,4,32,128], index: 5, kind: input, shape index: {}]
  %s6 = inlined_call_operand.vmem [shape: bf16[2,128,256], index: 6, kind: input, shape index: {}]
  %s7 = inlined_call_operand.vmem [shape: bf16[2,256,128], index: 7, kind: input, shape index: {}]
  %s8 = inlined_call_operand.vmem [shape: f32[2,9,128], index: 8, kind: input, shape index: {}]
  %s9 = inlined_call_operand.vmem [shape: f32[2,1,256], index: 9, kind: input, shape index: {}]
  %s10 = inlined_call_operand.vmem [shape: f32[2,128], index: 10, kind: input, shape index: {}]
  %s11 = inlined_call_operand.hbm [shape: f32[2,16,128], index: 11, kind: output, shape index: {}]
  %s12 = sld [smem:[#allocation0]]
  $region85: #{tpu_custom_call.1} parent=0
    _
  %s14 = ssub.s32 1, %s12
  %s15 = scalar_select 0, %s14, %s12
  $region1: #{tpu_custom_call.1} parent=0
    #allocation2 [shape = 'u8[16384]{0}', space=vmem, size = 0x4000, scoped, tag = 'output window, operand 0, single buffered']
    #allocation3 [shape = 's32[2]{0}', space=sflag, size = 0x8, scoped, tag = 'scoped memory for tpu_custom_call.1']
    %16 = vsyncpa [#allocation3], 0
    loop: start=0, step=1, limit=4
    $region2: #{tpu_custom_call.1} parent=1 // loop_pre_header
      _
    $region3: #{tpu_custom_call.1} parent=1 // loop_header
      %s18 = sphi 0, %s22
      %p19 = scmp.ge.s32.totalorder %s18, 4
      %s26 = sphi 0, %s26
      %s28 = sphi 0, %s26
      %s29 = sphi 0, %s28
      %s43 = sphi 0, %s29
      %s47 = sphi 0, %s47
      %s49 = sphi 0, %s47
      %s50 = sphi 0, %s49
      %s64 = sphi 0, %s50
      %s70 = sphi 0, %s72
      %s73 = sphi 0, %s70
      %s74 = sphi 0, %s73
      %s90 = sphi 0, %s74
      %s96 = sphi 0, %s98
      %s99 = sphi 0, %s96
      %s100 = sphi 0, %s99
      %s116 = sphi 0, %s100
      %s122 = sphi 0, %s124
      %s125 = sphi 0, %s122
      %s126 = sphi 0, %s125
      %s142 = sphi 0, %s126
      %s148 = sphi 0, %s150
      %s151 = sphi 0, %s148
      %s152 = sphi 0, %s151
      %s168 = sphi 0, %s152
      %s174 = sphi 0, %s176
      %s177 = sphi 0, %s174
      %s178 = sphi 0, %s177
      %s194 = sphi 0, %s178
      %s200 = sphi 0, %s202
      %s203 = sphi 0, %s200
      %s204 = sphi 0, %s203
      %s220 = sphi 0, %s204
      %s226 = sphi 0, %s228
      %s229 = sphi 0, %s226
      %s230 = sphi 0, %s229
      %s246 = sphi 0, %s230
      %s252 = sphi 0, %s254
      %s255 = sphi 0, %s252
      %s256 = sphi 0, %s255
      %s272 = sphi 0, %s256
      %s276 = sphi 0, %s276
      %s278 = sphi 0, %s276
      %s279 = sphi 0, %s278
      %s293 = sphi 0, %s279
      %s297 = sphi 0, %s297
      %s299 = sphi 0, %s297
      %s300 = sphi 0, %s299
      %s314 = sphi 0, %s300
    $region4: #{tpu_custom_call.1} parent=1 // loop_header_branch
      %21 = sbr.rel (%p19) target = $region8
    $region5: #{tpu_custom_call.1} parent=1 // loop_body
      %s23 = ssub.s32 %s18, 1
      %s24 = ssub.s32 %s18, 2
      %s25 = sadd.s32 %s18, 1
      %s27 = sadd.s32 %s26, 1
      %p30 = scmp.eq.s32.totalorder %s18, 1
      %p31 = scmp.ne.s32.totalorder %s26, %s28
      %p32 = scmp.eq.s32.totalorder %s18, 0
      %p33 = por %p31, %p32
      %p34 = scmp.ne.s32.totalorder %s26, %s28
      %p35 = scmp.eq.s32.totalorder %s23, 1
      %p36 = por %p34, %p35
      %p37 = scmp.ne.s32.totalorder %s28, %s29
      %p38 = scmp.eq.s32.totalorder %s23, 0
      %p39 = por %p37, %p38
      %p40 = scmp.ne.s32.totalorder %s28, %s29
      %p41 = scmp.eq.s32.totalorder %s24, 1
      %p42 = por %p40, %p41
      %p44 = scmp.ne.s32.totalorder %s29, %s43
      %p45 = scmp.eq.s32.totalorder %s24, 0
      %p46 = por %p44, %p45
      %s48 = sadd.s32 %s47, 1
      %p51 = scmp.eq.s32.totalorder %s18, 1
      %p52 = scmp.ne.s32.totalorder %s47, %s49
      %p53 = scmp.eq.s32.totalorder %s18, 0
      %p54 = por %p52, %p53
      %p55 = scmp.ne.s32.totalorder %s47, %s49
      %p56 = scmp.eq.s32.totalorder %s23, 1
      %p57 = por %p55, %p56
      %p58 = scmp.ne.s32.totalorder %s49, %s50
      %p59 = scmp.eq.s32.totalorder %s23, 0
      %p60 = por %p58, %p59
      %p61 = scmp.ne.s32.totalorder %s49, %s50
      %p62 = scmp.eq.s32.totalorder %s24, 1
      %p63 = por %p61, %p62
      %p65 = scmp.ne.s32.totalorder %s50, %s64
      %p66 = scmp.eq.s32.totalorder %s24, 0
      %p67 = por %p65, %p66
      %s68 = ssub.s32 %s18, %s25
      %p69 = scmp.eq.s32.totalorder %s68, 0
      %s71 = sadd.s32 %s70, 1
      %s72 = scalar_select %p69, %s70, %s71
      %p75 = pneg %p69
      %p76 = scmp.eq.s32.totalorder %s18, 1
      %p77 = por %p75, %p76
      %p78 = scmp.ne.s32.totalorder %s70, %s73
      %p79 = scmp.eq.s32.totalorder %s18, 0
      %p80 = por %p78, %p79
      %p81 = scmp.ne.s32.totalorder %s70, %s73
      %p82 = scmp.eq.s32.totalorder %s23, 1
      %p83 = por %p81, %p82
      %p84 = scmp.ne.s32.totalorder %s73, %s74
      %p85 = scmp.eq.s32.totalorder %s23, 0
      %p86 = por %p84, %p85
      %p87 = scmp.ne.s32.totalorder %s73, %s74
      %p88 = scmp.eq.s32.totalorder %s24, 1
      %p89 = por %p87, %p88
      %p91 = scmp.ne.s32.totalorder %s74, %s90
      %p92 = scmp.eq.s32.totalorder %s24, 0
      %p93 = por %p91, %p92
      %s94 = ssub.s32 %s18, %s25
      %p95 = scmp.eq.s32.totalorder %s94, 0
      %s97 = sadd.s32 %s96, 1
      %s98 = scalar_select %p95, %s96, %s97
      %p101 = pneg %p95
      %p102 = scmp.eq.s32.totalorder %s18, 1
      %p103 = por %p101, %p102
      %p104 = scmp.ne.s32.totalorder %s96, %s99
      %p105 = scmp.eq.s32.totalorder %s18, 0
      %p106 = por %p104, %p105
      %p107 = scmp.ne.s32.totalorder %s96, %s99
      %p108 = scmp.eq.s32.totalorder %s23, 1
      %p109 = por %p107, %p108
      %p110 = scmp.ne.s32.totalorder %s99, %s100
      %p111 = scmp.eq.s32.totalorder %s23, 0
      %p112 = por %p110, %p111
      %p113 = scmp.ne.s32.totalorder %s99, %s100
      %p114 = scmp.eq.s32.totalorder %s24, 1
      %p115 = por %p113, %p114
      %p117 = scmp.ne.s32.totalorder %s100, %s116
      %p118 = scmp.eq.s32.totalorder %s24, 0
      %p119 = por %p117, %p118
      %s120 = ssub.s32 %s18, %s25
      %p121 = scmp.eq.s32.totalorder %s120, 0
      %s123 = sadd.s32 %s122, 1
      %s124 = scalar_select %p121, %s122, %s123
      %p127 = pneg %p121
      %p128 = scmp.eq.s32.totalorder %s18, 1
      %p129 = por %p127, %p128
      %p130 = scmp.ne.s32.totalorder %s122, %s125
      %p131 = scmp.eq.s32.totalorder %s18, 0
      %p132 = por %p130, %p131
      %p133 = scmp.ne.s32.totalorder %s122, %s125
      %p134 = scmp.eq.s32.totalorder %s23, 1
      %p135 = por %p133, %p134
      %p136 = scmp.ne.s32.totalorder %s125, %s126
      %p137 = scmp.eq.s32.totalorder %s23, 0
      %p138 = por %p136, %p137
      %p139 = scmp.ne.s32.totalorder %s125, %s126
      %p140 = scmp.eq.s32.totalorder %s24, 1
      %p141 = por %p139, %p140
      %p143 = scmp.ne.s32.totalorder %s126, %s142
      %p144 = scmp.eq.s32.totalorder %s24, 0
      %p145 = por %p143, %p144
      %s146 = ssub.s32 %s18, %s25
      %p147 = scmp.eq.s32.totalorder %s146, 0
      %s149 = sadd.s32 %s148, 1
      %s150 = scalar_select %p147, %s148, %s149
      %p153 = pneg %p147
      %p154 = scmp.eq.s32.totalorder %s18, 1
      %p155 = por %p153, %p154
      %p156 = scmp.ne.s32.totalorder %s148, %s151
      %p157 = scmp.eq.s32.totalorder %s18, 0
      %p158 = por %p156, %p157
      %p159 = scmp.ne.s32.totalorder %s148, %s151
      %p160 = scmp.eq.s32.totalorder %s23, 1
      %p161 = por %p159, %p160
      %p162 = scmp.ne.s32.totalorder %s151, %s152
      %p163 = scmp.eq.s32.totalorder %s23, 0
      %p164 = por %p162, %p163
      %p165 = scmp.ne.s32.totalorder %s151, %s152
      %p166 = scmp.eq.s32.totalorder %s24, 1
      %p167 = por %p165, %p166
      %p169 = scmp.ne.s32.totalorder %s152, %s168
      %p170 = scmp.eq.s32.totalorder %s24, 0
      %p171 = por %p169, %p170
      %s172 = ssub.s32 %s18, %s25
      %p173 = scmp.eq.s32.totalorder %s172, 0
      %s175 = sadd.s32 %s174, 1
      %s176 = scalar_select %p173, %s174, %s175
      %p179 = pneg %p173
      %p180 = scmp.eq.s32.totalorder %s18, 1
      %p181 = por %p179, %p180
      %p182 = scmp.ne.s32.totalorder %s174, %s177
      %p183 = scmp.eq.s32.totalorder %s18, 0
      %p184 = por %p182, %p183
      %p185 = scmp.ne.s32.totalorder %s174, %s177
      %p186 = scmp.eq.s32.totalorder %s23, 1
      %p187 = por %p185, %p186
      %p188 = scmp.ne.s32.totalorder %s177, %s178
      %p189 = scmp.eq.s32.totalorder %s23, 0
      %p190 = por %p188, %p189
      %p191 = scmp.ne.s32.totalorder %s177, %s178
      %p192 = scmp.eq.s32.totalorder %s24, 1
      %p193 = por %p191, %p192
      %p195 = scmp.ne.s32.totalorder %s178, %s194
      %p196 = scmp.eq.s32.totalorder %s24, 0
      %p197 = por %p195, %p196
      %s198 = ssub.s32 %s18, %s25
      %p199 = scmp.eq.s32.totalorder %s198, 0
      %s201 = sadd.s32 %s200, 1
      %s202 = scalar_select %p199, %s200, %s201
      %p205 = pneg %p199
      %p206 = scmp.eq.s32.totalorder %s18, 1
      %p207 = por %p205, %p206
      %p208 = scmp.ne.s32.totalorder %s200, %s203
      %p209 = scmp.eq.s32.totalorder %s18, 0
      %p210 = por %p208, %p209
      %p211 = scmp.ne.s32.totalorder %s200, %s203
      %p212 = scmp.eq.s32.totalorder %s23, 1
      %p213 = por %p211, %p212
      %p214 = scmp.ne.s32.totalorder %s203, %s204
      %p215 = scmp.eq.s32.totalorder %s23, 0
      %p216 = por %p214, %p215
      %p217 = scmp.ne.s32.totalorder %s203, %s204
      %p218 = scmp.eq.s32.totalorder %s24, 1
      %p219 = por %p217, %p218
      %p221 = scmp.ne.s32.totalorder %s204, %s220
      %p222 = scmp.eq.s32.totalorder %s24, 0
      %p223 = por %p221, %p222
      %s224 = ssub.s32 %s18, %s25
      %p225 = scmp.eq.s32.totalorder %s224, 0
      %s227 = sadd.s32 %s226, 1
      %s228 = scalar_select %p225, %s226, %s227
      %p231 = pneg %p225
      %p232 = scmp.eq.s32.totalorder %s18, 1
      %p233 = por %p231, %p232
      %p234 = scmp.ne.s32.totalorder %s226, %s229
      %p235 = scmp.eq.s32.totalorder %s18, 0
      %p236 = por %p234, %p235
      %p237 = scmp.ne.s32.totalorder %s226, %s229
      %p238 = scmp.eq.s32.totalorder %s23, 1
      %p239 = por %p237, %p238
      %p240 = scmp.ne.s32.totalorder %s229, %s230
      %p241 = scmp.eq.s32.totalorder %s23, 0
      %p242 = por %p240, %p241
      %p243 = scmp.ne.s32.totalorder %s229, %s230
      %p244 = scmp.eq.s32.totalorder %s24, 1
      %p245 = por %p243, %p244
      %p247 = scmp.ne.s32.totalorder %s230, %s246
      %p248 = scmp.eq.s32.totalorder %s24, 0
      %p249 = por %p247, %p248
      %s250 = ssub.s32 %s18, %s25
      %p251 = scmp.eq.s32.totalorder %s250, 0
      %s253 = sadd.s32 %s252, 1
      %s254 = scalar_select %p251, %s252, %s253
      %p257 = pneg %p251
      %p258 = scmp.eq.s32.totalorder %s18, 1
      %p259 = por %p257, %p258
      %p260 = scmp.ne.s32.totalorder %s252, %s255
      %p261 = scmp.eq.s32.totalorder %s18, 0
      %p262 = por %p260, %p261
      %p263 = scmp.ne.s32.totalorder %s252, %s255
      %p264 = scmp.eq.s32.totalorder %s23, 1
      %p265 = por %p263, %p264
      %p266 = scmp.ne.s32.totalorder %s255, %s256
      %p267 = scmp.eq.s32.totalorder %s23, 0
      %p268 = por %p266, %p267
      %p269 = scmp.ne.s32.totalorder %s255, %s256
      %p270 = scmp.eq.s32.totalorder %s24, 1
      %p271 = por %p269, %p270
      %p273 = scmp.ne.s32.totalorder %s256, %s272
      %p274 = scmp.eq.s32.totalorder %s24, 0
      %p275 = por %p273, %p274
      %s277 = sadd.s32 %s276, 1
      %p280 = scmp.eq.s32.totalorder %s18, 1
      %p281 = scmp.ne.s32.totalorder %s276, %s278
      %p282 = scmp.eq.s32.totalorder %s18, 0
      %p283 = por %p281, %p282
      %p284 = scmp.ne.s32.totalorder %s276, %s278
      %p285 = scmp.eq.s32.totalorder %s23, 1
      %p286 = por %p284, %p285
      %p287 = scmp.ne.s32.totalorder %s278, %s279
      %p288 = scmp.eq.s32.totalorder %s23, 0
      %p289 = por %p287, %p288
      %p290 = scmp.ne.s32.totalorder %s278, %s279
      %p291 = scmp.eq.s32.totalorder %s24, 1
      %p292 = por %p290, %p291
      %p294 = scmp.ne.s32.totalorder %s279, %s293
      %p295 = scmp.eq.s32.totalorder %s24, 0
      %p296 = por %p294, %p295
      %s298 = sadd.s32 %s297, 1
      %p301 = scmp.eq.s32.totalorder %s18, 1
      %p302 = scmp.ne.s32.totalorder %s297, %s299
      %p303 = scmp.eq.s32.totalorder %s18, 0
      %p304 = por %p302, %p303
      %p305 = scmp.ne.s32.totalorder %s297, %s299
      %p306 = scmp.eq.s32.totalorder %s23, 1
      %p307 = por %p305, %p306
      %p308 = scmp.ne.s32.totalorder %s299, %s300
      %p309 = scmp.eq.s32.totalorder %s23, 0
      %p310 = por %p308, %p309
      %p311 = scmp.ne.s32.totalorder %s299, %s300
      %p312 = scmp.eq.s32.totalorder %s24, 1
      %p313 = por %p311, %p312
      %p315 = scmp.ne.s32.totalorder %s300, %s314
      %p316 = scmp.eq.s32.totalorder %s24, 0
      %p317 = por %p315, %p316
      %p318 = scmp.le.s32.totalorder 1, %s18
      %p319 = scmp.lt.s32.totalorder %s18, 3
      %p320 = pnand %p318, %p319
      %p321 = pneg %p320
      // Predicated region
      $region9: #{tpu_custom_call.1} parent=5 // pred_check
        _
      $region10: #{tpu_custom_call.1} parent=5 // pred_check_branch
        %323 = sbr.rel (%p320) target = $region12
      $region11: #{tpu_custom_call.1} parent=5 // pred_region
        %s324 = ssub.s32 %s18, 1
        // Predicated region
        $region13: #{tpu_custom_call.1} parent=11 // pred_check
          %p325 = pneg %p39
        $region14: #{tpu_custom_call.1} parent=11 // pred_check_branch
          %327 = sbr.rel (%p325) target = $region16
        $region15: #{tpu_custom_call.1} parent=11 // pred_region
          _
        $region16: #{tpu_custom_call.1} parent=11 // pred_fallthru
          _
        // Predicated region
        $region17: #{tpu_custom_call.1} parent=11 // pred_check
          %p328 = pneg %p60
        $region18: #{tpu_custom_call.1} parent=11 // pred_check_branch
          %330 = sbr.rel (%p328) target = $region20
        $region19: #{tpu_custom_call.1} parent=11 // pred_region
          _
        $region20: #{tpu_custom_call.1} parent=11 // pred_fallthru
          _
        // Predicated region
        $region21: #{tpu_custom_call.1} parent=11 // pred_check
          %p331 = pneg %p289
        $region22: #{tpu_custom_call.1} parent=11 // pred_check_branch
          %333 = sbr.rel (%p331) target = $region24
        $region23: #{tpu_custom_call.1} parent=11 // pred_region
          _
        $region24: #{tpu_custom_call.1} parent=11 // pred_fallthru
          _
      $region12: #{tpu_custom_call.1} parent=5 // pred_fallthru
        _
      %p334 = scmp.lt.s32.totalorder %s18, 2
      // Predicated region
      $region25: #{tpu_custom_call.1} parent=5 // pred_check
        %p335 = pneg %p334
      $region26: #{tpu_custom_call.1} parent=5 // pred_check_branch
        %337 = sbr.rel (%p335) target = $region28
      $region27: #{tpu_custom_call.1} parent=5 // pred_region
        // Predicated region
        $region29: #{tpu_custom_call.1} parent=27 // pred_check
          %p338 = pneg %p80
        $region30: #{tpu_custom_call.1} parent=27 // pred_check_branch
          %340 = sbr.rel (%p338) target = $region32
        $region31: #{tpu_custom_call.1} parent=27 // pred_region
          %p341 = scmp.lt.s32.totalorder %s18, 1
          %s342 = scalar_select %p341, %s18, 1
          %s343 = smul.addr %s342, 64
          %s344 = smul.addr %s343, 4
          %s345 = scalar_lea.vmem %s2, %s344
        $region32: #{tpu_custom_call.1} parent=27 // pred_fallthru
          _
        // Predicated region
        $region33: #{tpu_custom_call.1} parent=27 // pred_check
          %p346 = pneg %p106
        $region34: #{tpu_custom_call.1} parent=27 // pred_check_branch
          %348 = sbr.rel (%p346) target = $region36
        $region35: #{tpu_custom_call.1} parent=27 // pred_region
          %p349 = scmp.lt.s32.totalorder %s18, 1
          %s350 = scalar_select %p349, %s18, 1
          %s351 = smul.addr %s350, 64
          %s352 = smul.addr %s351, 4
          %s353 = scalar_lea.vmem %s3, %s352
        $region36: #{tpu_custom_call.1} parent=27 // pred_fallthru
          _
        // Predicated region
        $region37: #{tpu_custom_call.1} parent=27 // pred_check
          %p354 = pneg %p132
        $region38: #{tpu_custom_call.1} parent=27 // pred_check_branch
          %356 = sbr.rel (%p354) target = $region40
        $region39: #{tpu_custom_call.1} parent=27 // pred_region
          %p357 = scmp.lt.s32.totalorder %s18, 1
          %s358 = scalar_select %p357, %s18, 1
          %s359 = smul.addr %s358, 64
          %s360 = smul.addr %s359, 4
          %s361 = scalar_lea.vmem %s4, %s360
        $region40: #{tpu_custom_call.1} parent=27 // pred_fallthru
          _
        // Predicated region
        $region41: #{tpu_custom_call.1} parent=27 // pred_check
          %p362 = pneg %p158
        $region42: #{tpu_custom_call.1} parent=27 // pred_check_branch
          %364 = sbr.rel (%p362) target = $region44
        $region43: #{tpu_custom_call.1} parent=27 // pred_region
          %p365 = scmp.lt.s32.totalorder %s18, 1
          %s366 = scalar_select %p365, %s18, 1
          %s367 = smul.addr %s366, 16
          %s368 = smul.addr %s367, 4
          %s369 = scalar_lea.vmem %s5, %s368
        $region44: #{tpu_custom_call.1} parent=27 // pred_fallthru
          _
        // Predicated region
        $region45: #{tpu_custom_call.1} parent=27 // pred_check
          %p370 = pneg %p184
        $region46: #{tpu_custom_call.1} parent=27 // pred_check_branch
          %372 = sbr.rel (%p370) target = $region48
        $region47: #{tpu_custom_call.1} parent=27 // pred_region
          %p373 = scmp.lt.s32.totalorder %s18, 1
          %s374 = scalar_select %p373, %s18, 1
          %s375 = smul.addr %s374, 32
          %s376 = smul.addr %s375, 4
          %s377 = scalar_lea.vmem %s6, %s376
        $region48: #{tpu_custom_call.1} parent=27 // pred_fallthru
          _
        // Predicated region
        $region49: #{tpu_custom_call.1} parent=27 // pred_check
          %p378 = pneg %p210
        $region50: #{tpu_custom_call.1} parent=27 // pred_check_branch
          %380 = sbr.rel (%p378) target = $region52
        $region51: #{tpu_custom_call.1} parent=27 // pred_region
          %p381 = scmp.lt.s32.totalorder %s18, 1
          %s382 = scalar_select %p381, %s18, 1
          %s383 = smul.addr %s382, 32
          %s384 = smul.addr %s383, 4
          %s385 = scalar_lea.vmem %s7, %s384
        $region52: #{tpu_custom_call.1} parent=27 // pred_fallthru
          _
        // Predicated region
        $region53: #{tpu_custom_call.1} parent=27 // pred_check
          %p386 = pneg %p236
        $region54: #{tpu_custom_call.1} parent=27 // pred_check_branch
          %388 = sbr.rel (%p386) target = $region56
        $region55: #{tpu_custom_call.1} parent=27 // pred_region
          %p389 = scmp.lt.s32.totalorder %s18, 1
          %s390 = scalar_select %p389, %s18, 1
          %s391 = smul.addr %s390, 2
          %s392 = smul.addr %s391, 8
          %s393 = scalar_lea.vmem %s8, %s392
        $region56: #{tpu_custom_call.1} parent=27 // pred_fallthru
          _
        // Predicated region
        $region57: #{tpu_custom_call.1} parent=27 // pred_check
          %p394 = pneg %p262
        $region58: #{tpu_custom_call.1} parent=27 // pred_check_branch
          %396 = sbr.rel (%p394) target = $region60
        $region59: #{tpu_custom_call.1} parent=27 // pred_region
          %p397 = scmp.lt.s32.totalorder %s18, 1
          %s398 = scalar_select %p397, %s18, 1
          %s399 = smul.addr %s398, 2
          %s400 = scalar_lea.vmem %s9, %s399
        $region60: #{tpu_custom_call.1} parent=27 // pred_fallthru
          _
      $region28: #{tpu_custom_call.1} parent=5 // pred_fallthru
        _
      %p401 = scmp.le.s32.totalorder 1, %s18
      %p402 = scmp.lt.s32.totalorder %s18, 3
      %p403 = pnand %p401, %p402
      %p404 = pneg %p403
      // Predicated region
      $region61: #{tpu_custom_call.1} parent=5 // pred_check
        _
      $region62: #{tpu_custom_call.1} parent=5 // pred_check_branch
        %406 = sbr.rel (%p403) target = $region64
      $region63: #{tpu_custom_call.1} parent=5 // pred_region
        %s407 = ssub.s32 %s18, 1
        %p408 = pneg %p39
        %p409 = pneg %p36
        %p410 = pneg %p60
        %p411 = pneg %p57
        %p412 = scmp.lt.s32.totalorder %s23, 1
        %s413 = scalar_select %p412, %s23, 1
        %s414 = smul.addr %s413, 64
        %s415 = smul.addr %s414, 4
        %s416 = scalar_lea.vmem %s2, %s415
        %p417 = pneg %p86
        %p418 = pneg %p83
        %p419 = scmp.lt.s32.totalorder %s23, 1
        %s420 = scalar_select %p419, %s23, 1
        %s421 = smul.addr %s420, 64
        %s422 = smul.addr %s421, 4
        %s423 = scalar_lea.vmem %s3, %s422
        %p424 = pneg %p112
        %p425 = pneg %p109
        %p426 = scmp.lt.s32.totalorder %s23, 1
        %s427 = scalar_select %p426, %s23, 1
        %s428 = smul.addr %s427, 64
        %s429 = smul.addr %s428, 4
        %s430 = scalar_lea.vmem %s4, %s429
        %p431 = pneg %p138
        %p432 = pneg %p135
        %p433 = scmp.lt.s32.totalorder %s23, 1
        %s434 = scalar_select %p433, %s23, 1
        %s435 = smul.addr %s434, 16
        %s436 = smul.addr %s435, 4
        %s437 = scalar_lea.vmem %s5, %s436
        %p438 = pneg %p164
        %p439 = pneg %p161
        %p440 = scmp.lt.s32.totalorder %s23, 1
        %s441 = scalar_select %p440, %s23, 1
        %s442 = smul.addr %s441, 32
        %s443 = smul.addr %s442, 4
        %s444 = scalar_lea.vmem %s6, %s443
        %p445 = pneg %p190
        %p446 = pneg %p187
        %p447 = scmp.lt.s32.totalorder %s23, 1
        %s448 = scalar_select %p447, %s23, 1
        %s449 = smul.addr %s448, 32
        %s450 = smul.addr %s449, 4
        %s451 = scalar_lea.vmem %s7, %s450
        %p452 = pneg %p216
        %p453 = pneg %p213
        %p454 = scmp.lt.s32.totalorder %s23, 1
        %s455 = scalar_select %p454, %s23, 1
        %s456 = smul.addr %s455, 2
        %s457 = smul.addr %s456, 8
        %s458 = scalar_lea.vmem %s8, %s457
        %p459 = pneg %p242
        %p460 = pneg %p239
        %p461 = scmp.lt.s32.totalorder %s23, 1
        %s462 = scalar_select %p461, %s23, 1
        %s463 = smul.addr %s462, 2
        %s464 = scalar_lea.vmem %s9, %s463
        %p465 = pneg %p268
        %p466 = pneg %p265
        %p467 = pneg %p289
        %p468 = pneg %p286
        %p469 = pneg %p310
        %p470 = pneg %p307
        %p471 = scmp.lt.s32.totalorder %s23, 1
        %s472 = scalar_select %p471, %s23, 1
        %s473 = smul.addr %s472, 64
        %s474 = smul.addr %s473, 4
        %s475 = scalar_lea.vmem %s2, %s474
        %p476 = scmp.lt.s32.totalorder %s23, 1
        %s477 = scalar_select %p476, %s23, 1
        %s478 = smul.addr %s477, 64
        %s479 = smul.addr %s478, 4
        %s480 = scalar_lea.vmem %s3, %s479
        %p481 = scmp.lt.s32.totalorder %s23, 1
        %s482 = scalar_select %p481, %s23, 1
        %s483 = smul.addr %s482, 64
        %s484 = smul.addr %s483, 4
        %s485 = scalar_lea.vmem %s4, %s484
        %p486 = scmp.lt.s32.totalorder %s23, 1
        %s487 = scalar_select %p486, %s23, 1
        %s488 = smul.addr %s487, 16
        %s489 = smul.addr %s488, 4
        %s490 = scalar_lea.vmem %s5, %s489
        %p491 = scmp.lt.s32.totalorder %s23, 1
        %s492 = scalar_select %p491, %s23, 1
        %s493 = smul.addr %s492, 32
        %s494 = smul.addr %s493, 4
        %s495 = scalar_lea.vmem %s6, %s494
        %p496 = scmp.lt.s32.totalorder %s23, 1
        %s497 = scalar_select %p496, %s23, 1
        %s498 = smul.addr %s497, 32
        %s499 = smul.addr %s498, 4
        %s500 = scalar_lea.vmem %s7, %s499
        %p501 = scmp.lt.s32.totalorder %s23, 1
        %s502 = scalar_select %p501, %s23, 1
        %s503 = smul.addr %s502, 2
        %s504 = smul.addr %s503, 8
        %s505 = scalar_lea.vmem %s8, %s504
        %p506 = scmp.lt.s32.totalorder %s23, 1
        %s507 = scalar_select %p506, %s23, 1
        %s508 = smul.addr %s507, 2
        %s509 = scalar_lea.vmem %s9, %s508
        %p511 = scmp.eq.s32.totalorder %s23, 0
        // Predicated region
        $region65: #{tpu_custom_call.1} parent=63 // pred_check
          %p512 = pneg %p511
        $region66: #{tpu_custom_call.1} parent=63 // pred_check_branch
          %514 = sbr.rel (%p512) target = $region68
        $region67: #{tpu_custom_call.1} parent=63 // pred_region
          %v515 = vld [vmem:[%s0] sm:$0xff]
          %v516 = vld [vmem:[%s0 + $0x8] sm:$0xff]
          %v517 = vld [vmem:[%s0 + $0x10] sm:$0xff]
          %v518 = vld [vmem:[%s0 + $0x18] sm:$0xff]
          %519 = vst [vmem:[#allocation2] sm:$0xff] %v515
          %520 = vst [vmem:[#allocation2 + $0x8] sm:$0xff] %v516
          %521 = vst [vmem:[#allocation2 + $0x10] sm:$0xff] %v517
          %522 = vst [vmem:[#allocation2 + $0x18] sm:$0xff] %v518
        $region68: #{tpu_custom_call.1} parent=63 // pred_fallthru
          _
        %v523 = vld [vmem:[#allocation2] sm:$0xff]
        %v524 = vld [vmem:[#allocation2 + $0x8] sm:$0xff]
        %v525 = vld [vmem:[#allocation2 + $0x10] sm:$0xff]
        %v526 = vld [vmem:[#allocation2 + $0x18] sm:$0xff]
        %v527 = vld [vmem:[%s1] sm:$0xff]
        %v528 = vld [vmem:[%s1 + $0x8] sm:$0xff]
        %v529 = vld [vmem:[%s1 + $0x10] sm:$0xff]
        %v530 = vld [vmem:[%s1 + $0x18] sm:$0xff]
        %v531 = vadd.f32 %v523, %v527
        %v532 = vadd.f32 %v524, %v528
        %v533 = vadd.f32 %v525, %v529
        %v534 = vadd.f32 %v526, %v530
        %v535 = vld [vmem:[%s505] sm:$0xff]
        %v536 = vld [vmem:[%s505 + $0x8] sm:$0x1]
        %v537 = vld [vmem:[%s509] sm:$0x3]
        %v538 = vld [vmem:[%s475] sm:$0xf]
        %v539 = vld [vmem:[%s475 + $0x4] sm:$0xf]
        %v540 = vld [vmem:[%s475 + $0x8] sm:$0xf]
        %v541 = vld [vmem:[%s475 + $0xc] sm:$0xf]
        %v542 = vld [vmem:[%s475 + $0x10] sm:$0xf]
        %v543 = vld [vmem:[%s475 + $0x14] sm:$0xf]
        %v544 = vld [vmem:[%s475 + $0x18] sm:$0xf]
        %v545 = vld [vmem:[%s475 + $0x1c] sm:$0xf]
        %v546 = vld [vmem:[%s475 + $0x20] sm:$0xf]
        %v547 = vld [vmem:[%s475 + $0x24] sm:$0xf]
        %v548 = vld [vmem:[%s475 + $0x28] sm:$0xf]
        %v549 = vld [vmem:[%s475 + $0x2c] sm:$0xf]
        %v550 = vld [vmem:[%s475 + $0x30] sm:$0xf]
        %v551 = vld [vmem:[%s475 + $0x34] sm:$0xf]
        %v552 = vld [vmem:[%s475 + $0x38] sm:$0xf]
        %v553 = vld [vmem:[%s475 + $0x3c] sm:$0xf]
        %v554 = vld [vmem:[%s475 + $0x40] sm:$0xf]
        %v555 = vld [vmem:[%s475 + $0x44] sm:$0xf]
        %v556 = vld [vmem:[%s475 + $0x48] sm:$0xf]
        %v557 = vld [vmem:[%s475 + $0x4c] sm:$0xf]
        %v558 = vld [vmem:[%s475 + $0x50] sm:$0xf]
        %v559 = vld [vmem:[%s475 + $0x54] sm:$0xf]
        %v560 = vld [vmem:[%s475 + $0x58] sm:$0xf]
        %v561 = vld [vmem:[%s475 + $0x5c] sm:$0xf]
        %v562 = vld [vmem:[%s475 + $0x60] sm:$0xf]
        %v563 = vld [vmem:[%s475 + $0x64] sm:$0xf]
        %v564 = vld [vmem:[%s475 + $0x68] sm:$0xf]
        %v565 = vld [vmem:[%s475 + $0x6c] sm:$0xf]
        %v566 = vld [vmem:[%s475 + $0x70] sm:$0xf]
        %v567 = vld [vmem:[%s475 + $0x74] sm:$0xf]
        %v568 = vld [vmem:[%s475 + $0x78] sm:$0xf]
        %v569 = vld [vmem:[%s475 + $0x7c] sm:$0xf]
        %v570 = vld [vmem:[%s475 + $0x80] sm:$0xf]
        %v571 = vld [vmem:[%s475 + $0x84] sm:$0xf]
        %v572 = vld [vmem:[%s475 + $0x88] sm:$0xf]
        %v573 = vld [vmem:[%s475 + $0x8c] sm:$0xf]
        %v574 = vld [vmem:[%s475 + $0x90] sm:$0xf]
        %v575 = vld [vmem:[%s475 + $0x94] sm:$0xf]
        %v576 = vld [vmem:[%s475 + $0x98] sm:$0xf]
        %v577 = vld [vmem:[%s475 + $0x9c] sm:$0xf]
        %v578 = vld [vmem:[%s475 + $0xa0] sm:$0xf]
        %v579 = vld [vmem:[%s475 + $0xa4] sm:$0xf]
        %v580 = vld [vmem:[%s475 + $0xa8] sm:$0xf]
        %v581 = vld [vmem:[%s475 + $0xac] sm:$0xf]
        %v582 = vld [vmem:[%s475 + $0xb0] sm:$0xf]
        %v583 = vld [vmem:[%s475 + $0xb4] sm:$0xf]
        %v584 = vld [vmem:[%s475 + $0xb8] sm:$0xf]
        %v585 = vld [vmem:[%s475 + $0xbc] sm:$0xf]
        %v586 = vld [vmem:[%s475 + $0xc0] sm:$0xf]
        %v587 = vld [vmem:[%s475 + $0xc4] sm:$0xf]
        %v588 = vld [vmem:[%s475 + $0xc8] sm:$0xf]
        %v589 = vld [vmem:[%s475 + $0xcc] sm:$0xf]
        %v590 = vld [vmem:[%s475 + $0xd0] sm:$0xf]
        %v591 = vld [vmem:[%s475 + $0xd4] sm:$0xf]
        %v592 = vld [vmem:[%s475 + $0xd8] sm:$0xf]
        %v593 = vld [vmem:[%s475 + $0xdc] sm:$0xf]
        %v594 = vld [vmem:[%s475 + $0xe0] sm:$0xf]
        %v595 = vld [vmem:[%s475 + $0xe4] sm:$0xf]
        %v596 = vld [vmem:[%s475 + $0xe8] sm:$0xf]
        %v597 = vld [vmem:[%s475 + $0xec] sm:$0xf]
        %v598 = vld [vmem:[%s475 + $0xf0] sm:$0xf]
        %v599 = vld [vmem:[%s475 + $0xf4] sm:$0xf]
        %v600 = vld [vmem:[%s475 + $0xf8] sm:$0xf]
        %v601 = vld [vmem:[%s475 + $0xfc] sm:$0xf]
        %v602 = vld [vmem:[%s480] sm:$0xf]
        %v603 = vld [vmem:[%s480 + $0x4] sm:$0xf]
        %v604 = vld [vmem:[%s480 + $0x8] sm:$0xf]
        %v605 = vld [vmem:[%s480 + $0xc] sm:$0xf]
        %v606 = vld [vmem:[%s480 + $0x10] sm:$0xf]
        %v607 = vld [vmem:[%s480 + $0x14] sm:$0xf]
        %v608 = vld [vmem:[%s480 + $0x18] sm:$0xf]
        %v609 = vld [vmem:[%s480 + $0x1c] sm:$0xf]
        %v610 = vld [vmem:[%s480 + $0x20] sm:$0xf]
        %v611 = vld [vmem:[%s480 + $0x24] sm:$0xf]
        %v612 = vld [vmem:[%s480 + $0x28] sm:$0xf]
        %v613 = vld [vmem:[%s480 + $0x2c] sm:$0xf]
        %v614 = vld [vmem:[%s480 + $0x30] sm:$0xf]
        %v615 = vld [vmem:[%s480 + $0x34] sm:$0xf]
        %v616 = vld [vmem:[%s480 + $0x38] sm:$0xf]
        %v617 = vld [vmem:[%s480 + $0x3c] sm:$0xf]
        %v618 = vld [vmem:[%s480 + $0x40] sm:$0xf]
        %v619 = vld [vmem:[%s480 + $0x44] sm:$0xf]
        %v620 = vld [vmem:[%s480 + $0x48] sm:$0xf]
        %v621 = vld [vmem:[%s480 + $0x4c] sm:$0xf]
        %v622 = vld [vmem:[%s480 + $0x50] sm:$0xf]
        %v623 = vld [vmem:[%s480 + $0x54] sm:$0xf]
        %v624 = vld [vmem:[%s480 + $0x58] sm:$0xf]
        %v625 = vld [vmem:[%s480 + $0x5c] sm:$0xf]
        %v626 = vld [vmem:[%s480 + $0x60] sm:$0xf]
        %v627 = vld [vmem:[%s480 + $0x64] sm:$0xf]
        %v628 = vld [vmem:[%s480 + $0x68] sm:$0xf]
        %v629 = vld [vmem:[%s480 + $0x6c] sm:$0xf]
        %v630 = vld [vmem:[%s480 + $0x70] sm:$0xf]
        %v631 = vld [vmem:[%s480 + $0x74] sm:$0xf]
        %v632 = vld [vmem:[%s480 + $0x78] sm:$0xf]
        %v633 = vld [vmem:[%s480 + $0x7c] sm:$0xf]
        %v634 = vld [vmem:[%s480 + $0x80] sm:$0xf]
        %v635 = vld [vmem:[%s480 + $0x84] sm:$0xf]
        %v636 = vld [vmem:[%s480 + $0x88] sm:$0xf]
        %v637 = vld [vmem:[%s480 + $0x8c] sm:$0xf]
        %v638 = vld [vmem:[%s480 + $0x90] sm:$0xf]
        %v639 = vld [vmem:[%s480 + $0x94] sm:$0xf]
        %v640 = vld [vmem:[%s480 + $0x98] sm:$0xf]
        %v641 = vld [vmem:[%s480 + $0x9c] sm:$0xf]
        %v642 = vld [vmem:[%s480 + $0xa0] sm:$0xf]
        %v643 = vld [vmem:[%s480 + $0xa4] sm:$0xf]
        %v644 = vld [vmem:[%s480 + $0xa8] sm:$0xf]
        %v645 = vld [vmem:[%s480 + $0xac] sm:$0xf]
        %v646 = vld [vmem:[%s480 + $0xb0] sm:$0xf]
        %v647 = vld [vmem:[%s480 + $0xb4] sm:$0xf]
        %v648 = vld [vmem:[%s480 + $0xb8] sm:$0xf]
        %v649 = vld [vmem:[%s480 + $0xbc] sm:$0xf]
        %v650 = vld [vmem:[%s480 + $0xc0] sm:$0xf]
        %v651 = vld [vmem:[%s480 + $0xc4] sm:$0xf]
        %v652 = vld [vmem:[%s480 + $0xc8] sm:$0xf]
        %v653 = vld [vmem:[%s480 + $0xcc] sm:$0xf]
        %v654 = vld [vmem:[%s480 + $0xd0] sm:$0xf]
        %v655 = vld [vmem:[%s480 + $0xd4] sm:$0xf]
        %v656 = vld [vmem:[%s480 + $0xd8] sm:$0xf]
        %v657 = vld [vmem:[%s480 + $0xdc] sm:$0xf]
        %v658 = vld [vmem:[%s480 + $0xe0] sm:$0xf]
        %v659 = vld [vmem:[%s480 + $0xe4] sm:$0xf]
        %v660 = vld [vmem:[%s480 + $0xe8] sm:$0xf]
        %v661 = vld [vmem:[%s480 + $0xec] sm:$0xf]
        %v662 = vld [vmem:[%s480 + $0xf0] sm:$0xf]
        %v663 = vld [vmem:[%s480 + $0xf4] sm:$0xf]
        %v664 = vld [vmem:[%s480 + $0xf8] sm:$0xf]
        %v665 = vld [vmem:[%s480 + $0xfc] sm:$0xf]
        %v666 = vld [vmem:[%s485] sm:$0xf]
        %v667 = vld [vmem:[%s485 + $0x4] sm:$0xf]
        %v668 = vld [vmem:[%s485 + $0x8] sm:$0xf]
        %v669 = vld [vmem:[%s485 + $0xc] sm:$0xf]
        %v670 = vld [vmem:[%s485 + $0x10] sm:$0xf]
        %v671 = vld [vmem:[%s485 + $0x14] sm:$0xf]
        %v672 = vld [vmem:[%s485 + $0x18] sm:$0xf]
        %v673 = vld [vmem:[%s485 + $0x1c] sm:$0xf]
        %v674 = vld [vmem:[%s485 + $0x20] sm:$0xf]
        %v675 = vld [vmem:[%s485 + $0x24] sm:$0xf]
        %v676 = vld [vmem:[%s485 + $0x28] sm:$0xf]
        %v677 = vld [vmem:[%s485 + $0x2c] sm:$0xf]
        %v678 = vld [vmem:[%s485 + $0x30] sm:$0xf]
        %v679 = vld [vmem:[%s485 + $0x34] sm:$0xf]
        %v680 = vld [vmem:[%s485 + $0x38] sm:$0xf]
        %v681 = vld [vmem:[%s485 + $0x3c] sm:$0xf]
        %v682 = vld [vmem:[%s485 + $0x40] sm:$0xf]
        %v683 = vld [vmem:[%s485 + $0x44] sm:$0xf]
        %v684 = vld [vmem:[%s485 + $0x48] sm:$0xf]
        %v685 = vld [vmem:[%s485 + $0x4c] sm:$0xf]
        %v686 = vld [vmem:[%s485 + $0x50] sm:$0xf]
        %v687 = vld [vmem:[%s485 + $0x54] sm:$0xf]
        %v688 = vld [vmem:[%s485 + $0x58] sm:$0xf]
        %v689 = vld [vmem:[%s485 + $0x5c] sm:$0xf]
        %v690 = vld [vmem:[%s485 + $0x60] sm:$0xf]
        %v691 = vld [vmem:[%s485 + $0x64] sm:$0xf]
        %v692 = vld [vmem:[%s485 + $0x68] sm:$0xf]
        %v693 = vld [vmem:[%s485 + $0x6c] sm:$0xf]
        %v694 = vld [vmem:[%s485 + $0x70] sm:$0xf]
        %v695 = vld [vmem:[%s485 + $0x74] sm:$0xf]
        %v696 = vld [vmem:[%s485 + $0x78] sm:$0xf]
        %v697 = vld [vmem:[%s485 + $0x7c] sm:$0xf]
        %v698 = vld [vmem:[%s485 + $0x80] sm:$0xf]
        %v699 = vld [vmem:[%s485 + $0x84] sm:$0xf]
        %v700 = vld [vmem:[%s485 + $0x88] sm:$0xf]
        %v701 = vld [vmem:[%s485 + $0x8c] sm:$0xf]
        %v702 = vld [vmem:[%s485 + $0x90] sm:$0xf]
        %v703 = vld [vmem:[%s485 + $0x94] sm:$0xf]
        %v704 = vld [vmem:[%s485 + $0x98] sm:$0xf]
        %v705 = vld [vmem:[%s485 + $0x9c] sm:$0xf]
        %v706 = vld [vmem:[%s485 + $0xa0] sm:$0xf]
        %v707 = vld [vmem:[%s485 + $0xa4] sm:$0xf]
        %v708 = vld [vmem:[%s485 + $0xa8] sm:$0xf]
        %v709 = vld [vmem:[%s485 + $0xac] sm:$0xf]
        %v710 = vld [vmem:[%s485 + $0xb0] sm:$0xf]
        %v711 = vld [vmem:[%s485 + $0xb4] sm:$0xf]
        %v712 = vld [vmem:[%s485 + $0xb8] sm:$0xf]
        %v713 = vld [vmem:[%s485 + $0xbc] sm:$0xf]
        %v714 = vld [vmem:[%s485 + $0xc0] sm:$0xf]
        %v715 = vld [vmem:[%s485 + $0xc4] sm:$0xf]
        %v716 = vld [vmem:[%s485 + $0xc8] sm:$0xf]
        %v717 = vld [vmem:[%s485 + $0xcc] sm:$0xf]
        %v718 = vld [vmem:[%s485 + $0xd0] sm:$0xf]
        %v719 = vld [vmem:[%s485 + $0xd4] sm:$0xf]
        %v720 = vld [vmem:[%s485 + $0xd8] sm:$0xf]
        %v721 = vld [vmem:[%s485 + $0xdc] sm:$0xf]
        %v722 = vld [vmem:[%s485 + $0xe0] sm:$0xf]
        %v723 = vld [vmem:[%s485 + $0xe4] sm:$0xf]
        %v724 = vld [vmem:[%s485 + $0xe8] sm:$0xf]
        %v725 = vld [vmem:[%s485 + $0xec] sm:$0xf]
        %v726 = vld [vmem:[%s485 + $0xf0] sm:$0xf]
        %v727 = vld [vmem:[%s485 + $0xf4] sm:$0xf]
        %v728 = vld [vmem:[%s485 + $0xf8] sm:$0xf]
        %v729 = vld [vmem:[%s485 + $0xfc] sm:$0xf]
        %v730 = vld [vmem:[%s490] sm:$0xf]
        %v731 = vld [vmem:[%s490 + $0x4] sm:$0xf]
        %v732 = vld [vmem:[%s490 + $0x8] sm:$0xf]
        %v733 = vld [vmem:[%s490 + $0xc] sm:$0xf]
        %v734 = vld [vmem:[%s490 + $0x10] sm:$0xf]
        %v735 = vld [vmem:[%s490 + $0x14] sm:$0xf]
        %v736 = vld [vmem:[%s490 + $0x18] sm:$0xf]
        %v737 = vld [vmem:[%s490 + $0x1c] sm:$0xf]
        %v738 = vld [vmem:[%s490 + $0x20] sm:$0xf]
        %v739 = vld [vmem:[%s490 + $0x24] sm:$0xf]
        %v740 = vld [vmem:[%s490 + $0x28] sm:$0xf]
        %v741 = vld [vmem:[%s490 + $0x2c] sm:$0xf]
        %v742 = vld [vmem:[%s490 + $0x30] sm:$0xf]
        %v743 = vld [vmem:[%s490 + $0x34] sm:$0xf]
        %v744 = vld [vmem:[%s490 + $0x38] sm:$0xf]
        %v745 = vld [vmem:[%s490 + $0x3c] sm:$0xf]
        %v746 = vpack.c.bf16 %v532, %v531
        %v747 = vpack.c.bf16 %v534, %v533
        %v748 = vlaneseq
        %v749 = vshrl.u32 %v748, 7
        %v750 = vsub.s32 0, %v749
        %v751 = vrot.slane %v535, %v750
        %v768 = vunpack.c.l.b16 %v538
        %v769 = vunpack.c.l.b16 %v539
        %v770 = vunpack.c.l.b16 %v540
        %v771 = vunpack.c.l.b16 %v541
        %v772 = vunpack.c.l.b16 %v542
        %v773 = vunpack.c.l.b16 %v543
        %v774 = vunpack.c.l.b16 %v544
        %v775 = vunpack.c.l.b16 %v545
        %v776 = vunpack.c.l.b16 %v546
        %v777 = vunpack.c.l.b16 %v547
        %v778 = vunpack.c.l.b16 %v548
        %v779 = vunpack.c.l.b16 %v549
        %v780 = vunpack.c.l.b16 %v550
        %v781 = vunpack.c.l.b16 %v551
        %v782 = vunpack.c.l.b16 %v552
        %v783 = vunpack.c.l.b16 %v553
        %v784 = vpack.c.b16 %v769, %v768
        %v785 = vpack.c.b16 %v771, %v770
        %v786 = vpack.c.b16 %v773, %v772
        %v787 = vpack.c.b16 %v775, %v774
        %v788 = vpack.c.b16 %v777, %v776
        %v789 = vpack.c.b16 %v779, %v778
        %v790 = vpack.c.b16 %v781, %v780
        %v791 = vpack.c.b16 %v783, %v782
        %800 = vmatprep.subr.bf16.mxu0 0
        %801 = vmatpush1.bf16.msra.mxu0 %v784
        %802 = vmatprep.subr.bf16.mxu0 0
        %803 = vmatpush1.bf16.msra.mxu0 %v785
        %804 = vmatprep.subr.bf16.mxu0 0
        %805 = vmatpush1.bf16.msra.mxu0 %v786
        %806 = vmatprep.subr.bf16.mxu0 0
        %807 = vmatpush1.bf16.msra.mxu0 %v787
        %808 = vmatprep.subr.bf16.mxu0 0
        %809 = vmatpush1.bf16.msra.mxu0 %v788
        %810 = vmatprep.subr.bf16.mxu0 0
        %811 = vmatpush1.bf16.msra.mxu0 %v789
        %812 = vmatprep.subr.bf16.mxu0 0
        %813 = vmatpush1.bf16.msra.mxu0 %v790
        %814 = vmatprep.subr.bf16.mxu0 0
        %815 = vmatpush1.bf16.msra.mxu0 %v791
        %816 = vmatprep.subr.bf16.mxu0 0
        %817 = vmatpush1.bf16.msra.mxu0 0
        %818 = vmatprep.subr.bf16.mxu0 0
        %819 = vmatpush1.bf16.msra.mxu0 0
        %820 = vmatprep.subr.bf16.mxu0 0
        %821 = vmatpush1.bf16.msra.mxu0 0
        %822 = vmatprep.subr.bf16.mxu0 0
        %823 = vmatpush1.bf16.msra.mxu0 0
        %824 = vmatprep.subr.bf16.mxu0 0
        %825 = vmatpush1.bf16.msra.mxu0 0
        %826 = vmatprep.subr.bf16.mxu0 0
        %827 = vmatpush1.bf16.msra.mxu0 0
        %828 = vmatprep.subr.bf16.mxu0 0
        %829 = vmatpush1.bf16.msra.mxu0 0
        %830 = vmatprep.subr.bf16.mxu0 0
        %831 = vmatpush1.bf16.msra.mxu0 0
        %832 = vmatprep.mubr.bf16.mxu0 0
        %833 = vmatmul.mubr.bf16.gmra.mrb[0].mxu0 %v746
        %v834 = vpop.f32.mrb[0].mxu0
        %v835 = vadd.f32 %v751, %v834
        %v836 = vpop.f32.mrb[0].mxu0
        %v837 = vpop.f32.mrb[0].mxu0
        %v838 = vadd.f32 %v751, %v837
        %v839 = vpop.f32.mrb[0].mxu0
        %840 = vmatprep.mubr.bf16.mxu0 0
        %841 = vmatmul.mubr.bf16.gmra.mrb[0].mxu0 %v747
        %v842 = vpop.f32.mrb[0].mxu0
        %v843 = vadd.f32 %v751, %v842
        %v844 = vpop.f32.mrb[0].mxu0
        %v845 = vpop.f32.mrb[0].mxu0
        %v846 = vadd.f32 %v751, %v845
        %v847 = vpop.f32.mrb[0].mxu0
        %848 = vdwg.mxu0
        %v849 = vlaneseq
        %v850 = vshrl.u32 %v849, 7
        %v851 = vsub.s32 1, %v850
        %v852 = vrot.slane %v535, %v851
        %v869 = vunpack.c.l.b16 %v602
        %v870 = vunpack.c.l.b16 %v603
        %v871 = vunpack.c.l.b16 %v604
        %v872 = vunpack.c.l.b16 %v605
        %v873 = vunpack.c.l.b16 %v606
        %v874 = vunpack.c.l.b16 %v607
        %v875 = vunpack.c.l.b16 %v608
        %v876 = vunpack.c.l.b16 %v609
        %v877 = vunpack.c.l.b16 %v610
        %v878 = vunpack.c.l.b16 %v611
        %v879 = vunpack.c.l.b16 %v612
        %v880 = vunpack.c.l.b16 %v613
        %v881 = vunpack.c.l.b16 %v614
        %v882 = vunpack.c.l.b16 %v615
        %v883 = vunpack.c.l.b16 %v616
        %v884 = vunpack.c.l.b16 %v617
        %v885 = vpack.c.b16 %v870, %v869
        %v886 = vpack.c.b16 %v872, %v871
        %v887 = vpack.c.b16 %v874, %v873
        %v888 = vpack.c.b16 %v876, %v875
        %v889 = vpack.c.b16 %v878, %v877
        %v890 = vpack.c.b16 %v880, %v879
        %v891 = vpack.c.b16 %v882, %v881
        %v892 = vpack.c.b16 %v884, %v883
        %901 = vmatprep.subr.bf16.mxu0 0
        %902 = vmatpush1.bf16.msra.mxu0 %v885
        %903 = vmatprep.subr.bf16.mxu0 0
        %904 = vmatpush1.bf16.msra.mxu0 %v886
        %905 = vmatprep.subr.bf16.mxu0 0
        %906 = vmatpush1.bf16.msra.mxu0 %v887
        %907 = vmatprep.subr.bf16.mxu0 0
        %908 = vmatpush1.bf16.msra.mxu0 %v888
        %909 = vmatprep.subr.bf16.mxu0 0
        %910 = vmatpush1.bf16.msra.mxu0 %v889
        %911 = vmatprep.subr.bf16.mxu0 0
        %912 = vmatpush1.bf16.msra.mxu0 %v890
        %913 = vmatprep.subr.bf16.mxu0 0
        %914 = vmatpush1.bf16.msra.mxu0 %v891
        %915 = vmatprep.subr.bf16.mxu0 0
        %916 = vmatpush1.bf16.msra.mxu0 %v892
        %917 = vmatprep.subr.bf16.mxu0 0
        %918 = vmatpush1.bf16.msra.mxu0 0
        %919 = vmatprep.subr.bf16.mxu0 0
        %920 = vmatpush1.bf16.msra.mxu0 0
        %921 = vmatprep.subr.bf16.mxu0 0
        %922 = vmatpush1.bf16.msra.mxu0 0
        %923 = vmatprep.subr.bf16.mxu0 0
        %924 = vmatpush1.bf16.msra.mxu0 0
        %925 = vmatprep.subr.bf16.mxu0 0
        %926 = vmatpush1.bf16.msra.mxu0 0
        %927 = vmatprep.subr.bf16.mxu0 0
        %928 = vmatpush1.bf16.msra.mxu0 0
        %929 = vmatprep.subr.bf16.mxu0 0
        %930 = vmatpush1.bf16.msra.mxu0 0
        %931 = vmatprep.subr.bf16.mxu0 0
        %932 = vmatpush1.bf16.msra.mxu0 0
        %933 = vmatprep.mubr.bf16.mxu0 0
        %934 = vmatmul.mubr.bf16.gmra.mrb[0].mxu0 %v746
        %v935 = vpop.f32.mrb[0].mxu0
        %v936 = vadd.f32 %v852, %v935
        %v937 = vpop.f32.mrb[0].mxu0
        %v938 = vpop.f32.mrb[0].mxu0
        %v939 = vadd.f32 %v852, %v938
        %v940 = vpop.f32.mrb[0].mxu0
        %941 = vmatprep.mubr.bf16.mxu0 0
        %942 = vmatmul.mubr.bf16.gmra.mrb[0].mxu0 %v747
        %v943 = vpop.f32.mrb[0].mxu0
        %v944 = vadd.f32 %v852, %v943
        %v945 = vpop.f32.mrb[0].mxu0
        %v946 = vpop.f32.mrb[0].mxu0
        %v947 = vadd.f32 %v852, %v946
        %v948 = vpop.f32.mrb[0].mxu0
        %949 = vdwg.mxu0
        %v950 = vpack.c.bf16 %v524, %v523
        %v951 = vpack.c.bf16 %v526, %v525
        %v952 = vlaneseq
        %v953 = vshrl.u32 %v952, 7
        %v954 = vsub.s32 2, %v953
        %v955 = vrot.slane %v535, %v954
        %v972 = vunpack.c.l.b16 %v666
        %v973 = vunpack.c.l.b16 %v667
        %v974 = vunpack.c.l.b16 %v668
        %v975 = vunpack.c.l.b16 %v669
        %v976 = vunpack.c.l.b16 %v670
        %v977 = vunpack.c.l.b16 %v671
        %v978 = vunpack.c.l.b16 %v672
        %v979 = vunpack.c.l.b16 %v673
        %v980 = vunpack.c.l.b16 %v674
        %v981 = vunpack.c.l.b16 %v675
        %v982 = vunpack.c.l.b16 %v676
        %v983 = vunpack.c.l.b16 %v677
        %v984 = vunpack.c.l.b16 %v678
        %v985 = vunpack.c.l.b16 %v679
        %v986 = vunpack.c.l.b16 %v680
        %v987 = vunpack.c.l.b16 %v681
        %v988 = vpack.c.b16 %v973, %v972
        %v989 = vpack.c.b16 %v975, %v974
        %v990 = vpack.c.b16 %v977, %v976
        %v991 = vpack.c.b16 %v979, %v978
        %v992 = vpack.c.b16 %v981, %v980
        %v993 = vpack.c.b16 %v983, %v982
        %v994 = vpack.c.b16 %v985, %v984
        %v995 = vpack.c.b16 %v987, %v986
        %1004 = vmatprep.subr.bf16.mxu0 0
        %1005 = vmatpush1.bf16.msra.mxu0 %v988
        %1006 = vmatprep.subr.bf16.mxu0 0
        %1007 = vmatpush1.bf16.msra.mxu0 %v989
        %1008 = vmatprep.subr.bf16.mxu0 0
        %1009 = vmatpush1.bf16.msra.mxu0 %v990
        %1010 = vmatprep.subr.bf16.mxu0 0
        %1011 = vmatpush1.bf16.msra.mxu0 %v991
        %1012 = vmatprep.subr.bf16.mxu0 0
        %1013 = vmatpush1.bf16.msra.mxu0 %v992
        %1014 = vmatprep.subr.bf16.mxu0 0
        %1015 = vmatpush1.bf16.msra.mxu0 %v993
        %1016 = vmatprep.subr.bf16.mxu0 0
        %1017 = vmatpush1.bf16.msra.mxu0 %v994
        %1018 = vmatprep.subr.bf16.mxu0 0
        %1019 = vmatpush1.bf16.msra.mxu0 %v995
        %1020 = vmatprep.subr.bf16.mxu0 0
        %1021 = vmatpush1.bf16.msra.mxu0 0
        %1022 = vmatprep.subr.bf16.mxu0 0
        %1023 = vmatpush1.bf16.msra.mxu0 0
        %1024 = vmatprep.subr.bf16.mxu0 0
        %1025 = vmatpush1.bf16.msra.mxu0 0
        %1026 = vmatprep.subr.bf16.mxu0 0
        %1027 = vmatpush1.bf16.msra.mxu0 0
        %1028 = vmatprep.subr.bf16.mxu0 0
        %1029 = vmatpush1.bf16.msra.mxu0 0
        %1030 = vmatprep.subr.bf16.mxu0 0
        %1031 = vmatpush1.bf16.msra.mxu0 0
        %1032 = vmatprep.subr.bf16.mxu0 0
        %1033 = vmatpush1.bf16.msra.mxu0 0
        %1034 = vmatprep.subr.bf16.mxu0 0
        %1035 = vmatpush1.bf16.msra.mxu0 0
        %1036 = vmatprep.mubr.bf16.mxu0 0
        %1037 = vmatmul.mubr.bf16.gmra.mrb[0].mxu0 %v950
        %v1038 = vpop.f32.mrb[0].mxu0
        %v1039 = vadd.f32 %v955, %v1038
        %v1040 = vpop.f32.mrb[0].mxu0
        %v1041 = vpop.f32.mrb[0].mxu0
        %v1042 = vadd.f32 %v955, %v1041
        %v1043 = vpop.f32.mrb[0].mxu0
        %1044 = vmatprep.mubr.bf16.mxu0 0
        %1045 = vmatmul.mubr.bf16.gmra.mrb[0].mxu0 %v951
        %v1046 = vpop.f32.mrb[0].mxu0
        %v1047 = vadd.f32 %v955, %v1046
        %v1048 = vpop.f32.mrb[0].mxu0
        %v1049 = vpop.f32.mrb[0].mxu0
        %v1050 = vadd.f32 %v955, %v1049
        %v1051 = vpop.f32.mrb[0].mxu0
        %1052 = vdwg.mxu0
        %v1053 = vpack.c.bf16 %v838, %v835
        %v1054 = vpack.c.bf16 %v846, %v843
        %v1055 = vpack.c.bf16 %v939, %v936
        %v1056 = vpack.c.bf16 %v947, %v944
        %vm1057 = vcmask 261120
        %v1059 = vsel %vm1057, %v1053, 0
        %v1062 = vsel %vm1057, %v1055, 0
        %1064 = vmatprep.subr.bf16.mxu0 0
        %1065 = vmatpush1.bf16.xpose.msra.mxu0 %v1062
        %1066 = vmatprep.subr.bf16.mxu0 0
        %1067 = vmatpush1.bf16.xpose.msra.mxu0 0
        %1068 = vmatprep.subr.bf16.mxu0 0
        %1069 = vmatpush1.bf16.xpose.msra.mxu0 0
        %1070 = vmatprep.subr.bf16.mxu0 0
        %1071 = vmatpush1.bf16.xpose.msra.mxu0 0
        %1072 = vmatprep.subr.bf16.mxu0 0
        %1073 = vmatpush1.bf16.xpose.msra.mxu0 0
        %1074 = vmatprep.subr.bf16.mxu0 0
        %1075 = vmatpush1.bf16.xpose.msra.mxu0 0
        %1076 = vmatprep.subr.bf16.mxu0 0
        %1077 = vmatpush1.bf16.xpose.msra.mxu0 0
        %1078 = vmatprep.subr.bf16.mxu0 0
        %1079 = vmatpush1.bf16.xpose.msra.mxu0 0
        %1080 = vmatprep.subr.bf16.mxu0 0
        %1081 = vmatpush1.bf16.xpose.msra.mxu0 0
        %1082 = vmatprep.subr.bf16.mxu0 0
        %1083 = vmatpush1.bf16.xpose.msra.mxu0 0
        %1084 = vmatprep.subr.bf16.mxu0 0
        %1085 = vmatpush1.bf16.xpose.msra.mxu0 0
        %1086 = vmatprep.subr.bf16.mxu0 0
        %1087 = vmatpush1.bf16.xpose.msra.mxu0 0
        %1088 = vmatprep.subr.bf16.mxu0 0
        %1089 = vmatpush1.bf16.xpose.msra.mxu0 0
        %1090 = vmatprep.subr.bf16.mxu0 0
        %1091 = vmatpush1.bf16.xpose.msra.mxu0 0
        %1092 = vmatprep.subr.bf16.mxu0 0
        %1093 = vmatpush1.bf16.xpose.msra.mxu0 0
        %1094 = vmatprep.subr.bf16.mxu0 0
        %1095 = vmatpush1.bf16.xpose.msra.mxu0 0
        %1096 = vmatprep.mubr.bf16.mxu0 0
        %1097 = vmatmul.mubr.bf16.gmra.mrb[0].mxu0 %v1059
        %v1098 = vpop.f32.mrb[0].mxu0
        %v1099 = vadd.f32 0.0, %v1098
        %v1100 = vpop.f32.mrb[0].mxu0
        %v1101 = vpop.f32.mrb[0].mxu0
        %v1102 = vadd.f32 0.0, %v1101
        %v1103 = vpop.f32.mrb[0].mxu0
        %1104 = vdwg.mxu0
        %v1106 = vsel %vm1057, %v1054, 0
        %v1109 = vsel %vm1057, %v1056, 0
        %1111 = vmatprep.subr.bf16.mxu0 0
        %1112 = vmatpush1.bf16.xpose.msra.mxu0 %v1109
        %1113 = vmatprep.subr.bf16.mxu0 0
        %1114 = vmatpush1.bf16.xpose.msra.mxu0 0
        %1115 = vmatprep.subr.bf16.mxu0 0
        %1116 = vmatpush1.bf16.xpose.msra.mxu0 0
        %1117 = vmatprep.subr.bf16.mxu0 0
        %1118 = vmatpush1.bf16.xpose.msra.mxu0 0
        %1119 = vmatprep.subr.bf16.mxu0 0
        %1120 = vmatpush1.bf16.xpose.msra.mxu0 0
        %1121 = vmatprep.subr.bf16.mxu0 0
        %1122 = vmatpush1.bf16.xpose.msra.mxu0 0
        %1123 = vmatprep.subr.bf16.mxu0 0
        %1124 = vmatpush1.bf16.xpose.msra.mxu0 0
        %1125 = vmatprep.subr.bf16.mxu0 0
        %1126 = vmatpush1.bf16.xpose.msra.mxu0 0
        %1127 = vmatprep.subr.bf16.mxu0 0
        %1128 = vmatpush1.bf16.xpose.msra.mxu0 0
        %1129 = vmatprep.subr.bf16.mxu0 0
        %1130 = vmatpush1.bf16.xpose.msra.mxu0 0
        %1131 = vmatprep.subr.bf16.mxu0 0
        %1132 = vmatpush1.bf16.xpose.msra.mxu0 0
        %1133 = vmatprep.subr.bf16.mxu0 0
        %1134 = vmatpush1.bf16.xpose.msra.mxu0 0
        %1135 = vmatprep.subr.bf16.mxu0 0
        %1136 = vmatpush1.bf16.xpose.msra.mxu0 0
        %1137 = vmatprep.subr.bf16.mxu0 0
        %1138 = vmatpush1.bf16.xpose.msra.mxu0 0
        %1139 = vmatprep.subr.bf16.mxu0 0
        %1140 = vmatpush1.bf16.xpose.msra.mxu0 0
        %1141 = vmatprep.subr.bf16.mxu0 0
        %1142 = vmatpush1.bf16.xpose.msra.mxu0 0
        %1143 = vmatprep.mubr.bf16.mxu0 0
        %1144 = vmatmul.mubr.bf16.gmra.mrb[0].mxu0 %v1106
        %v1145 = vpop.f32.mrb[0].mxu0
        %v1146 = vadd.f32 0.0, %v1145
        %v1147 = vpop.f32.mrb[0].mxu0
        %v1148 = vpop.f32.mrb[0].mxu0
        %v1149 = vadd.f32 0.0, %v1148
        %v1150 = vpop.f32.mrb[0].mxu0
        %1151 = vdwg.mxu0
        %vm1152 = vcmask 130048
        %v1153 = vsel %vm1152, %v1099, -inf
        %1154 = vmax.xlane.f32.xlu0 %v1153
        %v1155 = vpop.xlane.xlu0 %1154
        %v1156 = vsel %vm1152, %v1102, -inf
        %1157 = vmax.xlane.f32.xlu0 %v1156
        %v1158 = vpop.xlane.xlu0 %1157
        %v1159 = vsel %vm1152, %v1146, -inf
        %1160 = vmax.xlane.f32.xlu0 %v1159
        %v1161 = vpop.xlane.xlu0 %1160
        %v1162 = vsel %vm1152, %v1149, -inf
        %1163 = vmax.xlane.f32.xlu0 %v1162
        %v1164 = vpop.xlane.xlu0 %1163
        %v1165 = vsub.f32 %v1099, %v1155
        %v1166 = vsub.f32 %v1102, %v1158
        %v1167 = vsub.f32 %v1146, %v1161
        %v1168 = vsub.f32 %v1149, %v1164
        %v1169 = vmul.f32 %v1165, 1.442695
        %v1170 = vpow.pop %v1169
        %v1171 = vmul.f32 %v1166, 1.442695
        %v1172 = vpow.pop %v1171
        %v1173 = vmul.f32 %v1167, 1.442695
        %v1174 = vpow.pop %v1173
        %v1175 = vmul.f32 %v1168, 1.442695
        %v1176 = vpow.pop %v1175
        %v1177 = vsel %vm1152, %v1170, 0.0
        %1178 = vadd.xlane.f32.xlu0 %v1177
        %v1179 = vpop.xlane.xlu0 %1178
        %v1180 = vsel %vm1152, %v1172, 0.0
        %1181 = vadd.xlane.f32.xlu0 %v1180
        %v1182 = vpop.xlane.xlu0 %1181
        %v1183 = vsel %vm1152, %v1174, 0.0
        %1184 = vadd.xlane.f32.xlu0 %v1183
        %v1185 = vpop.xlane.xlu0 %1184
        %v1186 = vsel %vm1152, %v1176, 0.0
        %1187 = vadd.xlane.f32.xlu0 %v1186
        %v1188 = vpop.xlane.xlu0 %1187
        %v1189 = vrcp.pop %v1179
        %v1190 = vrcp.pop %v1182
        %v1191 = vrcp.pop %v1185
        %v1192 = vrcp.pop %v1188
        %v1193 = vmul.f32 %v1170, %v1189
        %v1194 = vmul.f32 %v1172, %v1190
        %v1195 = vmul.f32 %v1174, %v1191
        %v1196 = vmul.f32 %v1176, %v1192
        %v1197 = vpack.c.bf16 %v1194, %v1193
        %v1198 = vpack.c.bf16 %v1196, %v1195
        %v1199 = vpack.c.bf16 %v1042, %v1039
        %v1200 = vpack.c.bf16 %v1050, %v1047
        %v1202 = vsel %vm1152, %v1197, 0
        %1204 = vmatprep.subr.bf16.mxu0 0
        %1205 = vmatpush1.bf16.msra.mxu0 %v1199
        %1206 = vmatprep.subr.bf16.mxu0 0
        %1207 = vmatpush1.bf16.msra.mxu0 0
        %1208 = vmatprep.subr.bf16.mxu0 0
        %1209 = vmatpush1.bf16.msra.mxu0 0
        %1210 = vmatprep.subr.bf16.mxu0 0
        %1211 = vmatpush1.bf16.msra.mxu0 0
        %1212 = vmatprep.subr.bf16.mxu0 0
        %1213 = vmatpush1.bf16.msra.mxu0 0
        %1214 = vmatprep.subr.bf16.mxu0 0
        %1215 = vmatpush1.bf16.msra.mxu0 0
        %1216 = vmatprep.subr.bf16.mxu0 0
        %1217 = vmatpush1.bf16.msra.mxu0 0
        %1218 = vmatprep.subr.bf16.mxu0 0
        %1219 = vmatpush1.bf16.msra.mxu0 0
        %1220 = vmatprep.subr.bf16.mxu0 0
        %1221 = vmatpush1.bf16.msra.mxu0 0
        %1222 = vmatprep.subr.bf16.mxu0 0
        %1223 = vmatpush1.bf16.msra.mxu0 0
        %1224 = vmatprep.subr.bf16.mxu0 0
        %1225 = vmatpush1.bf16.msra.mxu0 0
        %1226 = vmatprep.subr.bf16.mxu0 0
        %1227 = vmatpush1.bf16.msra.mxu0 0
        %1228 = vmatprep.subr.bf16.mxu0 0
        %1229 = vmatpush1.bf16.msra.mxu0 0
        %1230 = vmatprep.subr.bf16.mxu0 0
        %1231 = vmatpush1.bf16.msra.mxu0 0
        %1232 = vmatprep.subr.bf16.mxu0 0
        %1233 = vmatpush1.bf16.msra.mxu0 0
        %1234 = vmatprep.subr.bf16.mxu0 0
        %1235 = vmatpush1.bf16.msra.mxu0 0
        %1236 = vmatprep.mubr.bf16.mxu0 0
        %1237 = vmatmul.mubr.bf16.gmra.mrb[0].mxu0 %v1202
        %v1238 = vpop.f32.mrb[0].mxu0
        %v1239 = vadd.f32 0.0, %v1238
        %v1240 = vpop.f32.mrb[0].mxu0
        %v1241 = vpop.f32.mrb[0].mxu0
        %v1242 = vadd.f32 0.0, %v1241
        %v1243 = vpop.f32.mrb[0].mxu0
        %1244 = vdwg.mxu0
        %v1246 = vsel %vm1152, %v1198, 0
        %1248 = vmatprep.subr.bf16.mxu0 0
        %1249 = vmatpush1.bf16.msra.mxu0 %v1200
        %1250 = vmatprep.subr.bf16.mxu0 0
        %1251 = vmatpush1.bf16.msra.mxu0 0
        %1252 = vmatprep.subr.bf16.mxu0 0
        %1253 = vmatpush1.bf16.msra.mxu0 0
        %1254 = vmatprep.subr.bf16.mxu0 0
        %1255 = vmatpush1.bf16.msra.mxu0 0
        %1256 = vmatprep.subr.bf16.mxu0 0
        %1257 = vmatpush1.bf16.msra.mxu0 0
        %1258 = vmatprep.subr.bf16.mxu0 0
        %1259 = vmatpush1.bf16.msra.mxu0 0
        %1260 = vmatprep.subr.bf16.mxu0 0
        %1261 = vmatpush1.bf16.msra.mxu0 0
        %1262 = vmatprep.subr.bf16.mxu0 0
        %1263 = vmatpush1.bf16.msra.mxu0 0
        %1264 = vmatprep.subr.bf16.mxu0 0
        %1265 = vmatpush1.bf16.msra.mxu0 0
        %1266 = vmatprep.subr.bf16.mxu0 0
        %1267 = vmatpush1.bf16.msra.mxu0 0
        %1268 = vmatprep.subr.bf16.mxu0 0
        %1269 = vmatpush1.bf16.msra.mxu0 0
        %1270 = vmatprep.subr.bf16.mxu0 0
        %1271 = vmatpush1.bf16.msra.mxu0 0
        %1272 = vmatprep.subr.bf16.mxu0 0
        %1273 = vmatpush1.bf16.msra.mxu0 0
        %1274 = vmatprep.subr.bf16.mxu0 0
        %1275 = vmatpush1.bf16.msra.mxu0 0
        %1276 = vmatprep.subr.bf16.mxu0 0
        %1277 = vmatpush1.bf16.msra.mxu0 0
        %1278 = vmatprep.subr.bf16.mxu0 0
        %1279 = vmatpush1.bf16.msra.mxu0 0
        %1280 = vmatprep.mubr.bf16.mxu0 0
        %1281 = vmatmul.mubr.bf16.gmra.mrb[0].mxu0 %v1246
        %v1282 = vpop.f32.mrb[0].mxu0
        %v1283 = vadd.f32 0.0, %v1282
        %v1284 = vpop.f32.mrb[0].mxu0
        %v1285 = vpop.f32.mrb[0].mxu0
        %v1286 = vadd.f32 0.0, %v1285
        %v1287 = vpop.f32.mrb[0].mxu0
        %1288 = vdwg.mxu0
        %v1289 = vpack.c.bf16 %v1242, %v1239
        %v1290 = vpack.c.bf16 %v1286, %v1283
        %v1307 = vunpack.c.l.b16 %v554
        %v1308 = vunpack.c.l.b16 %v555
        %v1309 = vunpack.c.l.b16 %v556
        %v1310 = vunpack.c.l.b16 %v557
        %v1311 = vunpack.c.l.b16 %v558
        %v1312 = vunpack.c.l.b16 %v559
        %v1313 = vunpack.c.l.b16 %v560
        %v1314 = vunpack.c.l.b16 %v561
        %v1315 = vunpack.c.l.b16 %v562
        %v1316 = vunpack.c.l.b16 %v563
        %v1317 = vunpack.c.l.b16 %v564
        %v1318 = vunpack.c.l.b16 %v565
        %v1319 = vunpack.c.l.b16 %v566
        %v1320 = vunpack.c.l.b16 %v567
        %v1321 = vunpack.c.l.b16 %v568
        %v1322 = vunpack.c.l.b16 %v569
        %v1323 = vpack.c.b16 %v1308, %v1307
        %v1324 = vpack.c.b16 %v1310, %v1309
        %v1325 = vpack.c.b16 %v1312, %v1311
        %v1326 = vpack.c.b16 %v1314, %v1313
        %v1327 = vpack.c.b16 %v1316, %v1315
        %v1328 = vpack.c.b16 %v1318, %v1317
        %v1329 = vpack.c.b16 %v1320, %v1319
        %v1330 = vpack.c.b16 %v1322, %v1321
        %1340 = vrot.lane.b32.xlu0 %v751, 96
        %v1341 = vpop.permute.xlu0 %1340
        %1343 = vmatprep.subr.bf16.mxu0 0
        %1344 = vmatpush1.bf16.msra.mxu0 %v1323
        %1345 = vmatprep.subr.bf16.mxu0 0
        %1346 = vmatpush1.bf16.msra.mxu0 %v1324
        %1347 = vmatprep.subr.bf16.mxu0 0
        %1348 = vmatpush1.bf16.msra.mxu0 %v1325
        %1349 = vmatprep.subr.bf16.mxu0 0
        %1350 = vmatpush1.bf16.msra.mxu0 %v1326
        %1351 = vmatprep.subr.bf16.mxu0 0
        %1352 = vmatpush1.bf16.msra.mxu0 %v1327
        %1353 = vmatprep.subr.bf16.mxu0 0
        %1354 = vmatpush1.bf16.msra.mxu0 %v1328
        %1355 = vmatprep.subr.bf16.mxu0 0
        %1356 = vmatpush1.bf16.msra.mxu0 %v1329
        %1357 = vmatprep.subr.bf16.mxu0 0
        %1358 = vmatpush1.bf16.msra.mxu0 %v1330
        %1359 = vmatprep.subr.bf16.mxu0 0
        %1360 = vmatpush1.bf16.msra.mxu0 0
        %1361 = vmatprep.subr.bf16.mxu0 0
        %1362 = vmatpush1.bf16.msra.mxu0 0
        %1363 = vmatprep.subr.bf16.mxu0 0
        %1364 = vmatpush1.bf16.msra.mxu0 0
        %1365 = vmatprep.subr.bf16.mxu0 0
        %1366 = vmatpush1.bf16.msra.mxu0 0
        %1367 = vmatprep.subr.bf16.mxu0 0
        %1368 = vmatpush1.bf16.msra.mxu0 0
        %1369 = vmatprep.subr.bf16.mxu0 0
        %1370 = vmatpush1.bf16.msra.mxu0 0
        %1371 = vmatprep.subr.bf16.mxu0 0
        %1372 = vmatpush1.bf16.msra.mxu0 0
        %1373 = vmatprep.subr.bf16.mxu0 0
        %1374 = vmatpush1.bf16.msra.mxu0 0
        %1375 = vmatprep.mubr.bf16.mxu0 0
        %1376 = vmatmul.mubr.bf16.gmra.mrb[0].mxu0 %v746
        %v1377 = vpop.f32.mrb[0].mxu0
        %v1378 = vadd.f32 %v1341, %v1377
        %v1379 = vpop.f32.mrb[0].mxu0
        %v1380 = vpop.f32.mrb[0].mxu0
        %v1381 = vadd.f32 %v1341, %v1380
        %v1382 = vpop.f32.mrb[0].mxu0
        %1383 = vmatprep.mubr.bf16.mxu0 0
        %1384 = vmatmul.mubr.bf16.gmra.mrb[0].mxu0 %v747
        %v1385 = vpop.f32.mrb[0].mxu0
        %v1386 = vadd.f32 %v1341, %v1385
        %v1387 = vpop.f32.mrb[0].mxu0
        %v1388 = vpop.f32.mrb[0].mxu0
        %v1389 = vadd.f32 %v1341, %v1388
        %v1390 = vpop.f32.mrb[0].mxu0
        %1391 = vdwg.mxu0
        %v1408 = vunpack.c.l.b16 %v618
        %v1409 = vunpack.c.l.b16 %v619
        %v1410 = vunpack.c.l.b16 %v620
        %v1411 = vunpack.c.l.b16 %v621
        %v1412 = vunpack.c.l.b16 %v622
        %v1413 = vunpack.c.l.b16 %v623
        %v1414 = vunpack.c.l.b16 %v624
        %v1415 = vunpack.c.l.b16 %v625
        %v1416 = vunpack.c.l.b16 %v626
        %v1417 = vunpack.c.l.b16 %v627
        %v1418 = vunpack.c.l.b16 %v628
        %v1419 = vunpack.c.l.b16 %v629
        %v1420 = vunpack.c.l.b16 %v630
        %v1421 = vunpack.c.l.b16 %v631
        %v1422 = vunpack.c.l.b16 %v632
        %v1423 = vunpack.c.l.b16 %v633
        %v1424 = vpack.c.b16 %v1409, %v1408
        %v1425 = vpack.c.b16 %v1411, %v1410
        %v1426 = vpack.c.b16 %v1413, %v1412
        %v1427 = vpack.c.b16 %v1415, %v1414
        %v1428 = vpack.c.b16 %v1417, %v1416
        %v1429 = vpack.c.b16 %v1419, %v1418
        %v1430 = vpack.c.b16 %v1421, %v1420
        %v1431 = vpack.c.b16 %v1423, %v1422
        %1441 = vrot.lane.b32.xlu0 %v852, 96
        %v1442 = vpop.permute.xlu0 %1441
        %1444 = vmatprep.subr.bf16.mxu0 0
        %1445 = vmatpush1.bf16.msra.mxu0 %v1424
        %1446 = vmatprep.subr.bf16.mxu0 0
        %1447 = vmatpush1.bf16.msra.mxu0 %v1425
        %1448 = vmatprep.subr.bf16.mxu0 0
        %1449 = vmatpush1.bf16.msra.mxu0 %v1426
        %1450 = vmatprep.subr.bf16.mxu0 0
        %1451 = vmatpush1.bf16.msra.mxu0 %v1427
        %1452 = vmatprep.subr.bf16.mxu0 0
        %1453 = vmatpush1.bf16.msra.mxu0 %v1428
        %1454 = vmatprep.subr.bf16.mxu0 0
        %1455 = vmatpush1.bf16.msra.mxu0 %v1429
        %1456 = vmatprep.subr.bf16.mxu0 0
        %1457 = vmatpush1.bf16.msra.mxu0 %v1430
        %1458 = vmatprep.subr.bf16.mxu0 0
        %1459 = vmatpush1.bf16.msra.mxu0 %v1431
        %1460 = vmatprep.subr.bf16.mxu0 0
        %1461 = vmatpush1.bf16.msra.mxu0 0
        %1462 = vmatprep.subr.bf16.mxu0 0
        %1463 = vmatpush1.bf16.msra.mxu0 0
        %1464 = vmatprep.subr.bf16.mxu0 0
        %1465 = vmatpush1.bf16.msra.mxu0 0
        %1466 = vmatprep.subr.bf16.mxu0 0
        %1467 = vmatpush1.bf16.msra.mxu0 0
        %1468 = vmatprep.subr.bf16.mxu0 0
        %1469 = vmatpush1.bf16.msra.mxu0 0
        %1470 = vmatprep.subr.bf16.mxu0 0
        %1471 = vmatpush1.bf16.msra.mxu0 0
        %1472 = vmatprep.subr.bf16.mxu0 0
        %1473 = vmatpush1.bf16.msra.mxu0 0
        %1474 = vmatprep.subr.bf16.mxu0 0
        %1475 = vmatpush1.bf16.msra.mxu0 0
        %1476 = vmatprep.mubr.bf16.mxu0 0
        %1477 = vmatmul.mubr.bf16.gmra.mrb[0].mxu0 %v746
        %v1478 = vpop.f32.mrb[0].mxu0
        %v1479 = vadd.f32 %v1442, %v1478
        %v1480 = vpop.f32.mrb[0].mxu0
        %v1481 = vpop.f32.mrb[0].mxu0
        %v1482 = vadd.f32 %v1442, %v1481
        %v1483 = vpop.f32.mrb[0].mxu0
        %1484 = vmatprep.mubr.bf16.mxu0 0
        %1485 = vmatmul.mubr.bf16.gmra.mrb[0].mxu0 %v747
        %v1486 = vpop.f32.mrb[0].mxu0
        %v1487 = vadd.f32 %v1442, %v1486
        %v1488 = vpop.f32.mrb[0].mxu0
        %v1489 = vpop.f32.mrb[0].mxu0
        %v1490 = vadd.f32 %v1442, %v1489
        %v1491 = vpop.f32.mrb[0].mxu0
        %1492 = vdwg.mxu0
        %v1509 = vunpack.c.l.b16 %v682
        %v1510 = vunpack.c.l.b16 %v683
        %v1511 = vunpack.c.l.b16 %v684
        %v1512 = vunpack.c.l.b16 %v685
        %v1513 = vunpack.c.l.b16 %v686
        %v1514 = vunpack.c.l.b16 %v687
        %v1515 = vunpack.c.l.b16 %v688
        %v1516 = vunpack.c.l.b16 %v689
        %v1517 = vunpack.c.l.b16 %v690
        %v1518 = vunpack.c.l.b16 %v691
        %v1519 = vunpack.c.l.b16 %v692
        %v1520 = vunpack.c.l.b16 %v693
        %v1521 = vunpack.c.l.b16 %v694
        %v1522 = vunpack.c.l.b16 %v695
        %v1523 = vunpack.c.l.b16 %v696
        %v1524 = vunpack.c.l.b16 %v697
        %v1525 = vpack.c.b16 %v1510, %v1509
        %v1526 = vpack.c.b16 %v1512, %v1511
        %v1527 = vpack.c.b16 %v1514, %v1513
        %v1528 = vpack.c.b16 %v1516, %v1515
        %v1529 = vpack.c.b16 %v1518, %v1517
        %v1530 = vpack.c.b16 %v1520, %v1519
        %v1531 = vpack.c.b16 %v1522, %v1521
        %v1532 = vpack.c.b16 %v1524, %v1523
        %1542 = vrot.lane.b32.xlu0 %v955, 96
        %v1543 = vpop.permute.xlu0 %1542
        %1545 = vmatprep.subr.bf16.mxu0 0
        %1546 = vmatpush1.bf16.msra.mxu0 %v1525
        %1547 = vmatprep.subr.bf16.mxu0 0
        %1548 = vmatpush1.bf16.msra.mxu0 %v1526
        %1549 = vmatprep.subr.bf16.mxu0 0
        %1550 = vmatpush1.bf16.msra.mxu0 %v1527
        %1551 = vmatprep.subr.bf16.mxu0 0
        %1552 = vmatpush1.bf16.msra.mxu0 %v1528
        %1553 = vmatprep.subr.bf16.mxu0 0
        %1554 = vmatpush1.bf16.msra.mxu0 %v1529
        %1555 = vmatprep.subr.bf16.mxu0 0
        %1556 = vmatpush1.bf16.msra.mxu0 %v1530
        %1557 = vmatprep.subr.bf16.mxu0 0
        %1558 = vmatpush1.bf16.msra.mxu0 %v1531
        %1559 = vmatprep.subr.bf16.mxu0 0
        %1560 = vmatpush1.bf16.msra.mxu0 %v1532
        %1561 = vmatprep.subr.bf16.mxu0 0
        %1562 = vmatpush1.bf16.msra.mxu0 0
        %1563 = vmatprep.subr.bf16.mxu0 0
        %1564 = vmatpush1.bf16.msra.mxu0 0
        %1565 = vmatprep.subr.bf16.mxu0 0
        %1566 = vmatpush1.bf16.msra.mxu0 0
        %1567 = vmatprep.subr.bf16.mxu0 0
        %1568 = vmatpush1.bf16.msra.mxu0 0
        %1569 = vmatprep.subr.bf16.mxu0 0
        %1570 = vmatpush1.bf16.msra.mxu0 0
        %1571 = vmatprep.subr.bf16.mxu0 0
        %1572 = vmatpush1.bf16.msra.mxu0 0
        %1573 = vmatprep.subr.bf16.mxu0 0
        %1574 = vmatpush1.bf16.msra.mxu0 0
        %1575 = vmatprep.subr.bf16.mxu0 0
        %1576 = vmatpush1.bf16.msra.mxu0 0
        %1577 = vmatprep.mubr.bf16.mxu0 0
        %1578 = vmatmul.mubr.bf16.gmra.mrb[0].mxu0 %v950
        %v1579 = vpop.f32.mrb[0].mxu0
        %v1580 = vadd.f32 %v1543, %v1579
        %v1581 = vpop.f32.mrb[0].mxu0
        %v1582 = vpop.f32.mrb[0].mxu0
        %v1583 = vadd.f32 %v1543, %v1582
        %v1584 = vpop.f32.mrb[0].mxu0
        %1585 = vmatprep.mubr.bf16.mxu0 0
        %1586 = vmatmul.mubr.bf16.gmra.mrb[0].mxu0 %v951
        %v1587 = vpop.f32.mrb[0].mxu0
        %v1588 = vadd.f32 %v1543, %v1587
        %v1589 = vpop.f32.mrb[0].mxu0
        %v1590 = vpop.f32.mrb[0].mxu0
        %v1591 = vadd.f32 %v1543, %v1590
        %v1592 = vpop.f32.mrb[0].mxu0
        %1593 = vdwg.mxu0
        %v1594 = vpack.c.bf16 %v1381, %v1378
        %v1595 = vpack.c.bf16 %v1389, %v1386
        %v1596 = vpack.c.bf16 %v1482, %v1479
        %v1597 = vpack.c.bf16 %v1490, %v1487
        %v1599 = vsel %vm1057, %v1594, 0
        %v1602 = vsel %vm1057, %v1596, 0
        %1604 = vmatprep.subr.bf16.mxu0 0
        %1605 = vmatpush1.bf16.xpose.msra.mxu0 %v1602
        %1606 = vmatprep.subr.bf16.mxu0 0
        %1607 = vmatpush1.bf16.xpose.msra.mxu0 0
        %1608 = vmatprep.subr.bf16.mxu0 0
        %1609 = vmatpush1.bf16.xpose.msra.mxu0 0
        %1610 = vmatprep.subr.bf16.mxu0 0
        %1611 = vmatpush1.bf16.xpose.msra.mxu0 0
        %1612 = vmatprep.subr.bf16.mxu0 0
        %1613 = vmatpush1.bf16.xpose.msra.mxu0 0
        %1614 = vmatprep.subr.bf16.mxu0 0
        %1615 = vmatpush1.bf16.xpose.msra.mxu0 0
        %1616 = vmatprep.subr.bf16.mxu0 0
        %1617 = vmatpush1.bf16.xpose.msra.mxu0 0
        %1618 = vmatprep.subr.bf16.mxu0 0
        %1619 = vmatpush1.bf16.xpose.msra.mxu0 0
        %1620 = vmatprep.subr.bf16.mxu0 0
        %1621 = vmatpush1.bf16.xpose.msra.mxu0 0
        %1622 = vmatprep.subr.bf16.mxu0 0
        %1623 = vmatpush1.bf16.xpose.msra.mxu0 0
        %1624 = vmatprep.subr.bf16.mxu0 0
        %1625 = vmatpush1.bf16.xpose.msra.mxu0 0
        %1626 = vmatprep.subr.bf16.mxu0 0
        %1627 = vmatpush1.bf16.xpose.msra.mxu0 0
        %1628 = vmatprep.subr.bf16.mxu0 0
        %1629 = vmatpush1.bf16.xpose.msra.mxu0 0
        %1630 = vmatprep.subr.bf16.mxu0 0
        %1631 = vmatpush1.bf16.xpose.msra.mxu0 0
        %1632 = vmatprep.subr.bf16.mxu0 0
        %1633 = vmatpush1.bf16.xpose.msra.mxu0 0
        %1634 = vmatprep.subr.bf16.mxu0 0
        %1635 = vmatpush1.bf16.xpose.msra.mxu0 0
        %1636 = vmatprep.mubr.bf16.mxu0 0
        %1637 = vmatmul.mubr.bf16.gmra.mrb[0].mxu0 %v1599
        %v1638 = vpop.f32.mrb[0].mxu0
        %v1639 = vadd.f32 0.0, %v1638
        %v1640 = vpop.f32.mrb[0].mxu0
        %v1641 = vpop.f32.mrb[0].mxu0
        %v1642 = vadd.f32 0.0, %v1641
        %v1643 = vpop.f32.mrb[0].mxu0
        %1644 = vdwg.mxu0
        %v1646 = vsel %vm1057, %v1595, 0
        %v1649 = vsel %vm1057, %v1597, 0
        %1651 = vmatprep.subr.bf16.mxu0 0
        %1652 = vmatpush1.bf16.xpose.msra.mxu0 %v1649
        %1653 = vmatprep.subr.bf16.mxu0 0
        %1654 = vmatpush1.bf16.xpose.msra.mxu0 0
        %1655 = vmatprep.subr.bf16.mxu0 0
        %1656 = vmatpush1.bf16.xpose.msra.mxu0 0
        %1657 = vmatprep.subr.bf16.mxu0 0
        %1658 = vmatpush1.bf16.xpose.msra.mxu0 0
        %1659 = vmatprep.subr.bf16.mxu0 0
        %1660 = vmatpush1.bf16.xpose.msra.mxu0 0
        %1661 = vmatprep.subr.bf16.mxu0 0
        %1662 = vmatpush1.bf16.xpose.msra.mxu0 0
        %1663 = vmatprep.subr.bf16.mxu0 0
        %1664 = vmatpush1.bf16.xpose.msra.mxu0 0
        %1665 = vmatprep.subr.bf16.mxu0 0
        %1666 = vmatpush1.bf16.xpose.msra.mxu0 0
        %1667 = vmatprep.subr.bf16.mxu0 0
        %1668 = vmatpush1.bf16.xpose.msra.mxu0 0
        %1669 = vmatprep.subr.bf16.mxu0 0
        %1670 = vmatpush1.bf16.xpose.msra.mxu0 0
        %1671 = vmatprep.subr.bf16.mxu0 0
        %1672 = vmatpush1.bf16.xpose.msra.mxu0 0
        %1673 = vmatprep.subr.bf16.mxu0 0
        %1674 = vmatpush1.bf16.xpose.msra.mxu0 0
        %1675 = vmatprep.subr.bf16.mxu0 0
        %1676 = vmatpush1.bf16.xpose.msra.mxu0 0
        %1677 = vmatprep.subr.bf16.mxu0 0
        %1678 = vmatpush1.bf16.xpose.msra.mxu0 0
        %1679 = vmatprep.subr.bf16.mxu0 0
        %1680 = vmatpush1.bf16.xpose.msra.mxu0 0
        %1681 = vmatprep.subr.bf16.mxu0 0
        %1682 = vmatpush1.bf16.xpose.msra.mxu0 0
        %1683 = vmatprep.mubr.bf16.mxu0 0
        %1684 = vmatmul.mubr.bf16.gmra.mrb[0].mxu0 %v1646
        %v1685 = vpop.f32.mrb[0].mxu0
        %v1686 = vadd.f32 0.0, %v1685
        %v1687 = vpop.f32.mrb[0].mxu0
        %v1688 = vpop.f32.mrb[0].mxu0
        %v1689 = vadd.f32 0.0, %v1688
        %v1690 = vpop.f32.mrb[0].mxu0
        %1691 = vdwg.mxu0
        %v1692 = vsel %vm1152, %v1639, -inf
        %1693 = vmax.xlane.f32.xlu0 %v1692
        %v1694 = vpop.xlane.xlu0 %1693
        %v1695 = vsel %vm1152, %v1642, -inf
        %1696 = vmax.xlane.f32.xlu0 %v1695
        %v1697 = vpop.xlane.xlu0 %1696
        %v1698 = vsel %vm1152, %v1686, -inf
        %1699 = vmax.xlane.f32.xlu0 %v1698
        %v1700 = vpop.xlane.xlu0 %1699
        %v1701 = vsel %vm1152, %v1689, -inf
        %1702 = vmax.xlane.f32.xlu0 %v1701
        %v1703 = vpop.xlane.xlu0 %1702
        %v1704 = vsub.f32 %v1639, %v1694
        %v1705 = vsub.f32 %v1642, %v1697
        %v1706 = vsub.f32 %v1686, %v1700
        %v1707 = vsub.f32 %v1689, %v1703
        %v1708 = vmul.f32 %v1704, 1.442695
        %v1709 = vpow.pop %v1708
        %v1710 = vmul.f32 %v1705, 1.442695
        %v1711 = vpow.pop %v1710
        %v1712 = vmul.f32 %v1706, 1.442695
        %v1713 = vpow.pop %v1712
        %v1714 = vmul.f32 %v1707, 1.442695
        %v1715 = vpow.pop %v1714
        %v1716 = vsel %vm1152, %v1709, 0.0
        %1717 = vadd.xlane.f32.xlu0 %v1716
        %v1718 = vpop.xlane.xlu0 %1717
        %v1719 = vsel %vm1152, %v1711, 0.0
        %1720 = vadd.xlane.f32.xlu0 %v1719
        %v1721 = vpop.xlane.xlu0 %1720
        %v1722 = vsel %vm1152, %v1713, 0.0
        %1723 = vadd.xlane.f32.xlu0 %v1722
        %v1724 = vpop.xlane.xlu0 %1723
        %v1725 = vsel %vm1152, %v1715, 0.0
        %1726 = vadd.xlane.f32.xlu0 %v1725
        %v1727 = vpop.xlane.xlu0 %1726
        %v1728 = vrcp.pop %v1718
        %v1729 = vrcp.pop %v1721
        %v1730 = vrcp.pop %v1724
        %v1731 = vrcp.pop %v1727
        %v1732 = vmul.f32 %v1709, %v1728
        %v1733 = vmul.f32 %v1711, %v1729
        %v1734 = vmul.f32 %v1713, %v1730
        %v1735 = vmul.f32 %v1715, %v1731
        %v1736 = vpack.c.bf16 %v1733, %v1732
        %v1737 = vpack.c.bf16 %v1735, %v1734
        %v1738 = vpack.c.bf16 %v1583, %v1580
        %v1739 = vpack.c.bf16 %v1591, %v1588
        %v1741 = vsel %vm1152, %v1736, 0
        %1743 = vmatprep.subr.bf16.mxu0 0
        %1744 = vmatpush1.bf16.msra.mxu0 %v1738
        %1745 = vmatprep.subr.bf16.mxu0 0
        %1746 = vmatpush1.bf16.msra.mxu0 0
        %1747 = vmatprep.subr.bf16.mxu0 0
        %1748 = vmatpush1.bf16.msra.mxu0 0
        %1749 = vmatprep.subr.bf16.mxu0 0
        %1750 = vmatpush1.bf16.msra.mxu0 0
        %1751 = vmatprep.subr.bf16.mxu0 0
        %1752 = vmatpush1.bf16.msra.mxu0 0
        %1753 = vmatprep.subr.bf16.mxu0 0
        %1754 = vmatpush1.bf16.msra.mxu0 0
        %1755 = vmatprep.subr.bf16.mxu0 0
        %1756 = vmatpush1.bf16.msra.mxu0 0
        %1757 = vmatprep.subr.bf16.mxu0 0
        %1758 = vmatpush1.bf16.msra.mxu0 0
        %1759 = vmatprep.subr.bf16.mxu0 0
        %1760 = vmatpush1.bf16.msra.mxu0 0
        %1761 = vmatprep.subr.bf16.mxu0 0
        %1762 = vmatpush1.bf16.msra.mxu0 0
        %1763 = vmatprep.subr.bf16.mxu0 0
        %1764 = vmatpush1.bf16.msra.mxu0 0
        %1765 = vmatprep.subr.bf16.mxu0 0
        %1766 = vmatpush1.bf16.msra.mxu0 0
        %1767 = vmatprep.subr.bf16.mxu0 0
        %1768 = vmatpush1.bf16.msra.mxu0 0
        %1769 = vmatprep.subr.bf16.mxu0 0
        %1770 = vmatpush1.bf16.msra.mxu0 0
        %1771 = vmatprep.subr.bf16.mxu0 0
        %1772 = vmatpush1.bf16.msra.mxu0 0
        %1773 = vmatprep.subr.bf16.mxu0 0
        %1774 = vmatpush1.bf16.msra.mxu0 0
        %1775 = vmatprep.mubr.bf16.mxu0 0
        %1776 = vmatmul.mubr.bf16.gmra.mrb[0].mxu0 %v1741
        %v1777 = vpop.f32.mrb[0].mxu0
        %v1778 = vadd.f32 0.0, %v1777
        %v1779 = vpop.f32.mrb[0].mxu0
        %v1780 = vpop.f32.mrb[0].mxu0
        %v1781 = vadd.f32 0.0, %v1780
        %v1782 = vpop.f32.mrb[0].mxu0
        %1783 = vdwg.mxu0
        %v1785 = vsel %vm1152, %v1737, 0
        %1787 = vmatprep.subr.bf16.mxu0 0
        %1788 = vmatpush1.bf16.msra.mxu0 %v1739
        %1789 = vmatprep.subr.bf16.mxu0 0
        %1790 = vmatpush1.bf16.msra.mxu0 0
        %1791 = vmatprep.subr.bf16.mxu0 0
        %1792 = vmatpush1.bf16.msra.mxu0 0
        %1793 = vmatprep.subr.bf16.mxu0 0
        %1794 = vmatpush1.bf16.msra.mxu0 0
        %1795 = vmatprep.subr.bf16.mxu0 0
        %1796 = vmatpush1.bf16.msra.mxu0 0
        %1797 = vmatprep.subr.bf16.mxu0 0
        %1798 = vmatpush1.bf16.msra.mxu0 0
        %1799 = vmatprep.subr.bf16.mxu0 0
        %1800 = vmatpush1.bf16.msra.mxu0 0
        %1801 = vmatprep.subr.bf16.mxu0 0
        %1802 = vmatpush1.bf16.msra.mxu0 0
        %1803 = vmatprep.subr.bf16.mxu0 0
        %1804 = vmatpush1.bf16.msra.mxu0 0
        %1805 = vmatprep.subr.bf16.mxu0 0
        %1806 = vmatpush1.bf16.msra.mxu0 0
        %1807 = vmatprep.subr.bf16.mxu0 0
        %1808 = vmatpush1.bf16.msra.mxu0 0
        %1809 = vmatprep.subr.bf16.mxu0 0
        %1810 = vmatpush1.bf16.msra.mxu0 0
        %1811 = vmatprep.subr.bf16.mxu0 0
        %1812 = vmatpush1.bf16.msra.mxu0 0
        %1813 = vmatprep.subr.bf16.mxu0 0
        %1814 = vmatpush1.bf16.msra.mxu0 0
        %1815 = vmatprep.subr.bf16.mxu0 0
        %1816 = vmatpush1.bf16.msra.mxu0 0
        %1817 = vmatprep.subr.bf16.mxu0 0
        %1818 = vmatpush1.bf16.msra.mxu0 0
        %1819 = vmatprep.mubr.bf16.mxu0 0
        %1820 = vmatmul.mubr.bf16.gmra.mrb[0].mxu0 %v1785
        %v1821 = vpop.f32.mrb[0].mxu0
        %v1822 = vadd.f32 0.0, %v1821
        %v1823 = vpop.f32.mrb[0].mxu0
        %v1824 = vpop.f32.mrb[0].mxu0
        %v1825 = vadd.f32 0.0, %v1824
        %v1826 = vpop.f32.mrb[0].mxu0
        %1827 = vdwg.mxu0
        %v1828 = vpack.c.bf16 %v1781, %v1778
        %v1829 = vpack.c.bf16 %v1825, %v1822
        %v1834 = vunpack.c.l.b16 %v734
        %v1835 = vunpack.c.l.b16 %v735
        %v1836 = vunpack.c.l.b16 %v736
        %v1837 = vunpack.c.l.b16 %v737
        %v1838 = vpack.c.b16 %v1835, %v1834
        %v1839 = vpack.c.b16 %v1837, %v1836
        %v1843 = vsel %vm1057, %v1828, 0
        %v1846 = vsel %vm1057, %v1829, 0
        %1848 = vmatprep.subr.bf16.mxu0 0
        %1849 = vmatpush1.bf16.msra.mxu0 %v1838
        %1850 = vmatprep.subr.bf16.mxu0 0
        %1851 = vmatpush1.bf16.msra.mxu0 %v1839
        %1852 = vmatprep.subr.bf16.mxu0 0
        %1853 = vmatpush1.bf16.msra.mxu0 0
        %1854 = vmatprep.subr.bf16.mxu0 0
        %1855 = vmatpush1.bf16.msra.mxu0 0
        %1856 = vmatprep.subr.bf16.mxu0 0
        %1857 = vmatpush1.bf16.msra.mxu0 0
        %1858 = vmatprep.subr.bf16.mxu0 0
        %1859 = vmatpush1.bf16.msra.mxu0 0
        %1860 = vmatprep.subr.bf16.mxu0 0
        %1861 = vmatpush1.bf16.msra.mxu0 0
        %1862 = vmatprep.subr.bf16.mxu0 0
        %1863 = vmatpush1.bf16.msra.mxu0 0
        %1864 = vmatprep.subr.bf16.mxu0 0
        %1865 = vmatpush1.bf16.msra.mxu0 0
        %1866 = vmatprep.subr.bf16.mxu0 0
        %1867 = vmatpush1.bf16.msra.mxu0 0
        %1868 = vmatprep.subr.bf16.mxu0 0
        %1869 = vmatpush1.bf16.msra.mxu0 0
        %1870 = vmatprep.subr.bf16.mxu0 0
        %1871 = vmatpush1.bf16.msra.mxu0 0
        %1872 = vmatprep.subr.bf16.mxu0 0
        %1873 = vmatpush1.bf16.msra.mxu0 0
        %1874 = vmatprep.subr.bf16.mxu0 0
        %1875 = vmatpush1.bf16.msra.mxu0 0
        %1876 = vmatprep.subr.bf16.mxu0 0
        %1877 = vmatpush1.bf16.msra.mxu0 0
        %1878 = vmatprep.subr.bf16.mxu0 0
        %1879 = vmatpush1.bf16.msra.mxu0 0
        %1880 = vmatprep.mubr.bf16.mxu0 0
        %1881 = vmatmul.mubr.bf16.gmra.mrb[0].mxu0 %v1843
        %v1882 = vpop.f32.mrb[0].mxu0
        %v1883 = vadd.f32 0.0, %v1882
        %v1884 = vpop.f32.mrb[0].mxu0
        %v1885 = vpop.f32.mrb[0].mxu0
        %v1886 = vadd.f32 0.0, %v1885
        %v1887 = vpop.f32.mrb[0].mxu0
        %1888 = vmatprep.mubr.bf16.mxu0 0
        %1889 = vmatmul.mubr.bf16.gmra.mrb[0].mxu0 %v1846
        %v1890 = vpop.f32.mrb[0].mxu0
        %v1891 = vadd.f32 0.0, %v1890
        %v1892 = vpop.f32.mrb[0].mxu0
        %v1893 = vpop.f32.mrb[0].mxu0
        %v1894 = vadd.f32 0.0, %v1893
        %v1895 = vpop.f32.mrb[0].mxu0
        %1896 = vdwg.mxu0
        %v1901 = vunpack.c.l.b16 %v730
        %v1902 = vunpack.c.l.b16 %v731
        %v1903 = vunpack.c.l.b16 %v732
        %v1904 = vunpack.c.l.b16 %v733
        %v1905 = vpack.c.b16 %v1902, %v1901
        %v1906 = vpack.c.b16 %v1904, %v1903
        %v1910 = vsel %vm1057, %v1289, 0
        %v1913 = vsel %vm1057, %v1290, 0
        %1915 = vmatprep.subr.bf16.mxu0 0
        %1916 = vmatpush1.bf16.msra.mxu0 %v1905
        %1917 = vmatprep.subr.bf16.mxu0 0
        %1918 = vmatpush1.bf16.msra.mxu0 %v1906
        %1919 = vmatprep.subr.bf16.mxu0 0
        %1920 = vmatpush1.bf16.msra.mxu0 0
        %1921 = vmatprep.subr.bf16.mxu0 0
        %1922 = vmatpush1.bf16.msra.mxu0 0
        %1923 = vmatprep.subr.bf16.mxu0 0
        %1924 = vmatpush1.bf16.msra.mxu0 0
        %1925 = vmatprep.subr.bf16.mxu0 0
        %1926 = vmatpush1.bf16.msra.mxu0 0
        %1927 = vmatprep.subr.bf16.mxu0 0
        %1928 = vmatpush1.bf16.msra.mxu0 0
        %1929 = vmatprep.subr.bf16.mxu0 0
        %1930 = vmatpush1.bf16.msra.mxu0 0
        %1931 = vmatprep.subr.bf16.mxu0 0
        %1932 = vmatpush1.bf16.msra.mxu0 0
        %1933 = vmatprep.subr.bf16.mxu0 0
        %1934 = vmatpush1.bf16.msra.mxu0 0
        %1935 = vmatprep.subr.bf16.mxu0 0
        %1936 = vmatpush1.bf16.msra.mxu0 0
        %1937 = vmatprep.subr.bf16.mxu0 0
        %1938 = vmatpush1.bf16.msra.mxu0 0
        %1939 = vmatprep.subr.bf16.mxu0 0
        %1940 = vmatpush1.bf16.msra.mxu0 0
        %1941 = vmatprep.subr.bf16.mxu0 0
        %1942 = vmatpush1.bf16.msra.mxu0 0
        %1943 = vmatprep.subr.bf16.mxu0 0
        %1944 = vmatpush1.bf16.msra.mxu0 0
        %1945 = vmatprep.subr.bf16.mxu0 0
        %1946 = vmatpush1.bf16.msra.mxu0 0
        %1947 = vmatprep.mubr.bf16.mxu0 0
        %1948 = vmatmul.mubr.bf16.gmra.mrb[0].mxu0 %v1910
        %v1949 = vpop.f32.mrb[0].mxu0
        %v1950 = vadd.f32 %v1883, %v1949
        %v1951 = vpop.f32.mrb[0].mxu0
        %v1952 = vpop.f32.mrb[0].mxu0
        %v1953 = vadd.f32 %v1886, %v1952
        %v1954 = vpop.f32.mrb[0].mxu0
        %1955 = vmatprep.mubr.bf16.mxu0 0
        %1956 = vmatmul.mubr.bf16.gmra.mrb[0].mxu0 %v1913
        %v1957 = vpop.f32.mrb[0].mxu0
        %v1958 = vadd.f32 %v1891, %v1957
        %v1959 = vpop.f32.mrb[0].mxu0
        %v1960 = vpop.f32.mrb[0].mxu0
        %v1961 = vadd.f32 %v1894, %v1960
        %v1962 = vpop.f32.mrb[0].mxu0
        %1963 = vdwg.mxu0
        %v1980 = vunpack.c.l.b16 %v570
        %v1981 = vunpack.c.l.b16 %v571
        %v1982 = vunpack.c.l.b16 %v572
        %v1983 = vunpack.c.l.b16 %v573
        %v1984 = vunpack.c.l.b16 %v574
        %v1985 = vunpack.c.l.b16 %v575
        %v1986 = vunpack.c.l.b16 %v576
        %v1987 = vunpack.c.l.b16 %v577
        %v1988 = vunpack.c.l.b16 %v578
        %v1989 = vunpack.c.l.b16 %v579
        %v1990 = vunpack.c.l.b16 %v580
        %v1991 = vunpack.c.l.b16 %v581
        %v1992 = vunpack.c.l.b16 %v582
        %v1993 = vunpack.c.l.b16 %v583
        %v1994 = vunpack.c.l.b16 %v584
        %v1995 = vunpack.c.l.b16 %v585
        %v1996 = vpack.c.b16 %v1981, %v1980
        %v1997 = vpack.c.b16 %v1983, %v1982
        %v1998 = vpack.c.b16 %v1985, %v1984
        %v1999 = vpack.c.b16 %v1987, %v1986
        %v2000 = vpack.c.b16 %v1989, %v1988
        %v2001 = vpack.c.b16 %v1991, %v1990
        %v2002 = vpack.c.b16 %v1993, %v1992
        %v2003 = vpack.c.b16 %v1995, %v1994
        %2012 = vrot.lane.b32.xlu0 %v751, 64
        %v2013 = vpop.permute.xlu0 %2012
        %2015 = vmatprep.subr.bf16.mxu0 0
        %2016 = vmatpush1.bf16.msra.mxu0 %v1996
        %2017 = vmatprep.subr.bf16.mxu0 0
        %2018 = vmatpush1.bf16.msra.mxu0 %v1997
        %2019 = vmatprep.subr.bf16.mxu0 0
        %2020 = vmatpush1.bf16.msra.mxu0 %v1998
        %2021 = vmatprep.subr.bf16.mxu0 0
        %2022 = vmatpush1.bf16.msra.mxu0 %v1999
        %2023 = vmatprep.subr.bf16.mxu0 0
        %2024 = vmatpush1.bf16.msra.mxu0 %v2000
        %2025 = vmatprep.subr.bf16.mxu0 0
        %2026 = vmatpush1.bf16.msra.mxu0 %v2001
        %2027 = vmatprep.subr.bf16.mxu0 0
        %2028 = vmatpush1.bf16.msra.mxu0 %v2002
        %2029 = vmatprep.subr.bf16.mxu0 0
        %2030 = vmatpush1.bf16.msra.mxu0 %v2003
        %2031 = vmatprep.subr.bf16.mxu0 0
        %2032 = vmatpush1.bf16.msra.mxu0 0
        %2033 = vmatprep.subr.bf16.mxu0 0
        %2034 = vmatpush1.bf16.msra.mxu0 0
        %2035 = vmatprep.subr.bf16.mxu0 0
        %2036 = vmatpush1.bf16.msra.mxu0 0
        %2037 = vmatprep.subr.bf16.mxu0 0
        %2038 = vmatpush1.bf16.msra.mxu0 0
        %2039 = vmatprep.subr.bf16.mxu0 0
        %2040 = vmatpush1.bf16.msra.mxu0 0
        %2041 = vmatprep.subr.bf16.mxu0 0
        %2042 = vmatpush1.bf16.msra.mxu0 0
        %2043 = vmatprep.subr.bf16.mxu0 0
        %2044 = vmatpush1.bf16.msra.mxu0 0
        %2045 = vmatprep.subr.bf16.mxu0 0
        %2046 = vmatpush1.bf16.msra.mxu0 0
        %2047 = vmatprep.mubr.bf16.mxu0 0
        %2048 = vmatmul.mubr.bf16.gmra.mrb[0].mxu0 %v746
        %v2049 = vpop.f32.mrb[0].mxu0
        %v2050 = vadd.f32 %v2013, %v2049
        %v2051 = vpop.f32.mrb[0].mxu0
        %v2052 = vpop.f32.mrb[0].mxu0
        %v2053 = vadd.f32 %v2013, %v2052
        %v2054 = vpop.f32.mrb[0].mxu0
        %2055 = vmatprep.mubr.bf16.mxu0 0
        %2056 = vmatmul.mubr.bf16.gmra.mrb[0].mxu0 %v747
        %v2057 = vpop.f32.mrb[0].mxu0
        %v2058 = vadd.f32 %v2013, %v2057
        %v2059 = vpop.f32.mrb[0].mxu0
        %v2060 = vpop.f32.mrb[0].mxu0
        %v2061 = vadd.f32 %v2013, %v2060
        %v2062 = vpop.f32.mrb[0].mxu0
        %2063 = vdwg.mxu0
        %v2080 = vunpack.c.l.b16 %v634
        %v2081 = vunpack.c.l.b16 %v635
        %v2082 = vunpack.c.l.b16 %v636
        %v2083 = vunpack.c.l.b16 %v637
        %v2084 = vunpack.c.l.b16 %v638
        %v2085 = vunpack.c.l.b16 %v639
        %v2086 = vunpack.c.l.b16 %v640
        %v2087 = vunpack.c.l.b16 %v641
        %v2088 = vunpack.c.l.b16 %v642
        %v2089 = vunpack.c.l.b16 %v643
        %v2090 = vunpack.c.l.b16 %v644
        %v2091 = vunpack.c.l.b16 %v645
        %v2092 = vunpack.c.l.b16 %v646
        %v2093 = vunpack.c.l.b16 %v647
        %v2094 = vunpack.c.l.b16 %v648
        %v2095 = vunpack.c.l.b16 %v649
        %v2096 = vpack.c.b16 %v2081, %v2080
        %v2097 = vpack.c.b16 %v2083, %v2082
        %v2098 = vpack.c.b16 %v2085, %v2084
        %v2099 = vpack.c.b16 %v2087, %v2086
        %v2100 = vpack.c.b16 %v2089, %v2088
        %v2101 = vpack.c.b16 %v2091, %v2090
        %v2102 = vpack.c.b16 %v2093, %v2092
        %v2103 = vpack.c.b16 %v2095, %v2094
        %2112 = vrot.lane.b32.xlu0 %v852, 64
        %v2113 = vpop.permute.xlu0 %2112
        %2115 = vmatprep.subr.bf16.mxu0 0
        %2116 = vmatpush1.bf16.msra.mxu0 %v2096
        %2117 = vmatprep.subr.bf16.mxu0 0
        %2118 = vmatpush1.bf16.msra.mxu0 %v2097
        %2119 = vmatprep.subr.bf16.mxu0 0
        %2120 = vmatpush1.bf16.msra.mxu0 %v2098
        %2121 = vmatprep.subr.bf16.mxu0 0
        %2122 = vmatpush1.bf16.msra.mxu0 %v2099
        %2123 = vmatprep.subr.bf16.mxu0 0
        %2124 = vmatpush1.bf16.msra.mxu0 %v2100
        %2125 = vmatprep.subr.bf16.mxu0 0
        %2126 = vmatpush1.bf16.msra.mxu0 %v2101
        %2127 = vmatprep.subr.bf16.mxu0 0
        %2128 = vmatpush1.bf16.msra.mxu0 %v2102
        %2129 = vmatprep.subr.bf16.mxu0 0
        %2130 = vmatpush1.bf16.msra.mxu0 %v2103
        %2131 = vmatprep.subr.bf16.mxu0 0
        %2132 = vmatpush1.bf16.msra.mxu0 0
        %2133 = vmatprep.subr.bf16.mxu0 0
        %2134 = vmatpush1.bf16.msra.mxu0 0
        %2135 = vmatprep.subr.bf16.mxu0 0
        %2136 = vmatpush1.bf16.msra.mxu0 0
        %2137 = vmatprep.subr.bf16.mxu0 0
        %2138 = vmatpush1.bf16.msra.mxu0 0
        %2139 = vmatprep.subr.bf16.mxu0 0
        %2140 = vmatpush1.bf16.msra.mxu0 0
        %2141 = vmatprep.subr.bf16.mxu0 0
        %2142 = vmatpush1.bf16.msra.mxu0 0
        %2143 = vmatprep.subr.bf16.mxu0 0
        %2144 = vmatpush1.bf16.msra.mxu0 0
        %2145 = vmatprep.subr.bf16.mxu0 0
        %2146 = vmatpush1.bf16.msra.mxu0 0
        %2147 = vmatprep.mubr.bf16.mxu0 0
        %2148 = vmatmul.mubr.bf16.gmra.mrb[0].mxu0 %v746
        %v2149 = vpop.f32.mrb[0].mxu0
        %v2150 = vadd.f32 %v2113, %v2149
        %v2151 = vpop.f32.mrb[0].mxu0
        %v2152 = vpop.f32.mrb[0].mxu0
        %v2153 = vadd.f32 %v2113, %v2152
        %v2154 = vpop.f32.mrb[0].mxu0
        %2155 = vmatprep.mubr.bf16.mxu0 0
        %2156 = vmatmul.mubr.bf16.gmra.mrb[0].mxu0 %v747
        %v2157 = vpop.f32.mrb[0].mxu0
        %v2158 = vadd.f32 %v2113, %v2157
        %v2159 = vpop.f32.mrb[0].mxu0
        %v2160 = vpop.f32.mrb[0].mxu0
        %v2161 = vadd.f32 %v2113, %v2160
        %v2162 = vpop.f32.mrb[0].mxu0
        %2163 = vdwg.mxu0
        %v2180 = vunpack.c.l.b16 %v698
        %v2181 = vunpack.c.l.b16 %v699
        %v2182 = vunpack.c.l.b16 %v700
        %v2183 = vunpack.c.l.b16 %v701
        %v2184 = vunpack.c.l.b16 %v702
        %v2185 = vunpack.c.l.b16 %v703
        %v2186 = vunpack.c.l.b16 %v704
        %v2187 = vunpack.c.l.b16 %v705
        %v2188 = vunpack.c.l.b16 %v706
        %v2189 = vunpack.c.l.b16 %v707
        %v2190 = vunpack.c.l.b16 %v708
        %v2191 = vunpack.c.l.b16 %v709
        %v2192 = vunpack.c.l.b16 %v710
        %v2193 = vunpack.c.l.b16 %v711
        %v2194 = vunpack.c.l.b16 %v712
        %v2195 = vunpack.c.l.b16 %v713
        %v2196 = vpack.c.b16 %v2181, %v2180
        %v2197 = vpack.c.b16 %v2183, %v2182
        %v2198 = vpack.c.b16 %v2185, %v2184
        %v2199 = vpack.c.b16 %v2187, %v2186
        %v2200 = vpack.c.b16 %v2189, %v2188
        %v2201 = vpack.c.b16 %v2191, %v2190
        %v2202 = vpack.c.b16 %v2193, %v2192
        %v2203 = vpack.c.b16 %v2195, %v2194
        %2212 = vrot.lane.b32.xlu0 %v955, 64
        %v2213 = vpop.permute.xlu0 %2212
        %2215 = vmatprep.subr.bf16.mxu0 0
        %2216 = vmatpush1.bf16.msra.mxu0 %v2196
        %2217 = vmatprep.subr.bf16.mxu0 0
        %2218 = vmatpush1.bf16.msra.mxu0 %v2197
        %2219 = vmatprep.subr.bf16.mxu0 0
        %2220 = vmatpush1.bf16.msra.mxu0 %v2198
        %2221 = vmatprep.subr.bf16.mxu0 0
        %2222 = vmatpush1.bf16.msra.mxu0 %v2199
        %2223 = vmatprep.subr.bf16.mxu0 0
        %2224 = vmatpush1.bf16.msra.mxu0 %v2200
        %2225 = vmatprep.subr.bf16.mxu0 0
        %2226 = vmatpush1.bf16.msra.mxu0 %v2201
        %2227 = vmatprep.subr.bf16.mxu0 0
        %2228 = vmatpush1.bf16.msra.mxu0 %v2202
        %2229 = vmatprep.subr.bf16.mxu0 0
        %2230 = vmatpush1.bf16.msra.mxu0 %v2203
        %2231 = vmatprep.subr.bf16.mxu0 0
        %2232 = vmatpush1.bf16.msra.mxu0 0
        %2233 = vmatprep.subr.bf16.mxu0 0
        %2234 = vmatpush1.bf16.msra.mxu0 0
        %2235 = vmatprep.subr.bf16.mxu0 0
        %2236 = vmatpush1.bf16.msra.mxu0 0
        %2237 = vmatprep.subr.bf16.mxu0 0
        %2238 = vmatpush1.bf16.msra.mxu0 0
        %2239 = vmatprep.subr.bf16.mxu0 0
        %2240 = vmatpush1.bf16.msra.mxu0 0
        %2241 = vmatprep.subr.bf16.mxu0 0
        %2242 = vmatpush1.bf16.msra.mxu0 0
        %2243 = vmatprep.subr.bf16.mxu0 0
        %2244 = vmatpush1.bf16.msra.mxu0 0
        %2245 = vmatprep.subr.bf16.mxu0 0
        %2246 = vmatpush1.bf16.msra.mxu0 0
        %2247 = vmatprep.mubr.bf16.mxu0 0
        %2248 = vmatmul.mubr.bf16.gmra.mrb[0].mxu0 %v950
        %v2249 = vpop.f32.mrb[0].mxu0
        %v2250 = vadd.f32 %v2213, %v2249
        %v2251 = vpop.f32.mrb[0].mxu0
        %v2252 = vpop.f32.mrb[0].mxu0
        %v2253 = vadd.f32 %v2213, %v2252
        %v2254 = vpop.f32.mrb[0].mxu0
        %2255 = vmatprep.mubr.bf16.mxu0 0
        %2256 = vmatmul.mubr.bf16.gmra.mrb[0].mxu0 %v951
        %v2257 = vpop.f32.mrb[0].mxu0
        %v2258 = vadd.f32 %v2213, %v2257
        %v2259 = vpop.f32.mrb[0].mxu0
        %v2260 = vpop.f32.mrb[0].mxu0
        %v2261 = vadd.f32 %v2213, %v2260
        %v2262 = vpop.f32.mrb[0].mxu0
        %2263 = vdwg.mxu0
        %v2264 = vpack.c.bf16 %v2053, %v2050
        %v2265 = vpack.c.bf16 %v2061, %v2058
        %v2266 = vpack.c.bf16 %v2153, %v2150
        %v2267 = vpack.c.bf16 %v2161, %v2158
        %v2269 = vsel %vm1057, %v2264, 0
        %v2272 = vsel %vm1057, %v2266, 0
        %2274 = vmatprep.subr.bf16.mxu0 0
        %2275 = vmatpush1.bf16.xpose.msra.mxu0 %v2272
        %2276 = vmatprep.subr.bf16.mxu0 0
        %2277 = vmatpush1.bf16.xpose.msra.mxu0 0
        %2278 = vmatprep.subr.bf16.mxu0 0
        %2279 = vmatpush1.bf16.xpose.msra.mxu0 0
        %2280 = vmatprep.subr.bf16.mxu0 0
        %2281 = vmatpush1.bf16.xpose.msra.mxu0 0
        %2282 = vmatprep.subr.bf16.mxu0 0
        %2283 = vmatpush1.bf16.xpose.msra.mxu0 0
        %2284 = vmatprep.subr.bf16.mxu0 0
        %2285 = vmatpush1.bf16.xpose.msra.mxu0 0
        %2286 = vmatprep.subr.bf16.mxu0 0
        %2287 = vmatpush1.bf16.xpose.msra.mxu0 0
        %2288 = vmatprep.subr.bf16.mxu0 0
        %2289 = vmatpush1.bf16.xpose.msra.mxu0 0
        %2290 = vmatprep.subr.bf16.mxu0 0
        %2291 = vmatpush1.bf16.xpose.msra.mxu0 0
        %2292 = vmatprep.subr.bf16.mxu0 0
        %2293 = vmatpush1.bf16.xpose.msra.mxu0 0
        %2294 = vmatprep.subr.bf16.mxu0 0
        %2295 = vmatpush1.bf16.xpose.msra.mxu0 0
        %2296 = vmatprep.subr.bf16.mxu0 0
        %2297 = vmatpush1.bf16.xpose.msra.mxu0 0
        %2298 = vmatprep.subr.bf16.mxu0 0
        %2299 = vmatpush1.bf16.xpose.msra.mxu0 0
        %2300 = vmatprep.subr.bf16.mxu0 0
        %2301 = vmatpush1.bf16.xpose.msra.mxu0 0
        %2302 = vmatprep.subr.bf16.mxu0 0
        %2303 = vmatpush1.bf16.xpose.msra.mxu0 0
        %2304 = vmatprep.subr.bf16.mxu0 0
        %2305 = vmatpush1.bf16.xpose.msra.mxu0 0
        %2306 = vmatprep.mubr.bf16.mxu0 0
        %2307 = vmatmul.mubr.bf16.gmra.mrb[0].mxu0 %v2269
        %v2308 = vpop.f32.mrb[0].mxu0
        %v2309 = vadd.f32 0.0, %v2308
        %v2310 = vpop.f32.mrb[0].mxu0
        %v2311 = vpop.f32.mrb[0].mxu0
        %v2312 = vadd.f32 0.0, %v2311
        %v2313 = vpop.f32.mrb[0].mxu0
        %2314 = vdwg.mxu0
        %v2316 = vsel %vm1057, %v2265, 0
        %v2319 = vsel %vm1057, %v2267, 0
        %2321 = vmatprep.subr.bf16.mxu0 0
        %2322 = vmatpush1.bf16.xpose.msra.mxu0 %v2319
        %2323 = vmatprep.subr.bf16.mxu0 0
        %2324 = vmatpush1.bf16.xpose.msra.mxu0 0
        %2325 = vmatprep.subr.bf16.mxu0 0
        %2326 = vmatpush1.bf16.xpose.msra.mxu0 0
        %2327 = vmatprep.subr.bf16.mxu0 0
        %2328 = vmatpush1.bf16.xpose.msra.mxu0 0
        %2329 = vmatprep.subr.bf16.mxu0 0
        %2330 = vmatpush1.bf16.xpose.msra.mxu0 0
        %2331 = vmatprep.subr.bf16.mxu0 0
        %2332 = vmatpush1.bf16.xpose.msra.mxu0 0
        %2333 = vmatprep.subr.bf16.mxu0 0
        %2334 = vmatpush1.bf16.xpose.msra.mxu0 0
        %2335 = vmatprep.subr.bf16.mxu0 0
        %2336 = vmatpush1.bf16.xpose.msra.mxu0 0
        %2337 = vmatprep.subr.bf16.mxu0 0
        %2338 = vmatpush1.bf16.xpose.msra.mxu0 0
        %2339 = vmatprep.subr.bf16.mxu0 0
        %2340 = vmatpush1.bf16.xpose.msra.mxu0 0
        %2341 = vmatprep.subr.bf16.mxu0 0
        %2342 = vmatpush1.bf16.xpose.msra.mxu0 0
        %2343 = vmatprep.subr.bf16.mxu0 0
        %2344 = vmatpush1.bf16.xpose.msra.mxu0 0
        %2345 = vmatprep.subr.bf16.mxu0 0
        %2346 = vmatpush1.bf16.xpose.msra.mxu0 0
        %2347 = vmatprep.subr.bf16.mxu0 0
        %2348 = vmatpush1.bf16.xpose.msra.mxu0 0
        %2349 = vmatprep.subr.bf16.mxu0 0
        %2350 = vmatpush1.bf16.xpose.msra.mxu0 0
        %2351 = vmatprep.subr.bf16.mxu0 0
        %2352 = vmatpush1.bf16.xpose.msra.mxu0 0
        %2353 = vmatprep.mubr.bf16.mxu0 0
        %2354 = vmatmul.mubr.bf16.gmra.mrb[0].mxu0 %v2316
        %v2355 = vpop.f32.mrb[0].mxu0
        %v2356 = vadd.f32 0.0, %v2355
        %v2357 = vpop.f32.mrb[0].mxu0
        %v2358 = vpop.f32.mrb[0].mxu0
        %v2359 = vadd.f32 0.0, %v2358
        %v2360 = vpop.f32.mrb[0].mxu0
        %2361 = vdwg.mxu0
        %v2362 = vsel %vm1152, %v2309, -inf
        %2363 = vmax.xlane.f32.xlu0 %v2362
        %v2364 = vpop.xlane.xlu0 %2363
        %v2365 = vsel %vm1152, %v2312, -inf
        %2366 = vmax.xlane.f32.xlu0 %v2365
        %v2367 = vpop.xlane.xlu0 %2366
        %v2368 = vsel %vm1152, %v2356, -inf
        %2369 = vmax.xlane.f32.xlu0 %v2368
        %v2370 = vpop.xlane.xlu0 %2369
        %v2371 = vsel %vm1152, %v2359, -inf
        %2372 = vmax.xlane.f32.xlu0 %v2371
        %v2373 = vpop.xlane.xlu0 %2372
        %v2374 = vsub.f32 %v2309, %v2364
        %v2375 = vsub.f32 %v2312, %v2367
        %v2376 = vsub.f32 %v2356, %v2370
        %v2377 = vsub.f32 %v2359, %v2373
        %v2378 = vmul.f32 %v2374, 1.442695
        %v2379 = vpow.pop %v2378
        %v2380 = vmul.f32 %v2375, 1.442695
        %v2381 = vpow.pop %v2380
        %v2382 = vmul.f32 %v2376, 1.442695
        %v2383 = vpow.pop %v2382
        %v2384 = vmul.f32 %v2377, 1.442695
        %v2385 = vpow.pop %v2384
        %v2386 = vsel %vm1152, %v2379, 0.0
        %2387 = vadd.xlane.f32.xlu0 %v2386
        %v2388 = vpop.xlane.xlu0 %2387
        %v2389 = vsel %vm1152, %v2381, 0.0
        %2390 = vadd.xlane.f32.xlu0 %v2389
        %v2391 = vpop.xlane.xlu0 %2390
        %v2392 = vsel %vm1152, %v2383, 0.0
        %2393 = vadd.xlane.f32.xlu0 %v2392
        %v2394 = vpop.xlane.xlu0 %2393
        %v2395 = vsel %vm1152, %v2385, 0.0
        %2396 = vadd.xlane.f32.xlu0 %v2395
        %v2397 = vpop.xlane.xlu0 %2396
        %v2398 = vrcp.pop %v2388
        %v2399 = vrcp.pop %v2391
        %v2400 = vrcp.pop %v2394
        %v2401 = vrcp.pop %v2397
        %v2402 = vmul.f32 %v2379, %v2398
        %v2403 = vmul.f32 %v2381, %v2399
        %v2404 = vmul.f32 %v2383, %v2400
        %v2405 = vmul.f32 %v2385, %v2401
        %v2406 = vpack.c.bf16 %v2403, %v2402
        %v2407 = vpack.c.bf16 %v2405, %v2404
        %v2408 = vpack.c.bf16 %v2253, %v2250
        %v2409 = vpack.c.bf16 %v2261, %v2258
        %v2411 = vsel %vm1152, %v2406, 0
        %2413 = vmatprep.subr.bf16.mxu0 0
        %2414 = vmatpush1.bf16.msra.mxu0 %v2408
        %2415 = vmatprep.subr.bf16.mxu0 0
        %2416 = vmatpush1.bf16.msra.mxu0 0
        %2417 = vmatprep.subr.bf16.mxu0 0
        %2418 = vmatpush1.bf16.msra.mxu0 0
        %2419 = vmatprep.subr.bf16.mxu0 0
        %2420 = vmatpush1.bf16.msra.mxu0 0
        %2421 = vmatprep.subr.bf16.mxu0 0
        %2422 = vmatpush1.bf16.msra.mxu0 0
        %2423 = vmatprep.subr.bf16.mxu0 0
        %2424 = vmatpush1.bf16.msra.mxu0 0
        %2425 = vmatprep.subr.bf16.mxu0 0
        %2426 = vmatpush1.bf16.msra.mxu0 0
        %2427 = vmatprep.subr.bf16.mxu0 0
        %2428 = vmatpush1.bf16.msra.mxu0 0
        %2429 = vmatprep.subr.bf16.mxu0 0
        %2430 = vmatpush1.bf16.msra.mxu0 0
        %2431 = vmatprep.subr.bf16.mxu0 0
        %2432 = vmatpush1.bf16.msra.mxu0 0
        %2433 = vmatprep.subr.bf16.mxu0 0
        %2434 = vmatpush1.bf16.msra.mxu0 0
        %2435 = vmatprep.subr.bf16.mxu0 0
        %2436 = vmatpush1.bf16.msra.mxu0 0
        %2437 = vmatprep.subr.bf16.mxu0 0
        %2438 = vmatpush1.bf16.msra.mxu0 0
        %2439 = vmatprep.subr.bf16.mxu0 0
        %2440 = vmatpush1.bf16.msra.mxu0 0
        %2441 = vmatprep.subr.bf16.mxu0 0
        %2442 = vmatpush1.bf16.msra.mxu0 0
        %2443 = vmatprep.subr.bf16.mxu0 0
        %2444 = vmatpush1.bf16.msra.mxu0 0
        %2445 = vmatprep.mubr.bf16.mxu0 0
        %2446 = vmatmul.mubr.bf16.gmra.mrb[0].mxu0 %v2411
        %v2447 = vpop.f32.mrb[0].mxu0
        %v2448 = vadd.f32 0.0, %v2447
        %v2449 = vpop.f32.mrb[0].mxu0
        %v2450 = vpop.f32.mrb[0].mxu0
        %v2451 = vadd.f32 0.0, %v2450
        %v2452 = vpop.f32.mrb[0].mxu0
        %2453 = vdwg.mxu0
        %v2455 = vsel %vm1152, %v2407, 0
        %2457 = vmatprep.subr.bf16.mxu0 0
        %2458 = vmatpush1.bf16.msra.mxu0 %v2409
        %2459 = vmatprep.subr.bf16.mxu0 0
        %2460 = vmatpush1.bf16.msra.mxu0 0
        %2461 = vmatprep.subr.bf16.mxu0 0
        %2462 = vmatpush1.bf16.msra.mxu0 0
        %2463 = vmatprep.subr.bf16.mxu0 0
        %2464 = vmatpush1.bf16.msra.mxu0 0
        %2465 = vmatprep.subr.bf16.mxu0 0
        %2466 = vmatpush1.bf16.msra.mxu0 0
        %2467 = vmatprep.subr.bf16.mxu0 0
        %2468 = vmatpush1.bf16.msra.mxu0 0
        %2469 = vmatprep.subr.bf16.mxu0 0
        %2470 = vmatpush1.bf16.msra.mxu0 0
        %2471 = vmatprep.subr.bf16.mxu0 0
        %2472 = vmatpush1.bf16.msra.mxu0 0
        %2473 = vmatprep.subr.bf16.mxu0 0
        %2474 = vmatpush1.bf16.msra.mxu0 0
        %2475 = vmatprep.subr.bf16.mxu0 0
        %2476 = vmatpush1.bf16.msra.mxu0 0
        %2477 = vmatprep.subr.bf16.mxu0 0
        %2478 = vmatpush1.bf16.msra.mxu0 0
        %2479 = vmatprep.subr.bf16.mxu0 0
        %2480 = vmatpush1.bf16.msra.mxu0 0
        %2481 = vmatprep.subr.bf16.mxu0 0
        %2482 = vmatpush1.bf16.msra.mxu0 0
        %2483 = vmatprep.subr.bf16.mxu0 0
        %2484 = vmatpush1.bf16.msra.mxu0 0
        %2485 = vmatprep.subr.bf16.mxu0 0
        %2486 = vmatpush1.bf16.msra.mxu0 0
        %2487 = vmatprep.subr.bf16.mxu0 0
        %2488 = vmatpush1.bf16.msra.mxu0 0
        %2489 = vmatprep.mubr.bf16.mxu0 0
        %2490 = vmatmul.mubr.bf16.gmra.mrb[0].mxu0 %v2455
        %v2491 = vpop.f32.mrb[0].mxu0
        %v2492 = vadd.f32 0.0, %v2491
        %v2493 = vpop.f32.mrb[0].mxu0
        %v2494 = vpop.f32.mrb[0].mxu0
        %v2495 = vadd.f32 0.0, %v2494
        %v2496 = vpop.f32.mrb[0].mxu0
        %2497 = vdwg.mxu0
        %v2498 = vpack.c.bf16 %v2451, %v2448
        %v2499 = vpack.c.bf16 %v2495, %v2492
        %v2504 = vunpack.c.l.b16 %v738
        %v2505 = vunpack.c.l.b16 %v739
        %v2506 = vunpack.c.l.b16 %v740
        %v2507 = vunpack.c.l.b16 %v741
        %v2508 = vpack.c.b16 %v2505, %v2504
        %v2509 = vpack.c.b16 %v2507, %v2506
        %v2513 = vsel %vm1057, %v2498, 0
        %v2516 = vsel %vm1057, %v2499, 0
        %2518 = vmatprep.subr.bf16.mxu0 0
        %2519 = vmatpush1.bf16.msra.mxu0 %v2508
        %2520 = vmatprep.subr.bf16.mxu0 0
        %2521 = vmatpush1.bf16.msra.mxu0 %v2509
        %2522 = vmatprep.subr.bf16.mxu0 0
        %2523 = vmatpush1.bf16.msra.mxu0 0
        %2524 = vmatprep.subr.bf16.mxu0 0
        %2525 = vmatpush1.bf16.msra.mxu0 0
        %2526 = vmatprep.subr.bf16.mxu0 0
        %2527 = vmatpush1.bf16.msra.mxu0 0
        %2528 = vmatprep.subr.bf16.mxu0 0
        %2529 = vmatpush1.bf16.msra.mxu0 0
        %2530 = vmatprep.subr.bf16.mxu0 0
        %2531 = vmatpush1.bf16.msra.mxu0 0
        %2532 = vmatprep.subr.bf16.mxu0 0
        %2533 = vmatpush1.bf16.msra.mxu0 0
        %2534 = vmatprep.subr.bf16.mxu0 0
        %2535 = vmatpush1.bf16.msra.mxu0 0
        %2536 = vmatprep.subr.bf16.mxu0 0
        %2537 = vmatpush1.bf16.msra.mxu0 0
        %2538 = vmatprep.subr.bf16.mxu0 0
        %2539 = vmatpush1.bf16.msra.mxu0 0
        %2540 = vmatprep.subr.bf16.mxu0 0
        %2541 = vmatpush1.bf16.msra.mxu0 0
        %2542 = vmatprep.subr.bf16.mxu0 0
        %2543 = vmatpush1.bf16.msra.mxu0 0
        %2544 = vmatprep.subr.bf16.mxu0 0
        %2545 = vmatpush1.bf16.msra.mxu0 0
        %2546 = vmatprep.subr.bf16.mxu0 0
        %2547 = vmatpush1.bf16.msra.mxu0 0
        %2548 = vmatprep.subr.bf16.mxu0 0
        %2549 = vmatpush1.bf16.msra.mxu0 0
        %2550 = vmatprep.mubr.bf16.mxu0 0
        %2551 = vmatmul.mubr.bf16.gmra.mrb[0].mxu0 %v2513
        %v2552 = vpop.f32.mrb[0].mxu0
        %v2553 = vadd.f32 0.0, %v2552
        %v2554 = vpop.f32.mrb[0].mxu0
        %v2555 = vpop.f32.mrb[0].mxu0
        %v2556 = vadd.f32 0.0, %v2555
        %v2557 = vpop.f32.mrb[0].mxu0
        %2558 = vmatprep.mubr.bf16.mxu0 0
        %2559 = vmatmul.mubr.bf16.gmra.mrb[0].mxu0 %v2516
        %v2560 = vpop.f32.mrb[0].mxu0
        %v2561 = vadd.f32 0.0, %v2560
        %v2562 = vpop.f32.mrb[0].mxu0
        %v2563 = vpop.f32.mrb[0].mxu0
        %v2564 = vadd.f32 0.0, %v2563
        %v2565 = vpop.f32.mrb[0].mxu0
        %2566 = vdwg.mxu0
        %v2567 = vadd.f32 %v1950, %v2553
        %v2568 = vadd.f32 %v1953, %v2556
        %v2569 = vadd.f32 %v1958, %v2561
        %v2570 = vadd.f32 %v1961, %v2564
        %v2587 = vunpack.c.l.b16 %v586
        %v2588 = vunpack.c.l.b16 %v587
        %v2589 = vunpack.c.l.b16 %v588
        %v2590 = vunpack.c.l.b16 %v589
        %v2591 = vunpack.c.l.b16 %v590
        %v2592 = vunpack.c.l.b16 %v591
        %v2593 = vunpack.c.l.b16 %v592
        %v2594 = vunpack.c.l.b16 %v593
        %v2595 = vunpack.c.l.b16 %v594
        %v2596 = vunpack.c.l.b16 %v595
        %v2597 = vunpack.c.l.b16 %v596
        %v2598 = vunpack.c.l.b16 %v597
        %v2599 = vunpack.c.l.b16 %v598
        %v2600 = vunpack.c.l.b16 %v599
        %v2601 = vunpack.c.l.b16 %v600
        %v2602 = vunpack.c.l.b16 %v601
        %v2603 = vpack.c.b16 %v2588, %v2587
        %v2604 = vpack.c.b16 %v2590, %v2589
        %v2605 = vpack.c.b16 %v2592, %v2591
        %v2606 = vpack.c.b16 %v2594, %v2593
        %v2607 = vpack.c.b16 %v2596, %v2595
        %v2608 = vpack.c.b16 %v2598, %v2597
        %v2609 = vpack.c.b16 %v2600, %v2599
        %v2610 = vpack.c.b16 %v2602, %v2601
        %2619 = vrot.lane.b32.xlu0 %v751, 32
        %v2620 = vpop.permute.xlu0 %2619
        %2622 = vmatprep.subr.bf16.mxu0 0
        %2623 = vmatpush1.bf16.msra.mxu0 %v2603
        %2624 = vmatprep.subr.bf16.mxu0 0
        %2625 = vmatpush1.bf16.msra.mxu0 %v2604
        %2626 = vmatprep.subr.bf16.mxu0 0
        %2627 = vmatpush1.bf16.msra.mxu0 %v2605
        %2628 = vmatprep.subr.bf16.mxu0 0
        %2629 = vmatpush1.bf16.msra.mxu0 %v2606
        %2630 = vmatprep.subr.bf16.mxu0 0
        %2631 = vmatpush1.bf16.msra.mxu0 %v2607
        %2632 = vmatprep.subr.bf16.mxu0 0
        %2633 = vmatpush1.bf16.msra.mxu0 %v2608
        %2634 = vmatprep.subr.bf16.mxu0 0
        %2635 = vmatpush1.bf16.msra.mxu0 %v2609
        %2636 = vmatprep.subr.bf16.mxu0 0
        %2637 = vmatpush1.bf16.msra.mxu0 %v2610
        %2638 = vmatprep.subr.bf16.mxu0 0
        %2639 = vmatpush1.bf16.msra.mxu0 0
        %2640 = vmatprep.subr.bf16.mxu0 0
        %2641 = vmatpush1.bf16.msra.mxu0 0
        %2642 = vmatprep.subr.bf16.mxu0 0
        %2643 = vmatpush1.bf16.msra.mxu0 0
        %2644 = vmatprep.subr.bf16.mxu0 0
        %2645 = vmatpush1.bf16.msra.mxu0 0
        %2646 = vmatprep.subr.bf16.mxu0 0
        %2647 = vmatpush1.bf16.msra.mxu0 0
        %2648 = vmatprep.subr.bf16.mxu0 0
        %2649 = vmatpush1.bf16.msra.mxu0 0
        %2650 = vmatprep.subr.bf16.mxu0 0
        %2651 = vmatpush1.bf16.msra.mxu0 0
        %2652 = vmatprep.subr.bf16.mxu0 0
        %2653 = vmatpush1.bf16.msra.mxu0 0
        %2654 = vmatprep.mubr.bf16.mxu0 0
        %2655 = vmatmul.mubr.bf16.gmra.mrb[0].mxu0 %v746
        %v2656 = vpop.f32.mrb[0].mxu0
        %v2657 = vadd.f32 %v2620, %v2656
        %v2658 = vpop.f32.mrb[0].mxu0
        %v2659 = vpop.f32.mrb[0].mxu0
        %v2660 = vadd.f32 %v2620, %v2659
        %v2661 = vpop.f32.mrb[0].mxu0
        %2662 = vmatprep.mubr.bf16.mxu0 0
        %2663 = vmatmul.mubr.bf16.gmra.mrb[0].mxu0 %v747
        %v2664 = vpop.f32.mrb[0].mxu0
        %v2665 = vadd.f32 %v2620, %v2664
        %v2666 = vpop.f32.mrb[0].mxu0
        %v2667 = vpop.f32.mrb[0].mxu0
        %v2668 = vadd.f32 %v2620, %v2667
        %v2669 = vpop.f32.mrb[0].mxu0
        %2670 = vdwg.mxu0
        %v2687 = vunpack.c.l.b16 %v650
        %v2688 = vunpack.c.l.b16 %v651
        %v2689 = vunpack.c.l.b16 %v652
        %v2690 = vunpack.c.l.b16 %v653
        %v2691 = vunpack.c.l.b16 %v654
        %v2692 = vunpack.c.l.b16 %v655
        %v2693 = vunpack.c.l.b16 %v656
        %v2694 = vunpack.c.l.b16 %v657
        %v2695 = vunpack.c.l.b16 %v658
        %v2696 = vunpack.c.l.b16 %v659
        %v2697 = vunpack.c.l.b16 %v660
        %v2698 = vunpack.c.l.b16 %v661
        %v2699 = vunpack.c.l.b16 %v662
        %v2700 = vunpack.c.l.b16 %v663
        %v2701 = vunpack.c.l.b16 %v664
        %v2702 = vunpack.c.l.b16 %v665
        %v2703 = vpack.c.b16 %v2688, %v2687
        %v2704 = vpack.c.b16 %v2690, %v2689
        %v2705 = vpack.c.b16 %v2692, %v2691
        %v2706 = vpack.c.b16 %v2694, %v2693
        %v2707 = vpack.c.b16 %v2696, %v2695
        %v2708 = vpack.c.b16 %v2698, %v2697
        %v2709 = vpack.c.b16 %v2700, %v2699
        %v2710 = vpack.c.b16 %v2702, %v2701
        %2719 = vrot.lane.b32.xlu0 %v852, 32
        %v2720 = vpop.permute.xlu0 %2719
        %2722 = vmatprep.subr.bf16.mxu0 0
        %2723 = vmatpush1.bf16.msra.mxu0 %v2703
        %2724 = vmatprep.subr.bf16.mxu0 0
        %2725 = vmatpush1.bf16.msra.mxu0 %v2704
        %2726 = vmatprep.subr.bf16.mxu0 0
        %2727 = vmatpush1.bf16.msra.mxu0 %v2705
        %2728 = vmatprep.subr.bf16.mxu0 0
        %2729 = vmatpush1.bf16.msra.mxu0 %v2706
        %2730 = vmatprep.subr.bf16.mxu0 0
        %2731 = vmatpush1.bf16.msra.mxu0 %v2707
        %2732 = vmatprep.subr.bf16.mxu0 0
        %2733 = vmatpush1.bf16.msra.mxu0 %v2708
        %2734 = vmatprep.subr.bf16.mxu0 0
        %2735 = vmatpush1.bf16.msra.mxu0 %v2709
        %2736 = vmatprep.subr.bf16.mxu0 0
        %2737 = vmatpush1.bf16.msra.mxu0 %v2710
        %2738 = vmatprep.subr.bf16.mxu0 0
        %2739 = vmatpush1.bf16.msra.mxu0 0
        %2740 = vmatprep.subr.bf16.mxu0 0
        %2741 = vmatpush1.bf16.msra.mxu0 0
        %2742 = vmatprep.subr.bf16.mxu0 0
        %2743 = vmatpush1.bf16.msra.mxu0 0
        %2744 = vmatprep.subr.bf16.mxu0 0
        %2745 = vmatpush1.bf16.msra.mxu0 0
        %2746 = vmatprep.subr.bf16.mxu0 0
        %2747 = vmatpush1.bf16.msra.mxu0 0
        %2748 = vmatprep.subr.bf16.mxu0 0
        %2749 = vmatpush1.bf16.msra.mxu0 0
        %2750 = vmatprep.subr.bf16.mxu0 0
        %2751 = vmatpush1.bf16.msra.mxu0 0
        %2752 = vmatprep.subr.bf16.mxu0 0
        %2753 = vmatpush1.bf16.msra.mxu0 0
        %2754 = vmatprep.mubr.bf16.mxu0 0
        %2755 = vmatmul.mubr.bf16.gmra.mrb[0].mxu0 %v746
        %v2756 = vpop.f32.mrb[0].mxu0
        %v2757 = vadd.f32 %v2720, %v2756
        %v2758 = vpop.f32.mrb[0].mxu0
        %v2759 = vpop.f32.mrb[0].mxu0
        %v2760 = vadd.f32 %v2720, %v2759
        %v2761 = vpop.f32.mrb[0].mxu0
        %2762 = vmatprep.mubr.bf16.mxu0 0
        %2763 = vmatmul.mubr.bf16.gmra.mrb[0].mxu0 %v747
        %v2764 = vpop.f32.mrb[0].mxu0
        %v2765 = vadd.f32 %v2720, %v2764
        %v2766 = vpop.f32.mrb[0].mxu0
        %v2767 = vpop.f32.mrb[0].mxu0
        %v2768 = vadd.f32 %v2720, %v2767
        %v2769 = vpop.f32.mrb[0].mxu0
        %2770 = vdwg.mxu0
        %v2787 = vunpack.c.l.b16 %v714
        %v2788 = vunpack.c.l.b16 %v715
        %v2789 = vunpack.c.l.b16 %v716
        %v2790 = vunpack.c.l.b16 %v717
        %v2791 = vunpack.c.l.b16 %v718
        %v2792 = vunpack.c.l.b16 %v719
        %v2793 = vunpack.c.l.b16 %v720
        %v2794 = vunpack.c.l.b16 %v721
        %v2795 = vunpack.c.l.b16 %v722
        %v2796 = vunpack.c.l.b16 %v723
        %v2797 = vunpack.c.l.b16 %v724
        %v2798 = vunpack.c.l.b16 %v725
        %v2799 = vunpack.c.l.b16 %v726
        %v2800 = vunpack.c.l.b16 %v727
        %v2801 = vunpack.c.l.b16 %v728
        %v2802 = vunpack.c.l.b16 %v729
        %v2803 = vpack.c.b16 %v2788, %v2787
        %v2804 = vpack.c.b16 %v2790, %v2789
        %v2805 = vpack.c.b16 %v2792, %v2791
        %v2806 = vpack.c.b16 %v2794, %v2793
        %v2807 = vpack.c.b16 %v2796, %v2795
        %v2808 = vpack.c.b16 %v2798, %v2797
        %v2809 = vpack.c.b16 %v2800, %v2799
        %v2810 = vpack.c.b16 %v2802, %v2801
        %2819 = vrot.lane.b32.xlu0 %v955, 32
        %v2820 = vpop.permute.xlu0 %2819
        %2822 = vmatprep.subr.bf16.mxu0 0
        %2823 = vmatpush1.bf16.msra.mxu0 %v2803
        %2824 = vmatprep.subr.bf16.mxu0 0
        %2825 = vmatpush1.bf16.msra.mxu0 %v2804
        %2826 = vmatprep.subr.bf16.mxu0 0
        %2827 = vmatpush1.bf16.msra.mxu0 %v2805
        %2828 = vmatprep.subr.bf16.mxu0 0
        %2829 = vmatpush1.bf16.msra.mxu0 %v2806
        %2830 = vmatprep.subr.bf16.mxu0 0
        %2831 = vmatpush1.bf16.msra.mxu0 %v2807
        %2832 = vmatprep.subr.bf16.mxu0 0
        %2833 = vmatpush1.bf16.msra.mxu0 %v2808
        %2834 = vmatprep.subr.bf16.mxu0 0
        %2835 = vmatpush1.bf16.msra.mxu0 %v2809
        %2836 = vmatprep.subr.bf16.mxu0 0
        %2837 = vmatpush1.bf16.msra.mxu0 %v2810
        %2838 = vmatprep.subr.bf16.mxu0 0
        %2839 = vmatpush1.bf16.msra.mxu0 0
        %2840 = vmatprep.subr.bf16.mxu0 0
        %2841 = vmatpush1.bf16.msra.mxu0 0
        %2842 = vmatprep.subr.bf16.mxu0 0
        %2843 = vmatpush1.bf16.msra.mxu0 0
        %2844 = vmatprep.subr.bf16.mxu0 0
        %2845 = vmatpush1.bf16.msra.mxu0 0
        %2846 = vmatprep.subr.bf16.mxu0 0
        %2847 = vmatpush1.bf16.msra.mxu0 0
        %2848 = vmatprep.subr.bf16.mxu0 0
        %2849 = vmatpush1.bf16.msra.mxu0 0
        %2850 = vmatprep.subr.bf16.mxu0 0
        %2851 = vmatpush1.bf16.msra.mxu0 0
        %2852 = vmatprep.subr.bf16.mxu0 0
        %2853 = vmatpush1.bf16.msra.mxu0 0
        %2854 = vmatprep.mubr.bf16.mxu0 0
        %2855 = vmatmul.mubr.bf16.gmra.mrb[0].mxu0 %v950
        %v2856 = vpop.f32.mrb[0].mxu0
        %v2857 = vadd.f32 %v2820, %v2856
        %v2858 = vpop.f32.mrb[0].mxu0
        %v2859 = vpop.f32.mrb[0].mxu0
        %v2860 = vadd.f32 %v2820, %v2859
        %v2861 = vpop.f32.mrb[0].mxu0
        %2862 = vmatprep.mubr.bf16.mxu0 0
        %2863 = vmatmul.mubr.bf16.gmra.mrb[0].mxu0 %v951
        %v2864 = vpop.f32.mrb[0].mxu0
        %v2865 = vadd.f32 %v2820, %v2864
        %v2866 = vpop.f32.mrb[0].mxu0
        %v2867 = vpop.f32.mrb[0].mxu0
        %v2868 = vadd.f32 %v2820, %v2867
        %v2869 = vpop.f32.mrb[0].mxu0
        %2870 = vdwg.mxu0
        %v2871 = vpack.c.bf16 %v2660, %v2657
        %v2872 = vpack.c.bf16 %v2668, %v2665
        %v2873 = vpack.c.bf16 %v2760, %v2757
        %v2874 = vpack.c.bf16 %v2768, %v2765
        %v2876 = vsel %vm1057, %v2871, 0
        %v2879 = vsel %vm1057, %v2873, 0
        %2881 = vmatprep.subr.bf16.mxu0 0
        %2882 = vmatpush1.bf16.xpose.msra.mxu0 %v2879
        %2883 = vmatprep.subr.bf16.mxu0 0
        %2884 = vmatpush1.bf16.xpose.msra.mxu0 0
        %2885 = vmatprep.subr.bf16.mxu0 0
        %2886 = vmatpush1.bf16.xpose.msra.mxu0 0
        %2887 = vmatprep.subr.bf16.mxu0 0
        %2888 = vmatpush1.bf16.xpose.msra.mxu0 0
        %2889 = vmatprep.subr.bf16.mxu0 0
        %2890 = vmatpush1.bf16.xpose.msra.mxu0 0
        %2891 = vmatprep.subr.bf16.mxu0 0
        %2892 = vmatpush1.bf16.xpose.msra.mxu0 0
        %2893 = vmatprep.subr.bf16.mxu0 0
        %2894 = vmatpush1.bf16.xpose.msra.mxu0 0
        %2895 = vmatprep.subr.bf16.mxu0 0
        %2896 = vmatpush1.bf16.xpose.msra.mxu0 0
        %2897 = vmatprep.subr.bf16.mxu0 0
        %2898 = vmatpush1.bf16.xpose.msra.mxu0 0
        %2899 = vmatprep.subr.bf16.mxu0 0
        %2900 = vmatpush1.bf16.xpose.msra.mxu0 0
        %2901 = vmatprep.subr.bf16.mxu0 0
        %2902 = vmatpush1.bf16.xpose.msra.mxu0 0
        %2903 = vmatprep.subr.bf16.mxu0 0
        %2904 = vmatpush1.bf16.xpose.msra.mxu0 0
        %2905 = vmatprep.subr.bf16.mxu0 0
        %2906 = vmatpush1.bf16.xpose.msra.mxu0 0
        %2907 = vmatprep.subr.bf16.mxu0 0
        %2908 = vmatpush1.bf16.xpose.msra.mxu0 0
        %2909 = vmatprep.subr.bf16.mxu0 0
        %2910 = vmatpush1.bf16.xpose.msra.mxu0 0
        %2911 = vmatprep.subr.bf16.mxu0 0
        %2912 = vmatpush1.bf16.xpose.msra.mxu0 0
        %2913 = vmatprep.mubr.bf16.mxu0 0
        %2914 = vmatmul.mubr.bf16.gmra.mrb[0].mxu0 %v2876
        %v2915 = vpop.f32.mrb[0].mxu0
        %v2916 = vadd.f32 0.0, %v2915
        %v2917 = vpop.f32.mrb[0].mxu0
        %v2918 = vpop.f32.mrb[0].mxu0
        %v2919 = vadd.f32 0.0, %v2918
        %v2920 = vpop.f32.mrb[0].mxu0
        %2921 = vdwg.mxu0
        %v2923 = vsel %vm1057, %v2872, 0
        %v2926 = vsel %vm1057, %v2874, 0
        %2928 = vmatprep.subr.bf16.mxu0 0
        %2929 = vmatpush1.bf16.xpose.msra.mxu0 %v2926
        %2930 = vmatprep.subr.bf16.mxu0 0
        %2931 = vmatpush1.bf16.xpose.msra.mxu0 0
        %2932 = vmatprep.subr.bf16.mxu0 0
        %2933 = vmatpush1.bf16.xpose.msra.mxu0 0
        %2934 = vmatprep.subr.bf16.mxu0 0
        %2935 = vmatpush1.bf16.xpose.msra.mxu0 0
        %2936 = vmatprep.subr.bf16.mxu0 0
        %2937 = vmatpush1.bf16.xpose.msra.mxu0 0
        %2938 = vmatprep.subr.bf16.mxu0 0
        %2939 = vmatpush1.bf16.xpose.msra.mxu0 0
        %2940 = vmatprep.subr.bf16.mxu0 0
        %2941 = vmatpush1.bf16.xpose.msra.mxu0 0
        %2942 = vmatprep.subr.bf16.mxu0 0
        %2943 = vmatpush1.bf16.xpose.msra.mxu0 0
        %2944 = vmatprep.subr.bf16.mxu0 0
        %2945 = vmatpush1.bf16.xpose.msra.mxu0 0
        %2946 = vmatprep.subr.bf16.mxu0 0
        %2947 = vmatpush1.bf16.xpose.msra.mxu0 0
        %2948 = vmatprep.subr.bf16.mxu0 0
        %2949 = vmatpush1.bf16.xpose.msra.mxu0 0
        %2950 = vmatprep.subr.bf16.mxu0 0
        %2951 = vmatpush1.bf16.xpose.msra.mxu0 0
        %2952 = vmatprep.subr.bf16.mxu0 0
        %2953 = vmatpush1.bf16.xpose.msra.mxu0 0
        %2954 = vmatprep.subr.bf16.mxu0 0
        %2955 = vmatpush1.bf16.xpose.msra.mxu0 0
        %2956 = vmatprep.subr.bf16.mxu0 0
        %2957 = vmatpush1.bf16.xpose.msra.mxu0 0
        %2958 = vmatprep.subr.bf16.mxu0 0
        %2959 = vmatpush1.bf16.xpose.msra.mxu0 0
        %2960 = vmatprep.mubr.bf16.mxu0 0
        %2961 = vmatmul.mubr.bf16.gmra.mrb[0].mxu0 %v2923
        %v2962 = vpop.f32.mrb[0].mxu0
        %v2963 = vadd.f32 0.0, %v2962
        %v2964 = vpop.f32.mrb[0].mxu0
        %v2965 = vpop.f32.mrb[0].mxu0
        %v2966 = vadd.f32 0.0, %v2965
        %v2967 = vpop.f32.mrb[0].mxu0
        %2968 = vdwg.mxu0
        %v2969 = vsel %vm1152, %v2916, -inf
        %2970 = vmax.xlane.f32.xlu0 %v2969
        %v2971 = vpop.xlane.xlu0 %2970
        %v2972 = vsel %vm1152, %v2919, -inf
        %2973 = vmax.xlane.f32.xlu0 %v2972
        %v2974 = vpop.xlane.xlu0 %2973
        %v2975 = vsel %vm1152, %v2963, -inf
        %2976 = vmax.xlane.f32.xlu0 %v2975
        %v2977 = vpop.xlane.xlu0 %2976
        %v2978 = vsel %vm1152, %v2966, -inf
        %2979 = vmax.xlane.f32.xlu0 %v2978
        %v2980 = vpop.xlane.xlu0 %2979
        %v2981 = vsub.f32 %v2916, %v2971
        %v2982 = vsub.f32 %v2919, %v2974
        %v2983 = vsub.f32 %v2963, %v2977
        %v2984 = vsub.f32 %v2966, %v2980
        %v2985 = vmul.f32 %v2981, 1.442695
        %v2986 = vpow.pop %v2985
        %v2987 = vmul.f32 %v2982, 1.442695
        %v2988 = vpow.pop %v2987
        %v2989 = vmul.f32 %v2983, 1.442695
        %v2990 = vpow.pop %v2989
        %v2991 = vmul.f32 %v2984, 1.442695
        %v2992 = vpow.pop %v2991
        %v2993 = vsel %vm1152, %v2986, 0.0
        %2994 = vadd.xlane.f32.xlu0 %v2993
        %v2995 = vpop.xlane.xlu0 %2994
        %v2996 = vsel %vm1152, %v2988, 0.0
        %2997 = vadd.xlane.f32.xlu0 %v2996
        %v2998 = vpop.xlane.xlu0 %2997
        %v2999 = vsel %vm1152, %v2990, 0.0
        %3000 = vadd.xlane.f32.xlu0 %v2999
        %v3001 = vpop.xlane.xlu0 %3000
        %v3002 = vsel %vm1152, %v2992, 0.0
        %3003 = vadd.xlane.f32.xlu0 %v3002
        %v3004 = vpop.xlane.xlu0 %3003
        %v3005 = vrcp.pop %v2995
        %v3006 = vrcp.pop %v2998
        %v3007 = vrcp.pop %v3001
        %v3008 = vrcp.pop %v3004
        %v3009 = vmul.f32 %v2986, %v3005
        %v3010 = vmul.f32 %v2988, %v3006
        %v3011 = vmul.f32 %v2990, %v3007
        %v3012 = vmul.f32 %v2992, %v3008
        %v3013 = vpack.c.bf16 %v3010, %v3009
        %v3014 = vpack.c.bf16 %v3012, %v3011
        %v3015 = vpack.c.bf16 %v2860, %v2857
        %v3016 = vpack.c.bf16 %v2868, %v2865
        %v3018 = vsel %vm1152, %v3013, 0
        %3020 = vmatprep.subr.bf16.mxu0 0
        %3021 = vmatpush1.bf16.msra.mxu0 %v3015
        %3022 = vmatprep.subr.bf16.mxu0 0
        %3023 = vmatpush1.bf16.msra.mxu0 0
        %3024 = vmatprep.subr.bf16.mxu0 0
        %3025 = vmatpush1.bf16.msra.mxu0 0
        %3026 = vmatprep.subr.bf16.mxu0 0
        %3027 = vmatpush1.bf16.msra.mxu0 0
        %3028 = vmatprep.subr.bf16.mxu0 0
        %3029 = vmatpush1.bf16.msra.mxu0 0
        %3030 = vmatprep.subr.bf16.mxu0 0
        %3031 = vmatpush1.bf16.msra.mxu0 0
        %3032 = vmatprep.subr.bf16.mxu0 0
        %3033 = vmatpush1.bf16.msra.mxu0 0
        %3034 = vmatprep.subr.bf16.mxu0 0
        %3035 = vmatpush1.bf16.msra.mxu0 0
        %3036 = vmatprep.subr.bf16.mxu0 0
        %3037 = vmatpush1.bf16.msra.mxu0 0
        %3038 = vmatprep.subr.bf16.mxu0 0
        %3039 = vmatpush1.bf16.msra.mxu0 0
        %3040 = vmatprep.subr.bf16.mxu0 0
        %3041 = vmatpush1.bf16.msra.mxu0 0
        %3042 = vmatprep.subr.bf16.mxu0 0
        %3043 = vmatpush1.bf16.msra.mxu0 0
        %3044 = vmatprep.subr.bf16.mxu0 0
        %3045 = vmatpush1.bf16.msra.mxu0 0
        %3046 = vmatprep.subr.bf16.mxu0 0
        %3047 = vmatpush1.bf16.msra.mxu0 0
        %3048 = vmatprep.subr.bf16.mxu0 0
        %3049 = vmatpush1.bf16.msra.mxu0 0
        %3050 = vmatprep.subr.bf16.mxu0 0
        %3051 = vmatpush1.bf16.msra.mxu0 0
        %3052 = vmatprep.mubr.bf16.mxu0 0
        %3053 = vmatmul.mubr.bf16.gmra.mrb[0].mxu0 %v3018
        %v3054 = vpop.f32.mrb[0].mxu0
        %v3055 = vadd.f32 0.0, %v3054
        %v3056 = vpop.f32.mrb[0].mxu0
        %v3057 = vpop.f32.mrb[0].mxu0
        %v3058 = vadd.f32 0.0, %v3057
        %v3059 = vpop.f32.mrb[0].mxu0
        %3060 = vdwg.mxu0
        %v3062 = vsel %vm1152, %v3014, 0
        %3064 = vmatprep.subr.bf16.mxu0 0
        %3065 = vmatpush1.bf16.msra.mxu0 %v3016
        %3066 = vmatprep.subr.bf16.mxu0 0
        %3067 = vmatpush1.bf16.msra.mxu0 0
        %3068 = vmatprep.subr.bf16.mxu0 0
        %3069 = vmatpush1.bf16.msra.mxu0 0
        %3070 = vmatprep.subr.bf16.mxu0 0
        %3071 = vmatpush1.bf16.msra.mxu0 0
        %3072 = vmatprep.subr.bf16.mxu0 0
        %3073 = vmatpush1.bf16.msra.mxu0 0
        %3074 = vmatprep.subr.bf16.mxu0 0
        %3075 = vmatpush1.bf16.msra.mxu0 0
        %3076 = vmatprep.subr.bf16.mxu0 0
        %3077 = vmatpush1.bf16.msra.mxu0 0
        %3078 = vmatprep.subr.bf16.mxu0 0
        %3079 = vmatpush1.bf16.msra.mxu0 0
        %3080 = vmatprep.subr.bf16.mxu0 0
        %3081 = vmatpush1.bf16.msra.mxu0 0
        %3082 = vmatprep.subr.bf16.mxu0 0
        %3083 = vmatpush1.bf16.msra.mxu0 0
        %3084 = vmatprep.subr.bf16.mxu0 0
        %3085 = vmatpush1.bf16.msra.mxu0 0
        %3086 = vmatprep.subr.bf16.mxu0 0
        %3087 = vmatpush1.bf16.msra.mxu0 0
        %3088 = vmatprep.subr.bf16.mxu0 0
        %3089 = vmatpush1.bf16.msra.mxu0 0
        %3090 = vmatprep.subr.bf16.mxu0 0
        %3091 = vmatpush1.bf16.msra.mxu0 0
        %3092 = vmatprep.subr.bf16.mxu0 0
        %3093 = vmatpush1.bf16.msra.mxu0 0
        %3094 = vmatprep.subr.bf16.mxu0 0
        %3095 = vmatpush1.bf16.msra.mxu0 0
        %3096 = vmatprep.mubr.bf16.mxu0 0
        %3097 = vmatmul.mubr.bf16.gmra.mrb[0].mxu0 %v3062
        %v3098 = vpop.f32.mrb[0].mxu0
        %v3099 = vadd.f32 0.0, %v3098
        %v3100 = vpop.f32.mrb[0].mxu0
        %v3101 = vpop.f32.mrb[0].mxu0
        %v3102 = vadd.f32 0.0, %v3101
        %v3103 = vpop.f32.mrb[0].mxu0
        %3104 = vdwg.mxu0
        %v3105 = vpack.c.bf16 %v3058, %v3055
        %v3106 = vpack.c.bf16 %v3102, %v3099
        %v3111 = vunpack.c.l.b16 %v742
        %v3112 = vunpack.c.l.b16 %v743
        %v3113 = vunpack.c.l.b16 %v744
        %v3114 = vunpack.c.l.b16 %v745
        %v3115 = vpack.c.b16 %v3112, %v3111
        %v3116 = vpack.c.b16 %v3114, %v3113
        %v3120 = vsel %vm1057, %v3105, 0
        %v3123 = vsel %vm1057, %v3106, 0
        %3125 = vmatprep.subr.bf16.mxu0 0
        %3126 = vmatpush1.bf16.msra.mxu0 %v3115
        %3127 = vmatprep.subr.bf16.mxu0 0
        %3128 = vmatpush1.bf16.msra.mxu0 %v3116
        %3129 = vmatprep.subr.bf16.mxu0 0
        %3130 = vmatpush1.bf16.msra.mxu0 0
        %3131 = vmatprep.subr.bf16.mxu0 0
        %3132 = vmatpush1.bf16.msra.mxu0 0
        %3133 = vmatprep.subr.bf16.mxu0 0
        %3134 = vmatpush1.bf16.msra.mxu0 0
        %3135 = vmatprep.subr.bf16.mxu0 0
        %3136 = vmatpush1.bf16.msra.mxu0 0
        %3137 = vmatprep.subr.bf16.mxu0 0
        %3138 = vmatpush1.bf16.msra.mxu0 0
        %3139 = vmatprep.subr.bf16.mxu0 0
        %3140 = vmatpush1.bf16.msra.mxu0 0
        %3141 = vmatprep.subr.bf16.mxu0 0
        %3142 = vmatpush1.bf16.msra.mxu0 0
        %3143 = vmatprep.subr.bf16.mxu0 0
        %3144 = vmatpush1.bf16.msra.mxu0 0
        %3145 = vmatprep.subr.bf16.mxu0 0
        %3146 = vmatpush1.bf16.msra.mxu0 0
        %3147 = vmatprep.subr.bf16.mxu0 0
        %3148 = vmatpush1.bf16.msra.mxu0 0
        %3149 = vmatprep.subr.bf16.mxu0 0
        %3150 = vmatpush1.bf16.msra.mxu0 0
        %3151 = vmatprep.subr.bf16.mxu0 0
        %3152 = vmatpush1.bf16.msra.mxu0 0
        %3153 = vmatprep.subr.bf16.mxu0 0
        %3154 = vmatpush1.bf16.msra.mxu0 0
        %3155 = vmatprep.subr.bf16.mxu0 0
        %3156 = vmatpush1.bf16.msra.mxu0 0
        %3157 = vmatprep.mubr.bf16.mxu0 0
        %3158 = vmatmul.mubr.bf16.gmra.mrb[0].mxu0 %v3120
        %v3159 = vpop.f32.mrb[0].mxu0
        %v3160 = vadd.f32 0.0, %v3159
        %v3161 = vpop.f32.mrb[0].mxu0
        %v3162 = vpop.f32.mrb[0].mxu0
        %v3163 = vadd.f32 0.0, %v3162
        %v3164 = vpop.f32.mrb[0].mxu0
        %3165 = vmatprep.mubr.bf16.mxu0 0
        %3166 = vmatmul.mubr.bf16.gmra.mrb[0].mxu0 %v3123
        %v3167 = vpop.f32.mrb[0].mxu0
        %v3168 = vadd.f32 0.0, %v3167
        %v3169 = vpop.f32.mrb[0].mxu0
        %v3170 = vpop.f32.mrb[0].mxu0
        %v3171 = vadd.f32 0.0, %v3170
        %v3172 = vpop.f32.mrb[0].mxu0
        %3173 = vdwg.mxu0
        %v3174 = vadd.f32 %v2567, %v3160
        %v3175 = vadd.f32 %v2568, %v3163
        %v3176 = vadd.f32 %v2569, %v3168
        %v3177 = vadd.f32 %v2570, %v3171
        %v3178 = vlaneseq
        %v3179 = vshrl.u32 %v3178, 7
        %v3180 = vsub.s32 3, %v3179
        %v3181 = vrot.slane %v535, %v3180
        %v3182 = vadd.f32 %v3174, %v3181
        %v3183 = vadd.f32 %v3175, %v3181
        %v3184 = vadd.f32 %v3176, %v3181
        %v3185 = vadd.f32 %v3177, %v3181
        %v3186 = vadd.f32 %v523, %v3182
        %v3187 = vadd.f32 %v524, %v3183
        %v3188 = vadd.f32 %v525, %v3184
        %v3189 = vadd.f32 %v526, %v3185
        %3190 = vadd.xlane.f32.xlu0 %v3186
        %v3191 = vpop.xlane.xlu0 %3190
        %3192 = vadd.xlane.f32.xlu0 %v3187
        %v3193 = vpop.xlane.xlu0 %3192
        %3194 = vadd.xlane.f32.xlu0 %v3188
        %v3195 = vpop.xlane.xlu0 %3194
        %3196 = vadd.xlane.f32.xlu0 %v3189
        %v3197 = vpop.xlane.xlu0 %3196
        %v3198 = vrcp.pop 128.0
        %v3199 = vmul.f32 %v3191, %v3198
        %v3200 = vmul.f32 %v3193, %v3198
        %v3201 = vmul.f32 %v3195, %v3198
        %v3202 = vmul.f32 %v3197, %v3198
        %v3203 = vsub.f32 %v3186, %v3199
        %v3204 = vsub.f32 %v3187, %v3200
        %v3205 = vsub.f32 %v3188, %v3201
        %v3206 = vsub.f32 %v3189, %v3202
        %v3207 = vmul.f32 %v3203, %v3203
        %v3208 = vmul.f32 %v3204, %v3204
        %v3209 = vmul.f32 %v3205, %v3205
        %v3210 = vmul.f32 %v3206, %v3206
        %3211 = vadd.xlane.f32.xlu0 %v3207
        %v3212 = vpop.xlane.xlu0 %3211
        %3213 = vadd.xlane.f32.xlu0 %v3208
        %v3214 = vpop.xlane.xlu0 %3213
        %3215 = vadd.xlane.f32.xlu0 %v3209
        %v3216 = vpop.xlane.xlu0 %3215
        %3217 = vadd.xlane.f32.xlu0 %v3210
        %v3218 = vpop.xlane.xlu0 %3217
        %v3219 = vmul.f32 %v3212, %v3198
        %v3220 = vmul.f32 %v3214, %v3198
        %v3221 = vmul.f32 %v3216, %v3198
        %v3222 = vmul.f32 %v3218, %v3198
        %v3223 = vadd.f32 %v3219, 1e-05
        %v3224 = vadd.f32 %v3220, 1e-05
        %v3225 = vadd.f32 %v3221, 1e-05
        %v3226 = vadd.f32 %v3222, 1e-05
        %v3227 = vrsqrt.pop %v3223
        %v3228 = vrsqrt.pop %v3224
        %v3229 = vrsqrt.pop %v3225
        %v3230 = vrsqrt.pop %v3226
        %v3231 = vmul.f32 %v3203, %v3227
        %v3232 = vmul.f32 %v3204, %v3228
        %v3233 = vmul.f32 %v3205, %v3229
        %v3234 = vmul.f32 %v3206, %v3230
        %v3235 = vlaneseq
        %v3236 = vshrl.u32 %v3235, 7
        %v3237 = vsub.s32 4, %v3236
        %v3238 = vrot.slane %v535, %v3237
        %v3239 = vmul.f32 %v3231, %v3238
        %v3240 = vmul.f32 %v3232, %v3238
        %v3241 = vmul.f32 %v3233, %v3238
        %v3242 = vmul.f32 %v3234, %v3238
        %v3243 = vlaneseq
        %v3244 = vshrl.u32 %v3243, 7
        %v3245 = vsub.s32 5, %v3244
        %v3246 = vrot.slane %v535, %v3245
        %v3247 = vadd.f32 %v3239, %v3246
        %v3248 = vadd.f32 %v3240, %v3246
        %v3249 = vadd.f32 %v3241, %v3246
        %v3250 = vadd.f32 %v3242, %v3246
        %v3251 = vld [vmem:[%s495] sm:$0xff]
        %v3252 = vld [vmem:[%s495 + $0x8] sm:$0xff]
        %v3253 = vld [vmem:[%s495 + $0x10] sm:$0xff]
        %v3254 = vld [vmem:[%s495 + $0x18] sm:$0xff]
        %v3255 = vld [vmem:[%s495 + $0x20] sm:$0xff]
        %v3256 = vld [vmem:[%s495 + $0x28] sm:$0xff]
        %v3257 = vld [vmem:[%s495 + $0x30] sm:$0xff]
        %v3258 = vld [vmem:[%s495 + $0x38] sm:$0xff]
        %v3259 = vld [vmem:[%s495 + $0x40] sm:$0xff]
        %v3260 = vld [vmem:[%s495 + $0x48] sm:$0xff]
        %v3261 = vld [vmem:[%s495 + $0x50] sm:$0xff]
        %v3262 = vld [vmem:[%s495 + $0x58] sm:$0xff]
        %v3263 = vld [vmem:[%s495 + $0x60] sm:$0xff]
        %v3264 = vld [vmem:[%s495 + $0x68] sm:$0xff]
        %v3265 = vld [vmem:[%s495 + $0x70] sm:$0xff]
        %v3266 = vld [vmem:[%s495 + $0x78] sm:$0xff]
        %v3267 = vpack.c.bf16 %v3248, %v3247
        %v3268 = vpack.c.bf16 %v3250, %v3249
        %v3270 = vlaneseq
        %v3271 = vshrl.u32 %v3270, 7
        %v3272 = vsub.s32 0, %v3271
        %v3273 = vrot.slane %v537, %v3272
        %v3274 = vlaneseq
        %v3275 = vshrl.u32 %v3274, 7
        %v3276 = vsub.s32 1, %v3275
        %v3277 = vrot.slane %v537, %v3276
        %v3296 = vunpack.c.l.b16 %v3251
        %v3297 = vunpack.c.h.b16 %v3251
        %v3298 = vunpack.c.l.b16 %v3252
        %v3299 = vunpack.c.h.b16 %v3252
        %v3300 = vunpack.c.l.b16 %v3253
        %v3301 = vunpack.c.h.b16 %v3253
        %v3302 = vunpack.c.l.b16 %v3254
        %v3303 = vunpack.c.h.b16 %v3254
        %v3304 = vunpack.c.l.b16 %v3255
        %v3305 = vunpack.c.h.b16 %v3255
        %v3306 = vunpack.c.l.b16 %v3256
        %v3307 = vunpack.c.h.b16 %v3256
        %v3308 = vunpack.c.l.b16 %v3257
        %v3309 = vunpack.c.h.b16 %v3257
        %v3310 = vunpack.c.l.b16 %v3258
        %v3311 = vunpack.c.h.b16 %v3258
        %v3312 = vunpack.c.l.b16 %v3259
        %v3313 = vunpack.c.h.b16 %v3259
        %v3314 = vunpack.c.l.b16 %v3260
        %v3315 = vunpack.c.h.b16 %v3260
        %v3316 = vunpack.c.l.b16 %v3261
        %v3317 = vunpack.c.h.b16 %v3261
        %v3318 = vunpack.c.l.b16 %v3262
        %v3319 = vunpack.c.h.b16 %v3262
        %v3320 = vunpack.c.l.b16 %v3263
        %v3321 = vunpack.c.h.b16 %v3263
        %v3322 = vunpack.c.l.b16 %v3264
        %v3323 = vunpack.c.h.b16 %v3264
        %v3324 = vunpack.c.l.b16 %v3265
        %v3325 = vunpack.c.h.b16 %v3265
        %v3326 = vunpack.c.l.b16 %v3266
        %v3327 = vunpack.c.h.b16 %v3266
        %v3328 = vpack.c.b16 %v3298, %v3296
        %v3329 = vpack.c.b16 %v3299, %v3297
        %v3330 = vpack.c.b16 %v3302, %v3300
        %v3331 = vpack.c.b16 %v3303, %v3301
        %v3332 = vpack.c.b16 %v3306, %v3304
        %v3333 = vpack.c.b16 %v3307, %v3305
        %v3334 = vpack.c.b16 %v3310, %v3308
        %v3335 = vpack.c.b16 %v3311, %v3309
        %v3336 = vpack.c.b16 %v3314, %v3312
        %v3337 = vpack.c.b16 %v3315, %v3313
        %v3338 = vpack.c.b16 %v3318, %v3316
        %v3339 = vpack.c.b16 %v3319, %v3317
        %v3340 = vpack.c.b16 %v3322, %v3320
        %v3341 = vpack.c.b16 %v3323, %v3321
        %v3342 = vpack.c.b16 %v3326, %v3324
        %v3343 = vpack.c.b16 %v3327, %v3325
        %3360 = vmatprep.subr.bf16.mxu0 %v3329
        %3361 = vmatpush1.bf16.msra.mxu0 %v3328
        %3362 = vmatprep.subr.bf16.mxu0 %v3331
        %3363 = vmatpush1.bf16.msra.mxu0 %v3330
        %3364 = vmatprep.subr.bf16.mxu0 %v3333
        %3365 = vmatpush1.bf16.msra.mxu0 %v3332
        %3366 = vmatprep.subr.bf16.mxu0 %v3335
        %3367 = vmatpush1.bf16.msra.mxu0 %v3334
        %3368 = vmatprep.subr.bf16.mxu0 %v3337
        %3369 = vmatpush1.bf16.msra.mxu0 %v3336
        %3370 = vmatprep.subr.bf16.mxu0 %v3339
        %3371 = vmatpush1.bf16.msra.mxu0 %v3338
        %3372 = vmatprep.subr.bf16.mxu0 %v3341
        %3373 = vmatpush1.bf16.msra.mxu0 %v3340
        %3374 = vmatprep.subr.bf16.mxu0 %v3343
        %3375 = vmatpush1.bf16.msra.mxu0 %v3342
        %3376 = vmatprep.subr.bf16.mxu0 0
        %3377 = vmatpush1.bf16.msra.mxu0 0
        %3378 = vmatprep.subr.bf16.mxu0 0
        %3379 = vmatpush1.bf16.msra.mxu0 0
        %3380 = vmatprep.subr.bf16.mxu0 0
        %3381 = vmatpush1.bf16.msra.mxu0 0
        %3382 = vmatprep.subr.bf16.mxu0 0
        %3383 = vmatpush1.bf16.msra.mxu0 0
        %3384 = vmatprep.subr.bf16.mxu0 0
        %3385 = vmatpush1.bf16.msra.mxu0 0
        %3386 = vmatprep.subr.bf16.mxu0 0
        %3387 = vmatpush1.bf16.msra.mxu0 0
        %3388 = vmatprep.subr.bf16.mxu0 0
        %3389 = vmatpush1.bf16.msra.mxu0 0
        %3390 = vmatprep.subr.bf16.mxu0 0
        %3391 = vmatpush1.bf16.msra.mxu0 0
        %3392 = vmatprep.mubr.bf16.mxu0 0
        %3393 = vmatmul.mubr.bf16.gmra.mrb[0].mxu0 %v3267
        %v3394 = vpop.f32.mrb[0].mxu0
        %v3395 = vadd.f32 %v3273, %v3394
        %v3396 = vpop.f32.mrb[0].mxu0
        %v3397 = vadd.f32 %v3277, %v3396
        %v3398 = vpop.f32.mrb[0].mxu0
        %v3399 = vadd.f32 %v3273, %v3398
        %v3400 = vpop.f32.mrb[0].mxu0
        %v3401 = vadd.f32 %v3277, %v3400
        %3402 = vmatprep.mubr.bf16.mxu0 0
        %3403 = vmatmul.mubr.bf16.gmra.mrb[0].mxu0 %v3268
        %v3404 = vpop.f32.mrb[0].mxu0
        %v3405 = vadd.f32 %v3273, %v3404
        %v3406 = vpop.f32.mrb[0].mxu0
        %v3407 = vadd.f32 %v3277, %v3406
        %v3408 = vpop.f32.mrb[0].mxu0
        %v3409 = vadd.f32 %v3273, %v3408
        %v3410 = vpop.f32.mrb[0].mxu0
        %v3411 = vadd.f32 %v3277, %v3410
        %3412 = vdwg.mxu0
        %v3413 = vmax.f32 %v3395, 0.0
        %v3414 = vmax.f32 %v3397, 0.0
        %v3415 = vmax.f32 %v3399, 0.0
        %v3416 = vmax.f32 %v3401, 0.0
        %v3417 = vmax.f32 %v3405, 0.0
        %v3418 = vmax.f32 %v3407, 0.0
        %v3419 = vmax.f32 %v3409, 0.0
        %v3420 = vmax.f32 %v3411, 0.0
        %v3421 = vld [vmem:[%s500] sm:$0xf]
        %v3422 = vld [vmem:[%s500 + $0x4] sm:$0xf]
        %v3423 = vld [vmem:[%s500 + $0x8] sm:$0xf]
        %v3424 = vld [vmem:[%s500 + $0xc] sm:$0xf]
        %v3425 = vld [vmem:[%s500 + $0x10] sm:$0xf]
        %v3426 = vld [vmem:[%s500 + $0x14] sm:$0xf]
        %v3427 = vld [vmem:[%s500 + $0x18] sm:$0xf]
        %v3428 = vld [vmem:[%s500 + $0x1c] sm:$0xf]
        %v3429 = vld [vmem:[%s500 + $0x20] sm:$0xf]
        %v3430 = vld [vmem:[%s500 + $0x24] sm:$0xf]
        %v3431 = vld [vmem:[%s500 + $0x28] sm:$0xf]
        %v3432 = vld [vmem:[%s500 + $0x2c] sm:$0xf]
        %v3433 = vld [vmem:[%s500 + $0x30] sm:$0xf]
        %v3434 = vld [vmem:[%s500 + $0x34] sm:$0xf]
        %v3435 = vld [vmem:[%s500 + $0x38] sm:$0xf]
        %v3436 = vld [vmem:[%s500 + $0x3c] sm:$0xf]
        %v3437 = vld [vmem:[%s500 + $0x40] sm:$0xf]
        %v3438 = vld [vmem:[%s500 + $0x44] sm:$0xf]
        %v3439 = vld [vmem:[%s500 + $0x48] sm:$0xf]
        %v3440 = vld [vmem:[%s500 + $0x4c] sm:$0xf]
        %v3441 = vld [vmem:[%s500 + $0x50] sm:$0xf]
        %v3442 = vld [vmem:[%s500 + $0x54] sm:$0xf]
        %v3443 = vld [vmem:[%s500 + $0x58] sm:$0xf]
        %v3444 = vld [vmem:[%s500 + $0x5c] sm:$0xf]
        %v3445 = vld [vmem:[%s500 + $0x60] sm:$0xf]
        %v3446 = vld [vmem:[%s500 + $0x64] sm:$0xf]
        %v3447 = vld [vmem:[%s500 + $0x68] sm:$0xf]
        %v3448 = vld [vmem:[%s500 + $0x6c] sm:$0xf]
        %v3449 = vld [vmem:[%s500 + $0x70] sm:$0xf]
        %v3450 = vld [vmem:[%s500 + $0x74] sm:$0xf]
        %v3451 = vld [vmem:[%s500 + $0x78] sm:$0xf]
        %v3452 = vld [vmem:[%s500 + $0x7c] sm:$0xf]
        %v3453 = vpack.c.bf16 %v3415, %v3413
        %v3454 = vpack.c.bf16 %v3416, %v3414
        %v3455 = vpack.c.bf16 %v3419, %v3417
        %v3456 = vpack.c.bf16 %v3420, %v3418
        %v3457 = vlaneseq
        %v3458 = vshrl.u32 %v3457, 7
        %v3459 = vsub.s32 6, %v3458
        %v3460 = vrot.slane %v535, %v3459
        %v3493 = vunpack.c.l.b16 %v3421
        %v3494 = vunpack.c.l.b16 %v3422
        %v3495 = vunpack.c.l.b16 %v3423
        %v3496 = vunpack.c.l.b16 %v3424
        %v3497 = vunpack.c.l.b16 %v3425
        %v3498 = vunpack.c.l.b16 %v3426
        %v3499 = vunpack.c.l.b16 %v3427
        %v3500 = vunpack.c.l.b16 %v3428
        %v3501 = vunpack.c.l.b16 %v3429
        %v3502 = vunpack.c.l.b16 %v3430
        %v3503 = vunpack.c.l.b16 %v3431
        %v3504 = vunpack.c.l.b16 %v3432
        %v3505 = vunpack.c.l.b16 %v3433
        %v3506 = vunpack.c.l.b16 %v3434
        %v3507 = vunpack.c.l.b16 %v3435
        %v3508 = vunpack.c.l.b16 %v3436
        %v3509 = vunpack.c.l.b16 %v3437
        %v3510 = vunpack.c.l.b16 %v3438
        %v3511 = vunpack.c.l.b16 %v3439
        %v3512 = vunpack.c.l.b16 %v3440
        %v3513 = vunpack.c.l.b16 %v3441
        %v3514 = vunpack.c.l.b16 %v3442
        %v3515 = vunpack.c.l.b16 %v3443
        %v3516 = vunpack.c.l.b16 %v3444
        %v3517 = vunpack.c.l.b16 %v3445
        %v3518 = vunpack.c.l.b16 %v3446
        %v3519 = vunpack.c.l.b16 %v3447
        %v3520 = vunpack.c.l.b16 %v3448
        %v3521 = vunpack.c.l.b16 %v3449
        %v3522 = vunpack.c.l.b16 %v3450
        %v3523 = vunpack.c.l.b16 %v3451
        %v3524 = vunpack.c.l.b16 %v3452
        %v3525 = vpack.c.b16 %v3494, %v3493
        %v3526 = vpack.c.b16 %v3496, %v3495
        %v3527 = vpack.c.b16 %v3498, %v3497
        %v3528 = vpack.c.b16 %v3500, %v3499
        %v3529 = vpack.c.b16 %v3502, %v3501
        %v3530 = vpack.c.b16 %v3504, %v3503
        %v3531 = vpack.c.b16 %v3506, %v3505
        %v3532 = vpack.c.b16 %v3508, %v3507
        %v3533 = vpack.c.b16 %v3510, %v3509
        %v3534 = vpack.c.b16 %v3512, %v3511
        %v3535 = vpack.c.b16 %v3514, %v3513
        %v3536 = vpack.c.b16 %v3516, %v3515
        %v3537 = vpack.c.b16 %v3518, %v3517
        %v3538 = vpack.c.b16 %v3520, %v3519
        %v3539 = vpack.c.b16 %v3522, %v3521
        %v3540 = vpack.c.b16 %v3524, %v3523
        %3557 = vmatprep.subr.bf16.mxu0 0
        %3558 = vmatpush1.bf16.msra.mxu0 %v3525
        %3559 = vmatprep.subr.bf16.mxu0 0
        %3560 = vmatpush1.bf16.msra.mxu0 %v3526
        %3561 = vmatprep.subr.bf16.mxu0 0
        %3562 = vmatpush1.bf16.msra.mxu0 %v3527
        %3563 = vmatprep.subr.bf16.mxu0 0
        %3564 = vmatpush1.bf16.msra.mxu0 %v3528
        %3565 = vmatprep.subr.bf16.mxu0 0
        %3566 = vmatpush1.bf16.msra.mxu0 %v3529
        %3567 = vmatprep.subr.bf16.mxu0 0
        %3568 = vmatpush1.bf16.msra.mxu0 %v3530
        %3569 = vmatprep.subr.bf16.mxu0 0
        %3570 = vmatpush1.bf16.msra.mxu0 %v3531
        %3571 = vmatprep.subr.bf16.mxu0 0
        %3572 = vmatpush1.bf16.msra.mxu0 %v3532
        %3573 = vmatprep.subr.bf16.mxu0 0
        %3574 = vmatpush1.bf16.msra.mxu0 %v3533
        %3575 = vmatprep.subr.bf16.mxu0 0
        %3576 = vmatpush1.bf16.msra.mxu0 %v3534
        %3577 = vmatprep.subr.bf16.mxu0 0
        %3578 = vmatpush1.bf16.msra.mxu0 %v3535
        %3579 = vmatprep.subr.bf16.mxu0 0
        %3580 = vmatpush1.bf16.msra.mxu0 %v3536
        %3581 = vmatprep.subr.bf16.mxu0 0
        %3582 = vmatpush1.bf16.msra.mxu0 %v3537
        %3583 = vmatprep.subr.bf16.mxu0 0
        %3584 = vmatpush1.bf16.msra.mxu0 %v3538
        %3585 = vmatprep.subr.bf16.mxu0 0
        %3586 = vmatpush1.bf16.msra.mxu0 %v3539
        %3587 = vmatprep.subr.bf16.mxu0 0
        %3588 = vmatpush1.bf16.msra.mxu0 %v3540
        %3589 = vmatprep.mubr.bf16.mxu0 %v3454
        %3590 = vmatmul.mubr.bf16.gmra.mrb[0].mxu0 %v3453
        %v3591 = vpop.f32.mrb[0].mxu0
        %v3592 = vadd.f32 %v3460, %v3591
        %v3593 = vpop.f32.mrb[0].mxu0
        %v3594 = vpop.f32.mrb[0].mxu0
        %v3595 = vadd.f32 %v3460, %v3594
        %v3596 = vpop.f32.mrb[0].mxu0
        %3597 = vmatprep.mubr.bf16.mxu0 %v3456
        %3598 = vmatmul.mubr.bf16.gmra.mrb[0].mxu0 %v3455
        %v3599 = vpop.f32.mrb[0].mxu0
        %v3600 = vadd.f32 %v3460, %v3599
        %v3601 = vpop.f32.mrb[0].mxu0
        %v3602 = vpop.f32.mrb[0].mxu0
        %v3603 = vadd.f32 %v3460, %v3602
        %v3604 = vpop.f32.mrb[0].mxu0
        %3605 = vdwg.mxu0
        %v3606 = vadd.f32 %v3247, %v3592
        %v3607 = vadd.f32 %v3248, %v3595
        %v3608 = vadd.f32 %v3249, %v3600
        %v3609 = vadd.f32 %v3250, %v3603
        %3610 = vadd.xlane.f32.xlu0 %v3606
        %v3611 = vpop.xlane.xlu0 %3610
        %3612 = vadd.xlane.f32.xlu0 %v3607
        %v3613 = vpop.xlane.xlu0 %3612
        %3614 = vadd.xlane.f32.xlu0 %v3608
        %v3615 = vpop.xlane.xlu0 %3614
        %3616 = vadd.xlane.f32.xlu0 %v3609
        %v3617 = vpop.xlane.xlu0 %3616
        %v3618 = vmul.f32 %v3611, %v3198
        %v3619 = vmul.f32 %v3613, %v3198
        %v3620 = vmul.f32 %v3615, %v3198
        %v3621 = vmul.f32 %v3617, %v3198
        %v3622 = vsub.f32 %v3606, %v3618
        %v3623 = vsub.f32 %v3607, %v3619
        %v3624 = vsub.f32 %v3608, %v3620
        %v3625 = vsub.f32 %v3609, %v3621
        %v3626 = vmul.f32 %v3622, %v3622
        %v3627 = vmul.f32 %v3623, %v3623
        %v3628 = vmul.f32 %v3624, %v3624
        %v3629 = vmul.f32 %v3625, %v3625
        %3630 = vadd.xlane.f32.xlu0 %v3626
        %v3631 = vpop.xlane.xlu0 %3630
        %3632 = vadd.xlane.f32.xlu0 %v3627
        %v3633 = vpop.xlane.xlu0 %3632
        %3634 = vadd.xlane.f32.xlu0 %v3628
        %v3635 = vpop.xlane.xlu0 %3634
        %3636 = vadd.xlane.f32.xlu0 %v3629
        %v3637 = vpop.xlane.xlu0 %3636
        %v3638 = vmul.f32 %v3631, %v3198
        %v3639 = vmul.f32 %v3633, %v3198
        %v3640 = vmul.f32 %v3635, %v3198
        %v3641 = vmul.f32 %v3637, %v3198
        %v3642 = vadd.f32 %v3638, 1e-05
        %v3643 = vadd.f32 %v3639, 1e-05
        %v3644 = vadd.f32 %v3640, 1e-05
        %v3645 = vadd.f32 %v3641, 1e-05
        %v3646 = vrsqrt.pop %v3642
        %v3647 = vrsqrt.pop %v3643
        %v3648 = vrsqrt.pop %v3644
        %v3649 = vrsqrt.pop %v3645
        %v3650 = vmul.f32 %v3622, %v3646
        %v3651 = vmul.f32 %v3623, %v3647
        %v3652 = vmul.f32 %v3624, %v3648
        %v3653 = vmul.f32 %v3625, %v3649
        %v3654 = vlaneseq
        %v3655 = vshrl.u32 %v3654, 7
        %v3656 = vsub.s32 7, %v3655
        %v3657 = vrot.slane %v535, %v3656
        %v3658 = vmul.f32 %v3650, %v3657
        %v3659 = vmul.f32 %v3651, %v3657
        %v3660 = vmul.f32 %v3652, %v3657
        %v3661 = vmul.f32 %v3653, %v3657
        %v3662 = vlaneseq
        %v3663 = vshrl.u32 %v3662, 7
        %v3664 = vsub.s32 0, %v3663
        %v3665 = vrot.slane %v536, %v3664
        %v3666 = vadd.f32 %v3658, %v3665
        %v3667 = vadd.f32 %v3659, %v3665
        %v3668 = vadd.f32 %v3660, %v3665
        %v3669 = vadd.f32 %v3661, %v3665
        %3670 = vst [vmem:[#allocation2] sm:$0xff] %v3666
        %3671 = vst [vmem:[#allocation2 + $0x8] sm:$0xff] %v3667
        %3672 = vst [vmem:[#allocation2 + $0x10] sm:$0xff] %v3668
        %3673 = vst [vmem:[#allocation2 + $0x18] sm:$0xff] %v3669
        %p3674 = scmp.eq.s32.totalorder %s23, 1
        // Predicated region
        $region69: #{tpu_custom_call.1} parent=63 // pred_check
          %p3675 = pneg %p3674
        $region70: #{tpu_custom_call.1} parent=63 // pred_check_branch
          %3677 = sbr.rel (%p3675) target = $region72
        $region71: #{tpu_custom_call.1} parent=63 // pred_region
          %v3678 = vld [vmem:[%s10] sm:$0x3]
          %v3679 = vld [vmem:[#allocation2] sm:$0xff]
          %v3680 = vld [vmem:[#allocation2 + $0x8] sm:$0xff]
          %v3681 = vld [vmem:[#allocation2 + $0x10] sm:$0xff]
          %v3682 = vld [vmem:[#allocation2 + $0x18] sm:$0xff]
          %3683 = vadd.xlane.f32.xlu0 %v3679
          %v3684 = vpop.xlane.xlu0 %3683
          %3685 = vadd.xlane.f32.xlu0 %v3680
          %v3686 = vpop.xlane.xlu0 %3685
          %3687 = vadd.xlane.f32.xlu0 %v3681
          %v3688 = vpop.xlane.xlu0 %3687
          %3689 = vadd.xlane.f32.xlu0 %v3682
          %v3690 = vpop.xlane.xlu0 %3689
          %v3691 = vmul.f32 %v3684, %v3198
          %v3692 = vmul.f32 %v3686, %v3198
          %v3693 = vmul.f32 %v3688, %v3198
          %v3694 = vmul.f32 %v3690, %v3198
          %v3695 = vsub.f32 %v3679, %v3691
          %v3696 = vsub.f32 %v3680, %v3692
          %v3697 = vsub.f32 %v3681, %v3693
          %v3698 = vsub.f32 %v3682, %v3694
          %v3699 = vmul.f32 %v3695, %v3695
          %v3700 = vmul.f32 %v3696, %v3696
          %v3701 = vmul.f32 %v3697, %v3697
          %v3702 = vmul.f32 %v3698, %v3698
          %3703 = vadd.xlane.f32.xlu0 %v3699
          %v3704 = vpop.xlane.xlu0 %3703
          %3705 = vadd.xlane.f32.xlu0 %v3700
          %v3706 = vpop.xlane.xlu0 %3705
          %3707 = vadd.xlane.f32.xlu0 %v3701
          %v3708 = vpop.xlane.xlu0 %3707
          %3709 = vadd.xlane.f32.xlu0 %v3702
          %v3710 = vpop.xlane.xlu0 %3709
          %v3711 = vmul.f32 %v3704, %v3198
          %v3712 = vmul.f32 %v3706, %v3198
          %v3713 = vmul.f32 %v3708, %v3198
          %v3714 = vmul.f32 %v3710, %v3198
          %v3715 = vadd.f32 %v3711, 1e-05
          %v3716 = vadd.f32 %v3712, 1e-05
          %v3717 = vadd.f32 %v3713, 1e-05
          %v3718 = vadd.f32 %v3714, 1e-05
          %v3719 = vrsqrt.pop %v3715
          %v3720 = vrsqrt.pop %v3716
          %v3721 = vrsqrt.pop %v3717
          %v3722 = vrsqrt.pop %v3718
          %v3723 = vmul.f32 %v3695, %v3719
          %v3724 = vmul.f32 %v3696, %v3720
          %v3725 = vmul.f32 %v3697, %v3721
          %v3726 = vmul.f32 %v3698, %v3722
          %v3727 = vlaneseq
          %v3728 = vshrl.u32 %v3727, 7
          %v3729 = vsub.s32 0, %v3728
          %v3730 = vrot.slane %v3678, %v3729
          %v3731 = vmul.f32 %v3723, %v3730
          %v3732 = vmul.f32 %v3724, %v3730
          %v3733 = vmul.f32 %v3725, %v3730
          %v3734 = vmul.f32 %v3726, %v3730
          %v3735 = vlaneseq
          %v3736 = vshrl.u32 %v3735, 7
          %v3737 = vsub.s32 1, %v3736
          %v3738 = vrot.slane %v3678, %v3737
          %v3739 = vadd.f32 %v3731, %v3738
          %v3740 = vadd.f32 %v3732, %v3738
          %v3741 = vadd.f32 %v3733, %v3738
          %v3742 = vadd.f32 %v3734, %v3738
          %3743 = vst [vmem:[#allocation2] sm:$0xff] %v3739
          %3744 = vst [vmem:[#allocation2 + $0x8] sm:$0xff] %v3740
          %3745 = vst [vmem:[#allocation2 + $0x10] sm:$0xff] %v3741
          %3746 = vst [vmem:[#allocation2 + $0x18] sm:$0xff] %v3742
        $region72: #{tpu_custom_call.1} parent=63 // pred_fallthru
          _
        // Predicated region
        $region73: #{tpu_custom_call.1} parent=63 // pred_check
          %p3747 = pneg %p307
        $region74: #{tpu_custom_call.1} parent=63 // pred_check_branch
          %3749 = sbr.rel (%p3747) target = $region76
        $region75: #{tpu_custom_call.1} parent=63 // pred_region
          %s3751 = ssub.s32 512, 512
          %3752 = vsyncadd [#allocation3], %s3751
          %s3753 = sshll.u32 [#allocation2], 4
          %s3754 = int_to_ptr.vmem [resolvable:$true] %s3753
          %3759 = dma.vmem_to_hbm [thread:$0]  %s3754, 512, %s11, [#allocation3], 128, 128, 8
        $region76: #{tpu_custom_call.1} parent=63 // pred_fallthru
          _
        // Predicated region
        $region77: #{tpu_custom_call.1} parent=63 // pred_check
          %p3760 = pneg %p307
        $region78: #{tpu_custom_call.1} parent=63 // pred_check_branch
          %3762 = sbr.rel (%p3760) target = $region80
        $region79: #{tpu_custom_call.1} parent=63 // pred_region
          %3763 = dma.done [#allocation3], 512
        $region80: #{tpu_custom_call.1} parent=63 // pred_fallthru
          _
      $region64: #{tpu_custom_call.1} parent=5 // pred_fallthru
        _
      %p3764 = scmp.le.s32.totalorder 2, %s18
      // Predicated region
      $region81: #{tpu_custom_call.1} parent=5 // pred_check
        %p3765 = pneg %p3764
      $region82: #{tpu_custom_call.1} parent=5 // pred_check_branch
        %3767 = sbr.rel (%p3765) target = $region84
      $region83: #{tpu_custom_call.1} parent=5 // pred_region
        %s3768 = ssub.s32 %s18, 2
      $region84: #{tpu_custom_call.1} parent=5 // pred_fallthru
        _
    $region6: #{tpu_custom_call.1} parent=1 // loop_footer
      %s22 = sadd.s32 1, %s18
    $region7: #{tpu_custom_call.1} parent=1 // loop_footer_branch
      %17 = sbr.rel target = $region3
    $region8: #{tpu_custom_call.1} parent=1 // loop_exit
      _
    %3769 = vsyncpa [#allocation3], 1
    %s3770 = scalar_lea.sflag [#allocation3], 1
    %3771 = vsyncpa %s3770, 1

</llo_original>
